<compile_context>
chip_gen: v7x
topology: tpu7x:2x2x1
jax: 0.10.0
libtpu: 0.0.40
codegen_flags: <defaults>
</compile_context>

<pallas_src>
import jax
import jax.numpy as jnp
from jax.experimental import pallas as pl
from jax.experimental.pallas import tpu as pltpu

BATCH = 256          # the module's forward hard-codes batch_size = 256
IN_DIM = 28 * 28     # 784
HID = 20


def ae_kernel(x_ref, we_ref, be_ref, wd_ref, bd_ref, o_ref):
    # x_ref:  (tb, 784)   batch tile
    # we_ref: (784, 20)   encoder weight, transposed vs. PyTorch (out, in)
    # be_ref: (1, 20)     encoder bias
    # wd_ref: (20, 784)   decoder weight, transposed vs. PyTorch
    # bd_ref: (1, 784)    decoder bias
    x = x_ref[...]
    enc = jnp.dot(x, we_ref[...], preferred_element_type=jnp.float32) + be_ref[...]
    dec = jnp.dot(enc, wd_ref[...], preferred_element_type=jnp.float32) + bd_ref[...]
    o_ref[...] = dec.astype(o_ref.dtype)


def _default_tb(batch):
    """Batch-tile default for this mem-bound kernel.

    tb=128 (2 grid steps at B=256) is the sweet spot on v6e/v7x: minimal fixed
    per-step overhead while keeping >=2 'parallel' steps so both v7x TCs get
    work and read/compute/write streams overlap.  Also a solid v5e default
    (the v5e grid=1 vs grid=2 crossover is within noise).
    """
    tb = min(128, batch)
    # make sure the tile divides the batch (fall back gracefully for odd batches)
    while tb > 1 and batch % tb != 0:
        tb //= 2
    return max(tb, 1)


def _build_call(B, tb, act_dtype, single_buffer_weights, cost):
    """Construct the pallas_call; weight specs optionally single-buffered."""
    def w_spec(shape):
        if single_buffer_weights:
            # Constant index_map -> DMA'd once; no need for a second buffer.
            return pl.BlockSpec(shape, lambda i: (0, 0),
                                pipeline_mode=pl.Buffered(1))
        return pl.BlockSpec(shape, lambda i: (0, 0))

    return pl.pallas_call(
        ae_kernel,
        out_shape=jax.ShapeDtypeStruct((B, IN_DIM), act_dtype),
        grid_spec=pltpu.PrefetchScalarGridSpec(
            num_scalar_prefetch=0,
            grid=(B // tb,),
            in_specs=[
                pl.BlockSpec((tb, IN_DIM), lambda i: (i, 0)),  # x tile over batch
                w_spec((IN_DIM, HID)),                          # encoder W (full)
                w_spec((1, HID)),                               # encoder b
                w_spec((HID, IN_DIM)),                          # decoder W (full)
                w_spec((1, IN_DIM)),                            # decoder b
            ],
            out_specs=pl.BlockSpec((tb, IN_DIM), lambda i: (i, 0)),
        ),
        compiler_params=pltpu.CompilerParams(
            dimension_semantics=("parallel",)),
        cost_estimate=cost,
        # Output aliases the flattened input: same shape/dtype, tile i is read
        # strictly before tile i is written, tiles are disjoint across steps.
        input_output_aliases={0: 0},
    )


def autoencoder_forward(x, we, be, wd, bd, *, tb=None, activation_dtype=None):
    """x: (B, 1, 28, 28) float32 -> (B, 1, 28, 28) float32.

    activation_dtype=jnp.bfloat16 (optional) halves activation HBM traffic at
    the cost of bit-exact f32 parity; weights stay f32 and matmuls accumulate
    in f32 either way.
    """
    B = x.shape[0]
    if tb is None:
        tb = _default_tb(B)
    assert B % tb == 0, f"batch {B} must be divisible by tile {tb}"

    x2 = x.reshape(B, IN_DIM)  # row-major flatten == torch .view(B, -1)
    if activation_dtype is not None:
        x2 = x2.astype(activation_dtype)
    act_dtype = x2.dtype

    act_bytes = jnp.dtype(act_dtype).itemsize
    weight_bytes = (IN_DIM * HID + HID + HID * IN_DIM + IN_DIM) * 4
    cost = pl.CostEstimate(
        flops=4 * B * IN_DIM * HID,            # two matmuls: 2*B*784*20 each
        transcendentals=0,
        bytes_accessed=2 * B * IN_DIM * act_bytes + weight_bytes,
    )

    try:
        call = _build_call(B, tb, act_dtype, True, cost)
        out = call(x2, we, be, wd, bd)
    except Exception:
        # Fallback if this JAX version rejects pipeline_mode=pl.Buffered(1).
        call = _build_call(B, tb, act_dtype, False, cost)
        out = call(x2, we, be, wd, bd)

    return out.reshape(B, 1, 28, 28).astype(x.dtype)


def init_params(key):
    """Deterministic init matching nn.Linear's U(-1/sqrt(fan_in), 1/sqrt(fan_in))."""
    k1, k2, k3, k4 = jax.random.split(key, 4)
    b_enc = 1.0 / jnp.sqrt(jnp.float32(IN_DIM))
    b_dec = 1.0 / jnp.sqrt(jnp.float32(HID))
    # stored transposed: (in, out)
    we = jax.random.uniform(k1, (IN_DIM, HID), jnp.float32, -b_enc, b_enc)
    be = jax.random.uniform(k2, (1, HID), jnp.float32, -b_enc, b_enc)
    wd = jax.random.uniform(k3, (HID, IN_DIM), jnp.float32, -b_dec, b_dec)
    bd = jax.random.uniform(k4, (1, IN_DIM), jnp.float32, -b_dec, b_dec)
    return we, be, wd, bd


if __name__ == "__main__":
    key = jax.random.PRNGKey(0)
    kx, kp = jax.random.split(key)
    # Forward hard-codes batch_size=256 in the view(), so that is the shape the
    # module implies: (256, 1, 28, 28).
    x = jax.random.normal(kx, (BATCH, 1, 28, 28), jnp.float32)
    we, be, wd, bd = init_params(kp)

    out = autoencoder_forward(x, we, be, wd, bd)
    out = jax.block_until_ready(out)

    # reference check in plain JAX
    x2 = x.reshape(BATCH, IN_DIM)
    ref = ((x2 @ we + be) @ wd + bd).reshape(BATCH, 1, 28, 28)
    assert out.shape == (BATCH, 1, 28, 28)
    assert jnp.allclose(out, ref, atol=1e-4, rtol=1e-4)

    print("KERNEL_OK")
</pallas_src>

<mosaic_0001>
module attributes {stable_mosaic.version = 11 : i64} {
  func.func @ae_kernel(%arg0: i32, %arg1: memref<128x784xf32, #tpu.memory_space<vmem>>, %arg2: memref<784x20xf32, #tpu.memory_space<vmem>>, %arg3: memref<1x20xf32, #tpu.memory_space<vmem>>, %arg4: memref<20x784xf32, #tpu.memory_space<vmem>>, %arg5: memref<1x784xf32, #tpu.memory_space<vmem>>, %arg6: memref<128x784xf32, #tpu.memory_space<vmem>>) attributes {dimension_semantics = [#tpu.dimension_semantics<parallel>], iteration_bounds = array<i64: 2>, scalar_prefetch = 0 : i64, scratch_operands = 0 : i64, tpu.core_type = #tpu.core_type<tc>, window_params = [{transform_indices = @transform_0, window_bounds = array<i64: 128, 784>}, {pipeline_mode = #tpu.pipeline_mode<synchronous>, transform_indices = @transform_1, window_bounds = array<i64: 784, 20>}, {pipeline_mode = #tpu.pipeline_mode<synchronous>, transform_indices = @transform_2, window_bounds = array<i64: 1, 20>}, {pipeline_mode = #tpu.pipeline_mode<synchronous>, transform_indices = @transform_3, window_bounds = array<i64: 20, 784>}, {pipeline_mode = #tpu.pipeline_mode<synchronous>, transform_indices = @transform_4, window_bounds = array<i64: 1, 784>}, {transform_indices = @transform_5, window_bounds = array<i64: 128, 784>}]} {
    %c0 = arith.constant 0 : index
    %c0_0 = arith.constant 0 : index
    %0 = vector.load %arg1[%c0, %c0_0] : memref<128x784xf32, #tpu.memory_space<vmem>>, vector<128x784xf32>
    %c0_1 = arith.constant 0 : index
    %c0_2 = arith.constant 0 : index
    %1 = vector.load %arg2[%c0_1, %c0_2] : memref<784x20xf32, #tpu.memory_space<vmem>>, vector<784x20xf32>
    %cst = arith.constant dense<0.000000e+00> : vector<128x20xf32>
    %2 = tpu.matmul %0, %1, %cst {dimension_numbers = #tpu.dot_dimension_numbers<[1], [0], [0], [1], [0, 0, 1, 1], [], []>} : vector<128x784xf32>, vector<784x20xf32>, vector<128x20xf32> -> vector<128x20xf32>
    %c0_3 = arith.constant 0 : index
    %c0_4 = arith.constant 0 : index
    %3 = vector.load %arg3[%c0_3, %c0_4] : memref<1x20xf32, #tpu.memory_space<vmem>>, vector<1x20xf32>
    %4 = vector.broadcast %3 : vector<1x20xf32> to vector<128x20xf32>
    %5 = arith.addf %2, %4 : vector<128x20xf32>
    %c0_5 = arith.constant 0 : index
    %c0_6 = arith.constant 0 : index
    %6 = vector.load %arg4[%c0_5, %c0_6] : memref<20x784xf32, #tpu.memory_space<vmem>>, vector<20x784xf32>
    %cst_7 = arith.constant dense<0.000000e+00> : vector<128x784xf32>
    %7 = tpu.matmul %5, %6, %cst_7 {dimension_numbers = #tpu.dot_dimension_numbers<[1], [0], [0], [1], [0, 0, 1, 1], [], []>} : vector<128x20xf32>, vector<20x784xf32>, vector<128x784xf32> -> vector<128x784xf32>
    %c0_8 = arith.constant 0 : index
    %c0_9 = arith.constant 0 : index
    %8 = vector.load %arg5[%c0_8, %c0_9] : memref<1x784xf32, #tpu.memory_space<vmem>>, vector<1x784xf32>
    %9 = vector.broadcast %8 : vector<1x784xf32> to vector<128x784xf32>
    %10 = arith.addf %7, %9 : vector<128x784xf32>
    %c0_10 = arith.constant 0 : index
    %c0_11 = arith.constant 0 : index
    %11 = vector.load %arg6[%c0_10, %c0_11] : memref<128x784xf32, #tpu.memory_space<vmem>>, vector<128x784xf32>
    tpu.vector_store %arg6[%c0_10, %c0_11], %10 {strides = array<i32>} : memref<128x784xf32, #tpu.memory_space<vmem>>, vector<128x784xf32>,
    return
  }
  func.func @transform_0(%arg0: i32) -> (i32, i32) {
    %c0_i32 = arith.constant 0 : i32
    %c0_i32_0 = arith.constant 0 : i32
    return %arg0, %c0_i32 : i32, i32
  }
  func.func @transform_1(%arg0: i32) -> (i32, i32) {
    %c0_i32 = arith.constant 0 : i32
    %c0_i32_0 = arith.constant 0 : i32
    %c0_i32_1 = arith.constant 0 : i32
    return %c0_i32, %c0_i32_0 : i32, i32
  }
  func.func @transform_2(%arg0: i32) -> (i32, i32) {
    %c0_i32 = arith.constant 0 : i32
    %c0_i32_0 = arith.constant 0 : i32
    %c0_i32_1 = arith.constant 0 : i32
    return %c0_i32, %c0_i32_0 : i32, i32
  }
  func.func @transform_3(%arg0: i32) -> (i32, i32) {
    %c0_i32 = arith.constant 0 : i32
    %c0_i32_0 = arith.constant 0 : i32
    %c0_i32_1 = arith.constant 0 : i32
    return %c0_i32, %c0_i32_0 : i32, i32
  }
  func.func @transform_4(%arg0: i32) -> (i32, i32) {
    %c0_i32 = arith.constant 0 : i32
    %c0_i32_0 = arith.constant 0 : i32
    %c0_i32_1 = arith.constant 0 : i32
    return %c0_i32, %c0_i32_0 : i32, i32
  }
  func.func @transform_5(%arg0: i32) -> (i32, i32) {
    %c0_i32 = arith.constant 0 : i32
    %c0_i32_0 = arith.constant 0 : i32
    return %arg0, %c0_i32 : i32, i32
  }
}

module attributes {stable_mosaic.version = 11 : i64} {
  func.func @ae_kernel(%arg0: i32, %arg1: memref<128x784xf32, #tpu.memory_space<vmem>>, %arg2: memref<784x20xf32, #tpu.memory_space<vmem>>, %arg3: memref<1x20xf32, #tpu.memory_space<vmem>>, %arg4: memref<20x784xf32, #tpu.memory_space<vmem>>, %arg5: memref<1x784xf32, #tpu.memory_space<vmem>>, %arg6: memref<128x784xf32, #tpu.memory_space<vmem>>) attributes {dimension_semantics = [#tpu.dimension_semantics<parallel>], iteration_bounds = array<i64: 2>, scalar_prefetch = 0 : i64, scratch_operands = 0 : i64, tpu.core_type = #tpu.core_type<tc>, window_params = [{transform_indices = @transform_0, window_bounds = array<i64: 128, 784>}, {pipeline_mode = #tpu.pipeline_mode<synchronous>, transform_indices = @transform_1, window_bounds = array<i64: 784, 20>}, {pipeline_mode = #tpu.pipeline_mode<synchronous>, transform_indices = @transform_2, window_bounds = array<i64: 1, 20>}, {pipeline_mode = #tpu.pipeline_mode<synchronous>, transform_indices = @transform_3, window_bounds = array<i64: 20, 784>}, {pipeline_mode = #tpu.pipeline_mode<synchronous>, transform_indices = @transform_4, window_bounds = array<i64: 1, 784>}, {transform_indices = @transform_5, window_bounds = array<i64: 128, 784>}]} {
    %c0 = arith.constant 0 : index
    %c0_0 = arith.constant 0 : index
    %0 = vector.load %arg1[%c0, %c0_0] : memref<128x784xf32, #tpu.memory_space<vmem>>, vector<128x784xf32>
    %c0_1 = arith.constant 0 : index
    %c0_2 = arith.constant 0 : index
    %1 = vector.load %arg2[%c0_1, %c0_2] : memref<784x20xf32, #tpu.memory_space<vmem>>, vector<784x20xf32>
    %cst = arith.constant dense<0.000000e+00> : vector<128x20xf32>
    %2 = tpu.matmul %0, %1, %cst {dimension_numbers = #tpu.dot_dimension_numbers<[1], [0], [0], [1], [0, 0, 1, 1], [], []>} : vector<128x784xf32>, vector<784x20xf32>, vector<128x20xf32> -> vector<128x20xf32>
    %c0_3 = arith.constant 0 : index
    %c0_4 = arith.constant 0 : index
    %3 = vector.load %arg3[%c0_3, %c0_4] : memref<1x20xf32, #tpu.memory_space<vmem>>, vector<1x20xf32>
    %4 = vector.broadcast %3 : vector<1x20xf32> to vector<128x20xf32>
    %5 = arith.addf %2, %4 : vector<128x20xf32>
    %c0_5 = arith.constant 0 : index
    %c0_6 = arith.constant 0 : index
    %6 = vector.load %arg4[%c0_5, %c0_6] : memref<20x784xf32, #tpu.memory_space<vmem>>, vector<20x784xf32>
    %cst_7 = arith.constant dense<0.000000e+00> : vector<128x784xf32>
    %7 = tpu.matmul %5, %6, %cst_7 {dimension_numbers = #tpu.dot_dimension_numbers<[1], [0], [0], [1], [0, 0, 1, 1], [], []>} : vector<128x20xf32>, vector<20x784xf32>, vector<128x784xf32> -> vector<128x784xf32>
    %c0_8 = arith.constant 0 : index
    %c0_9 = arith.constant 0 : index
    %8 = vector.load %arg5[%c0_8, %c0_9] : memref<1x784xf32, #tpu.memory_space<vmem>>, vector<1x784xf32>
    %9 = vector.broadcast %8 : vector<1x784xf32> to vector<128x784xf32>
    %10 = arith.addf %7, %9 : vector<128x784xf32>
    %c0_10 = arith.constant 0 : index
    %c0_11 = arith.constant 0 : index
    %11 = vector.load %arg6[%c0_10, %c0_11] : memref<128x784xf32, #tpu.memory_space<vmem>>, vector<128x784xf32>
    tpu.vector_store %arg6[%c0_10, %c0_11], %10 {strides = array<i32>} : memref<128x784xf32, #tpu.memory_space<vmem>>, vector<128x784xf32>,
    return
  }
  func.func @transform_0(%arg0: i32) -> (i32, i32) {
    %c0_i32 = arith.constant 0 : i32
    %c0_i32_0 = arith.constant 0 : i32
    return %arg0, %c0_i32 : i32, i32
  }
  func.func @transform_1(%arg0: i32) -> (i32, i32) {
    %c0_i32 = arith.constant 0 : i32
    %c0_i32_0 = arith.constant 0 : i32
    %c0_i32_1 = arith.constant 0 : i32
    return %c0_i32, %c0_i32_0 : i32, i32
  }
  func.func @transform_2(%arg0: i32) -> (i32, i32) {
    %c0_i32 = arith.constant 0 : i32
    %c0_i32_0 = arith.constant 0 : i32
    %c0_i32_1 = arith.constant 0 : i32
    return %c0_i32, %c0_i32_0 : i32, i32
  }
  func.func @transform_3(%arg0: i32) -> (i32, i32) {
    %c0_i32 = arith.constant 0 : i32
    %c0_i32_0 = arith.constant 0 : i32
    %c0_i32_1 = arith.constant 0 : i32
    return %c0_i32, %c0_i32_0 : i32, i32
  }
  func.func @transform_4(%arg0: i32) -> (i32, i32) {
    %c0_i32 = arith.constant 0 : i32
    %c0_i32_0 = arith.constant 0 : i32
    %c0_i32_1 = arith.constant 0 : i32
    return %c0_i32, %c0_i32_0 : i32, i32
  }
  func.func @transform_5(%arg0: i32) -> (i32, i32) {
    %c0_i32 = arith.constant 0 : i32
    %c0_i32_0 = arith.constant 0 : i32
    return %arg0, %c0_i32 : i32, i32
  }
}

</mosaic_0001>

<llo_original>
// kernel: tpu_custom_call.1
$region0: #{tpu_custom_call.1}
  #allocation0 [shape = 'u32[]', space=smem, size = 0x4, offset = 0x4, fixed_abs, tag = 'smem constant byte address 0x4 - core index']
  #allocation1 [shape = 'u32[144,128]{1,0:T(1,128)}', space=vmem, size = 0x12000, scoped, tag = 'internal scratch']
  %s0 = inlined_call_operand.vmem [shape: f32[256,784], index: 0, kind: input, shape index: {}, may-alias: {0,5}]
  %s1 = inlined_call_operand.vmem [shape: f32[784,20], index: 1, kind: input, shape index: {}]
  %s2 = inlined_call_operand.vmem [shape: f32[1,20], index: 2, kind: input, shape index: {}]
  %s3 = inlined_call_operand.vmem [shape: f32[20,784], index: 3, kind: input, shape index: {}]
  %s4 = inlined_call_operand.vmem [shape: f32[1,784], index: 4, kind: input, shape index: {}]
  %s5 = inlined_call_operand.vmem [shape: f32[256,784], index: 5, kind: output, shape index: {}, may-alias: {0,5}]
  %s6 = sld [smem:[#allocation0]]
  $region53: #{tpu_custom_call.1} parent=0
    _
  %s8 = ssub.s32 1, %s6
  %s9 = scalar_select 0, %s8, %s6
  loop: start=0, step=1, limit=4
  $region2: #{tpu_custom_call.1} parent=0 // loop_pre_header
    _
  $region3: #{tpu_custom_call.1} parent=0 // loop_header
    %s11 = sphi 0, %s15
    %p12 = scmp.ge.s32.totalorder %s11, 4
    %s21 = sphi 0, %s23
    %s24 = sphi 0, %s21
    %s25 = sphi 0, %s24
    %s41 = sphi 0, %s25
    %s45 = sphi 0, %s45
    %s47 = sphi 0, %s45
    %s48 = sphi 0, %s47
    %s62 = sphi 0, %s48
    %s66 = sphi 0, %s66
    %s68 = sphi 0, %s66
    %s69 = sphi 0, %s68
    %s83 = sphi 0, %s69
    %s87 = sphi 0, %s87
    %s89 = sphi 0, %s87
    %s90 = sphi 0, %s89
    %s104 = sphi 0, %s90
    %s108 = sphi 0, %s108
    %s110 = sphi 0, %s108
    %s111 = sphi 0, %s110
    %s125 = sphi 0, %s111
    %s131 = sphi 0, %s133
    %s134 = sphi 0, %s131
    %s135 = sphi 0, %s134
    %s151 = sphi 0, %s135
  $region4: #{tpu_custom_call.1} parent=0 // loop_header_branch
    %14 = sbr.rel (%p12) target = $region8
  $region5: #{tpu_custom_call.1} parent=0 // loop_body
    %s16 = ssub.s32 %s11, 1
    %s17 = ssub.s32 %s11, 2
    %s18 = sadd.s32 %s11, 1
    %s19 = ssub.s32 %s11, %s18
    %p20 = scmp.eq.s32.totalorder %s19, 0
    %s22 = sadd.s32 %s21, 1
    %s23 = scalar_select %p20, %s21, %s22
    %p26 = pneg %p20
    %p27 = scmp.eq.s32.totalorder %s11, 1
    %p28 = por %p26, %p27
    %p29 = scmp.ne.s32.totalorder %s21, %s24
    %p30 = scmp.eq.s32.totalorder %s11, 0
    %p31 = por %p29, %p30
    %p32 = scmp.ne.s32.totalorder %s21, %s24
    %p33 = scmp.eq.s32.totalorder %s16, 1
    %p34 = por %p32, %p33
    %p35 = scmp.ne.s32.totalorder %s24, %s25
    %p36 = scmp.eq.s32.totalorder %s16, 0
    %p37 = por %p35, %p36
    %p38 = scmp.ne.s32.totalorder %s24, %s25
    %p39 = scmp.eq.s32.totalorder %s17, 1
    %p40 = por %p38, %p39
    %p42 = scmp.ne.s32.totalorder %s25, %s41
    %p43 = scmp.eq.s32.totalorder %s17, 0
    %p44 = por %p42, %p43
    %s46 = sadd.s32 %s45, 1
    %p49 = scmp.eq.s32.totalorder %s11, 1
    %p50 = scmp.ne.s32.totalorder %s45, %s47
    %p51 = scmp.eq.s32.totalorder %s11, 0
    %p52 = por %p50, %p51
    %p53 = scmp.ne.s32.totalorder %s45, %s47
    %p54 = scmp.eq.s32.totalorder %s16, 1
    %p55 = por %p53, %p54
    %p56 = scmp.ne.s32.totalorder %s47, %s48
    %p57 = scmp.eq.s32.totalorder %s16, 0
    %p58 = por %p56, %p57
    %p59 = scmp.ne.s32.totalorder %s47, %s48
    %p60 = scmp.eq.s32.totalorder %s17, 1
    %p61 = por %p59, %p60
    %p63 = scmp.ne.s32.totalorder %s48, %s62
    %p64 = scmp.eq.s32.totalorder %s17, 0
    %p65 = por %p63, %p64
    %s67 = sadd.s32 %s66, 1
    %p70 = scmp.eq.s32.totalorder %s11, 1
    %p71 = scmp.ne.s32.totalorder %s66, %s68
    %p72 = scmp.eq.s32.totalorder %s11, 0
    %p73 = por %p71, %p72
    %p74 = scmp.ne.s32.totalorder %s66, %s68
    %p75 = scmp.eq.s32.totalorder %s16, 1
    %p76 = por %p74, %p75
    %p77 = scmp.ne.s32.totalorder %s68, %s69
    %p78 = scmp.eq.s32.totalorder %s16, 0
    %p79 = por %p77, %p78
    %p80 = scmp.ne.s32.totalorder %s68, %s69
    %p81 = scmp.eq.s32.totalorder %s17, 1
    %p82 = por %p80, %p81
    %p84 = scmp.ne.s32.totalorder %s69, %s83
    %p85 = scmp.eq.s32.totalorder %s17, 0
    %p86 = por %p84, %p85
    %s88 = sadd.s32 %s87, 1
    %p91 = scmp.eq.s32.totalorder %s11, 1
    %p92 = scmp.ne.s32.totalorder %s87, %s89
    %p93 = scmp.eq.s32.totalorder %s11, 0
    %p94 = por %p92, %p93
    %p95 = scmp.ne.s32.totalorder %s87, %s89
    %p96 = scmp.eq.s32.totalorder %s16, 1
    %p97 = por %p95, %p96
    %p98 = scmp.ne.s32.totalorder %s89, %s90
    %p99 = scmp.eq.s32.totalorder %s16, 0
    %p100 = por %p98, %p99
    %p101 = scmp.ne.s32.totalorder %s89, %s90
    %p102 = scmp.eq.s32.totalorder %s17, 1
    %p103 = por %p101, %p102
    %p105 = scmp.ne.s32.totalorder %s90, %s104
    %p106 = scmp.eq.s32.totalorder %s17, 0
    %p107 = por %p105, %p106
    %s109 = sadd.s32 %s108, 1
    %p112 = scmp.eq.s32.totalorder %s11, 1
    %p113 = scmp.ne.s32.totalorder %s108, %s110
    %p114 = scmp.eq.s32.totalorder %s11, 0
    %p115 = por %p113, %p114
    %p116 = scmp.ne.s32.totalorder %s108, %s110
    %p117 = scmp.eq.s32.totalorder %s16, 1
    %p118 = por %p116, %p117
    %p119 = scmp.ne.s32.totalorder %s110, %s111
    %p120 = scmp.eq.s32.totalorder %s16, 0
    %p121 = por %p119, %p120
    %p122 = scmp.ne.s32.totalorder %s110, %s111
    %p123 = scmp.eq.s32.totalorder %s17, 1
    %p124 = por %p122, %p123
    %p126 = scmp.ne.s32.totalorder %s111, %s125
    %p127 = scmp.eq.s32.totalorder %s17, 0
    %p128 = por %p126, %p127
    %s129 = ssub.s32 %s11, %s18
    %p130 = scmp.eq.s32.totalorder %s129, 0
    %s132 = sadd.s32 %s131, 1
    %s133 = scalar_select %p130, %s131, %s132
    %p136 = pneg %p130
    %p137 = scmp.eq.s32.totalorder %s11, 1
    %p138 = por %p136, %p137
    %p139 = scmp.ne.s32.totalorder %s131, %s134
    %p140 = scmp.eq.s32.totalorder %s11, 0
    %p141 = por %p139, %p140
    %p142 = scmp.ne.s32.totalorder %s131, %s134
    %p143 = scmp.eq.s32.totalorder %s16, 1
    %p144 = por %p142, %p143
    %p145 = scmp.ne.s32.totalorder %s134, %s135
    %p146 = scmp.eq.s32.totalorder %s16, 0
    %p147 = por %p145, %p146
    %p148 = scmp.ne.s32.totalorder %s134, %s135
    %p149 = scmp.eq.s32.totalorder %s17, 1
    %p150 = por %p148, %p149
    %p152 = scmp.ne.s32.totalorder %s135, %s151
    %p153 = scmp.eq.s32.totalorder %s17, 0
    %p154 = por %p152, %p153
    %p155 = scmp.le.s32.totalorder 1, %s11
    %p156 = scmp.lt.s32.totalorder %s11, 3
    %p157 = pnand %p155, %p156
    %p158 = pneg %p157
    // Predicated region
    $region9: #{tpu_custom_call.1} parent=5 // pred_check
      _
    $region10: #{tpu_custom_call.1} parent=5 // pred_check_branch
      %160 = sbr.rel (%p157) target = $region12
    $region11: #{tpu_custom_call.1} parent=5 // pred_region
      %s161 = ssub.s32 %s11, 1
      // Predicated region
      $region13: #{tpu_custom_call.1} parent=11 // pred_check
        %p162 = pneg %p58
      $region14: #{tpu_custom_call.1} parent=11 // pred_check_branch
        %164 = sbr.rel (%p162) target = $region16
      $region15: #{tpu_custom_call.1} parent=11 // pred_region
        _
      $region16: #{tpu_custom_call.1} parent=11 // pred_fallthru
        _
      // Predicated region
      $region17: #{tpu_custom_call.1} parent=11 // pred_check
        %p165 = pneg %p79
      $region18: #{tpu_custom_call.1} parent=11 // pred_check_branch
        %167 = sbr.rel (%p165) target = $region20
      $region19: #{tpu_custom_call.1} parent=11 // pred_region
        _
      $region20: #{tpu_custom_call.1} parent=11 // pred_fallthru
        _
      // Predicated region
      $region21: #{tpu_custom_call.1} parent=11 // pred_check
        %p168 = pneg %p100
      $region22: #{tpu_custom_call.1} parent=11 // pred_check_branch
        %170 = sbr.rel (%p168) target = $region24
      $region23: #{tpu_custom_call.1} parent=11 // pred_region
        _
      $region24: #{tpu_custom_call.1} parent=11 // pred_fallthru
        _
      // Predicated region
      $region25: #{tpu_custom_call.1} parent=11 // pred_check
        %p171 = pneg %p121
      $region26: #{tpu_custom_call.1} parent=11 // pred_check_branch
        %173 = sbr.rel (%p171) target = $region28
      $region27: #{tpu_custom_call.1} parent=11 // pred_region
        _
      $region28: #{tpu_custom_call.1} parent=11 // pred_fallthru
        _
    $region12: #{tpu_custom_call.1} parent=5 // pred_fallthru
      _
    %p174 = scmp.lt.s32.totalorder %s11, 2
    // Predicated region
    $region29: #{tpu_custom_call.1} parent=5 // pred_check
      %p175 = pneg %p174
    $region30: #{tpu_custom_call.1} parent=5 // pred_check_branch
      %177 = sbr.rel (%p175) target = $region32
    $region31: #{tpu_custom_call.1} parent=5 // pred_region
      // Predicated region
      $region33: #{tpu_custom_call.1} parent=31 // pred_check
        %p178 = pneg %p31
      $region34: #{tpu_custom_call.1} parent=31 // pred_check_branch
        %180 = sbr.rel (%p178) target = $region36
      $region35: #{tpu_custom_call.1} parent=31 // pred_region
        %s181 = smul.u32 16, %s11
        %p182 = scmp.lt.s32.totalorder %s181, 31
        %s183 = scalar_select %p182, %s181, 31
        %s184 = smul.addr %s183, 7
        %s185 = smul.addr %s184, 8
        %s186 = scalar_lea.vmem %s0, %s185
        %s187 = smul.u32 16, %s11
      $region36: #{tpu_custom_call.1} parent=31 // pred_fallthru
        _
    $region32: #{tpu_custom_call.1} parent=5 // pred_fallthru
      _
    %p188 = scmp.le.s32.totalorder 1, %s11
    %p189 = scmp.lt.s32.totalorder %s11, 3
    %p190 = pnand %p188, %p189
    %p191 = pneg %p190
    // Predicated region
    $region37: #{tpu_custom_call.1} parent=5 // pred_check
      _
    $region38: #{tpu_custom_call.1} parent=5 // pred_check_branch
      %193 = sbr.rel (%p190) target = $region40
    $region39: #{tpu_custom_call.1} parent=5 // pred_region
      %s194 = ssub.s32 %s11, 1
      %s195 = smul.u32 16, %s16
      %p196 = scmp.lt.s32.totalorder %s195, 31
      %s197 = scalar_select %p196, %s195, 31
      %s198 = smul.addr %s197, 7
      %s199 = smul.addr %s198, 8
      %s200 = scalar_lea.vmem %s0, %s199
      %p201 = pneg %p37
      %p202 = pneg %p34
      %p203 = pneg %p58
      %p204 = pneg %p55
      %p205 = pneg %p79
      %p206 = pneg %p76
      %p207 = pneg %p100
      %p208 = pneg %p97
      %p209 = pneg %p121
      %p210 = pneg %p118
      %p211 = pneg %p147
      %p212 = pneg %p144
      %s213 = smul.u32 16, %s16
      %p214 = scmp.lt.s32.totalorder %s213, 31
      %s215 = scalar_select %p214, %s213, 31
      %s216 = smul.addr %s215, 7
      %s217 = smul.addr %s216, 8
      %s218 = scalar_lea.vmem %s5, %s217
      %s219 = smul.u32 16, %s16
      %p220 = scmp.lt.s32.totalorder %s219, 31
      %s221 = scalar_select %p220, %s219, 31
      %s222 = smul.addr %s221, 7
      %s223 = smul.addr %s222, 8
      %s224 = scalar_lea.vmem %s0, %s223
      %s225 = smul.u32 16, %s16
      %s226 = smul.u32 16, %s16
      %p227 = scmp.lt.s32.totalorder %s226, 31
      %s228 = scalar_select %p227, %s226, 31
      %s229 = smul.addr %s228, 7
      %s230 = smul.addr %s229, 8
      %s231 = scalar_lea.vmem %s5, %s230
      %s232 = smul.u32 16, %s16
      %v233 = vld [vmem:[%s224] sm:$0xff]
      %v234 = vld [vmem:[%s224 + $0x8] sm:$0xff]
      %v235 = vld [vmem:[%s224 + $0x10] sm:$0xff]
      %v236 = vld [vmem:[%s224 + $0x18] sm:$0xff]
      %v237 = vld [vmem:[%s224 + $0x20] sm:$0xff]
      %v238 = vld [vmem:[%s224 + $0x28] sm:$0xff]
      %v239 = vld [vmem:[%s224 + $0x30] sm:$0xff]
      %v240 = vld [vmem:[%s224 + $0x38] sm:$0xff]
      %v241 = vld [vmem:[%s224 + $0x40] sm:$0xff]
      %v242 = vld [vmem:[%s224 + $0x48] sm:$0xff]
      %v243 = vld [vmem:[%s224 + $0x50] sm:$0xff]
      %v244 = vld [vmem:[%s224 + $0x58] sm:$0xff]
      %v245 = vld [vmem:[%s224 + $0x60] sm:$0xff]
      %v246 = vld [vmem:[%s224 + $0x68] sm:$0xff]
      %v247 = vld [vmem:[%s224 + $0x70] sm:$0xff]
      %v248 = vld [vmem:[%s224 + $0x78] sm:$0xff]
      %v249 = vld [vmem:[%s224 + $0x80] sm:$0xff]
      %v250 = vld [vmem:[%s224 + $0x88] sm:$0xff]
      %v251 = vld [vmem:[%s224 + $0x90] sm:$0xff]
      %v252 = vld [vmem:[%s224 + $0x98] sm:$0xff]
      %v253 = vld [vmem:[%s224 + $0xa0] sm:$0xff]
      %v254 = vld [vmem:[%s224 + $0xa8] sm:$0xff]
      %v255 = vld [vmem:[%s224 + $0xb0] sm:$0xff]
      %v256 = vld [vmem:[%s224 + $0xb8] sm:$0xff]
      %v257 = vld [vmem:[%s224 + $0xc0] sm:$0xff]
      %v258 = vld [vmem:[%s224 + $0xc8] sm:$0xff]
      %v259 = vld [vmem:[%s224 + $0xd0] sm:$0xff]
      %v260 = vld [vmem:[%s224 + $0xd8] sm:$0xff]
      %v261 = vld [vmem:[%s224 + $0xe0] sm:$0xff]
      %v262 = vld [vmem:[%s224 + $0xe8] sm:$0xff]
      %v263 = vld [vmem:[%s224 + $0xf0] sm:$0xff]
      %v264 = vld [vmem:[%s224 + $0xf8] sm:$0xff]
      %v265 = vld [vmem:[%s224 + $0x100] sm:$0xff]
      %v266 = vld [vmem:[%s224 + $0x108] sm:$0xff]
      %v267 = vld [vmem:[%s224 + $0x110] sm:$0xff]
      %v268 = vld [vmem:[%s224 + $0x118] sm:$0xff]
      %v269 = vld [vmem:[%s224 + $0x120] sm:$0xff]
      %v270 = vld [vmem:[%s224 + $0x128] sm:$0xff]
      %v271 = vld [vmem:[%s224 + $0x130] sm:$0xff]
      %v272 = vld [vmem:[%s224 + $0x138] sm:$0xff]
      %v273 = vld [vmem:[%s224 + $0x140] sm:$0xff]
      %v274 = vld [vmem:[%s224 + $0x148] sm:$0xff]
      %v275 = vld [vmem:[%s224 + $0x150] sm:$0xff]
      %v276 = vld [vmem:[%s224 + $0x158] sm:$0xff]
      %v277 = vld [vmem:[%s224 + $0x160] sm:$0xff]
      %v278 = vld [vmem:[%s224 + $0x168] sm:$0xff]
      %v279 = vld [vmem:[%s224 + $0x170] sm:$0xff]
      %v280 = vld [vmem:[%s224 + $0x178] sm:$0xff]
      %v281 = vld [vmem:[%s224 + $0x180] sm:$0xff]
      %v282 = vld [vmem:[%s224 + $0x188] sm:$0xff]
      %v283 = vld [vmem:[%s224 + $0x190] sm:$0xff]
      %v284 = vld [vmem:[%s224 + $0x198] sm:$0xff]
      %v285 = vld [vmem:[%s224 + $0x1a0] sm:$0xff]
      %v286 = vld [vmem:[%s224 + $0x1a8] sm:$0xff]
      %v287 = vld [vmem:[%s224 + $0x1b0] sm:$0xff]
      %v288 = vld [vmem:[%s224 + $0x1b8] sm:$0xff]
      %v289 = vld [vmem:[%s224 + $0x1c0] sm:$0xff]
      %v290 = vld [vmem:[%s224 + $0x1c8] sm:$0xff]
      %v291 = vld [vmem:[%s224 + $0x1d0] sm:$0xff]
      %v292 = vld [vmem:[%s224 + $0x1d8] sm:$0xff]
      %v293 = vld [vmem:[%s224 + $0x1e0] sm:$0xff]
      %v294 = vld [vmem:[%s224 + $0x1e8] sm:$0xff]
      %v295 = vld [vmem:[%s224 + $0x1f0] sm:$0xff]
      %v296 = vld [vmem:[%s224 + $0x1f8] sm:$0xff]
      %v297 = vld [vmem:[%s224 + $0x200] sm:$0xff]
      %v298 = vld [vmem:[%s224 + $0x208] sm:$0xff]
      %v299 = vld [vmem:[%s224 + $0x210] sm:$0xff]
      %v300 = vld [vmem:[%s224 + $0x218] sm:$0xff]
      %v301 = vld [vmem:[%s224 + $0x220] sm:$0xff]
      %v302 = vld [vmem:[%s224 + $0x228] sm:$0xff]
      %v303 = vld [vmem:[%s224 + $0x230] sm:$0xff]
      %v304 = vld [vmem:[%s224 + $0x238] sm:$0xff]
      %v305 = vld [vmem:[%s224 + $0x240] sm:$0xff]
      %v306 = vld [vmem:[%s224 + $0x248] sm:$0xff]
      %v307 = vld [vmem:[%s224 + $0x250] sm:$0xff]
      %v308 = vld [vmem:[%s224 + $0x258] sm:$0xff]
      %v309 = vld [vmem:[%s224 + $0x260] sm:$0xff]
      %v310 = vld [vmem:[%s224 + $0x268] sm:$0xff]
      %v311 = vld [vmem:[%s224 + $0x270] sm:$0xff]
      %v312 = vld [vmem:[%s224 + $0x278] sm:$0xff]
      %v313 = vld [vmem:[%s224 + $0x280] sm:$0xff]
      %v314 = vld [vmem:[%s224 + $0x288] sm:$0xff]
      %v315 = vld [vmem:[%s224 + $0x290] sm:$0xff]
      %v316 = vld [vmem:[%s224 + $0x298] sm:$0xff]
      %v317 = vld [vmem:[%s224 + $0x2a0] sm:$0xff]
      %v318 = vld [vmem:[%s224 + $0x2a8] sm:$0xff]
      %v319 = vld [vmem:[%s224 + $0x2b0] sm:$0xff]
      %v320 = vld [vmem:[%s224 + $0x2b8] sm:$0xff]
      %v321 = vld [vmem:[%s224 + $0x2c0] sm:$0xff]
      %v322 = vld [vmem:[%s224 + $0x2c8] sm:$0xff]
      %v323 = vld [vmem:[%s224 + $0x2d0] sm:$0xff]
      %v324 = vld [vmem:[%s224 + $0x2d8] sm:$0xff]
      %v325 = vld [vmem:[%s224 + $0x2e0] sm:$0xff]
      %v326 = vld [vmem:[%s224 + $0x2e8] sm:$0xff]
      %v327 = vld [vmem:[%s224 + $0x2f0] sm:$0xff]
      %v328 = vld [vmem:[%s224 + $0x2f8] sm:$0xff]
      %v329 = vld [vmem:[%s224 + $0x300] sm:$0xff]
      %v330 = vld [vmem:[%s224 + $0x308] sm:$0xff]
      %v331 = vld [vmem:[%s224 + $0x310] sm:$0xff]
      %v332 = vld [vmem:[%s224 + $0x318] sm:$0xff]
      %v333 = vld [vmem:[%s224 + $0x320] sm:$0xff]
      %v334 = vld [vmem:[%s224 + $0x328] sm:$0xff]
      %v335 = vld [vmem:[%s224 + $0x330] sm:$0xff]
      %v336 = vld [vmem:[%s224 + $0x338] sm:$0xff]
      %v337 = vld [vmem:[%s224 + $0x340] sm:$0xff]
      %v338 = vld [vmem:[%s224 + $0x348] sm:$0xff]
      %v339 = vld [vmem:[%s224 + $0x350] sm:$0xff]
      %v340 = vld [vmem:[%s224 + $0x358] sm:$0xff]
      %v341 = vld [vmem:[%s224 + $0x360] sm:$0xff]
      %v342 = vld [vmem:[%s224 + $0x368] sm:$0xff]
      %v343 = vld [vmem:[%s224 + $0x370] sm:$0xff]
      %v344 = vld [vmem:[%s224 + $0x378] sm:$0xff]
      %v345 = vld [vmem:[%s1] sm:$0xff]
      %v346 = vld [vmem:[%s1 + $0x8] sm:$0xff]
      %v347 = vld [vmem:[%s1 + $0x10] sm:$0xff]
      %v348 = vld [vmem:[%s1 + $0x18] sm:$0xff]
      %v349 = vld [vmem:[%s1 + $0x20] sm:$0xff]
      %v350 = vld [vmem:[%s1 + $0x28] sm:$0xff]
      %v351 = vld [vmem:[%s1 + $0x30] sm:$0xff]
      %v352 = vld [vmem:[%s1 + $0x38] sm:$0xff]
      %v353 = vld [vmem:[%s1 + $0x40] sm:$0xff]
      %v354 = vld [vmem:[%s1 + $0x48] sm:$0xff]
      %v355 = vld [vmem:[%s1 + $0x50] sm:$0xff]
      %v356 = vld [vmem:[%s1 + $0x58] sm:$0xff]
      %v357 = vld [vmem:[%s1 + $0x60] sm:$0xff]
      %v358 = vld [vmem:[%s1 + $0x68] sm:$0xff]
      %v359 = vld [vmem:[%s1 + $0x70] sm:$0xff]
      %v360 = vld [vmem:[%s1 + $0x78] sm:$0xff]
      %v361 = vld [vmem:[%s1 + $0x80] sm:$0xff]
      %v362 = vld [vmem:[%s1 + $0x88] sm:$0xff]
      %v363 = vld [vmem:[%s1 + $0x90] sm:$0xff]
      %v364 = vld [vmem:[%s1 + $0x98] sm:$0xff]
      %v365 = vld [vmem:[%s1 + $0xa0] sm:$0xff]
      %v366 = vld [vmem:[%s1 + $0xa8] sm:$0xff]
      %v367 = vld [vmem:[%s1 + $0xb0] sm:$0xff]
      %v368 = vld [vmem:[%s1 + $0xb8] sm:$0xff]
      %v369 = vld [vmem:[%s1 + $0xc0] sm:$0xff]
      %v370 = vld [vmem:[%s1 + $0xc8] sm:$0xff]
      %v371 = vld [vmem:[%s1 + $0xd0] sm:$0xff]
      %v372 = vld [vmem:[%s1 + $0xd8] sm:$0xff]
      %v373 = vld [vmem:[%s1 + $0xe0] sm:$0xff]
      %v374 = vld [vmem:[%s1 + $0xe8] sm:$0xff]
      %v375 = vld [vmem:[%s1 + $0xf0] sm:$0xff]
      %v376 = vld [vmem:[%s1 + $0xf8] sm:$0xff]
      %v377 = vld [vmem:[%s1 + $0x100] sm:$0xff]
      %v378 = vld [vmem:[%s1 + $0x108] sm:$0xff]
      %v379 = vld [vmem:[%s1 + $0x110] sm:$0xff]
      %v380 = vld [vmem:[%s1 + $0x118] sm:$0xff]
      %v381 = vld [vmem:[%s1 + $0x120] sm:$0xff]
      %v382 = vld [vmem:[%s1 + $0x128] sm:$0xff]
      %v383 = vld [vmem:[%s1 + $0x130] sm:$0xff]
      %v384 = vld [vmem:[%s1 + $0x138] sm:$0xff]
      %v385 = vld [vmem:[%s1 + $0x140] sm:$0xff]
      %v386 = vld [vmem:[%s1 + $0x148] sm:$0xff]
      %v387 = vld [vmem:[%s1 + $0x150] sm:$0xff]
      %v388 = vld [vmem:[%s1 + $0x158] sm:$0xff]
      %v389 = vld [vmem:[%s1 + $0x160] sm:$0xff]
      %v390 = vld [vmem:[%s1 + $0x168] sm:$0xff]
      %v391 = vld [vmem:[%s1 + $0x170] sm:$0xff]
      %v392 = vld [vmem:[%s1 + $0x178] sm:$0xff]
      %v393 = vld [vmem:[%s1 + $0x180] sm:$0xff]
      %v394 = vld [vmem:[%s1 + $0x188] sm:$0xff]
      %v395 = vld [vmem:[%s1 + $0x190] sm:$0xff]
      %v396 = vld [vmem:[%s1 + $0x198] sm:$0xff]
      %v397 = vld [vmem:[%s1 + $0x1a0] sm:$0xff]
      %v398 = vld [vmem:[%s1 + $0x1a8] sm:$0xff]
      %v399 = vld [vmem:[%s1 + $0x1b0] sm:$0xff]
      %v400 = vld [vmem:[%s1 + $0x1b8] sm:$0xff]
      %v401 = vld [vmem:[%s1 + $0x1c0] sm:$0xff]
      %v402 = vld [vmem:[%s1 + $0x1c8] sm:$0xff]
      %v403 = vld [vmem:[%s1 + $0x1d0] sm:$0xff]
      %v404 = vld [vmem:[%s1 + $0x1d8] sm:$0xff]
      %v405 = vld [vmem:[%s1 + $0x1e0] sm:$0xff]
      %v406 = vld [vmem:[%s1 + $0x1e8] sm:$0xff]
      %v407 = vld [vmem:[%s1 + $0x1f0] sm:$0xff]
      %v408 = vld [vmem:[%s1 + $0x1f8] sm:$0xff]
      %v409 = vld [vmem:[%s1 + $0x200] sm:$0xff]
      %v410 = vld [vmem:[%s1 + $0x208] sm:$0xff]
      %v411 = vld [vmem:[%s1 + $0x210] sm:$0xff]
      %v412 = vld [vmem:[%s1 + $0x218] sm:$0xff]
      %v413 = vld [vmem:[%s1 + $0x220] sm:$0xff]
      %v414 = vld [vmem:[%s1 + $0x228] sm:$0xff]
      %v415 = vld [vmem:[%s1 + $0x230] sm:$0xff]
      %v416 = vld [vmem:[%s1 + $0x238] sm:$0xff]
      %v417 = vld [vmem:[%s1 + $0x240] sm:$0xff]
      %v418 = vld [vmem:[%s1 + $0x248] sm:$0xff]
      %v419 = vld [vmem:[%s1 + $0x250] sm:$0xff]
      %v420 = vld [vmem:[%s1 + $0x258] sm:$0xff]
      %v421 = vld [vmem:[%s1 + $0x260] sm:$0xff]
      %v422 = vld [vmem:[%s1 + $0x268] sm:$0xff]
      %v423 = vld [vmem:[%s1 + $0x270] sm:$0xff]
      %v424 = vld [vmem:[%s1 + $0x278] sm:$0xff]
      %v425 = vld [vmem:[%s1 + $0x280] sm:$0xff]
      %v426 = vld [vmem:[%s1 + $0x288] sm:$0xff]
      %v427 = vld [vmem:[%s1 + $0x290] sm:$0xff]
      %v428 = vld [vmem:[%s1 + $0x298] sm:$0xff]
      %v429 = vld [vmem:[%s1 + $0x2a0] sm:$0xff]
      %v430 = vld [vmem:[%s1 + $0x2a8] sm:$0xff]
      %v431 = vld [vmem:[%s1 + $0x2b0] sm:$0xff]
      %v432 = vld [vmem:[%s1 + $0x2b8] sm:$0xff]
      %v433 = vld [vmem:[%s1 + $0x2c0] sm:$0xff]
      %v434 = vld [vmem:[%s1 + $0x2c8] sm:$0xff]
      %v435 = vld [vmem:[%s1 + $0x2d0] sm:$0xff]
      %v436 = vld [vmem:[%s1 + $0x2d8] sm:$0xff]
      %v437 = vld [vmem:[%s1 + $0x2e0] sm:$0xff]
      %v438 = vld [vmem:[%s1 + $0x2e8] sm:$0xff]
      %v439 = vld [vmem:[%s1 + $0x2f0] sm:$0xff]
      %v440 = vld [vmem:[%s1 + $0x2f8] sm:$0xff]
      %v441 = vld [vmem:[%s1 + $0x300] sm:$0xff]
      %v442 = vld [vmem:[%s1 + $0x308] sm:$0xff]
      %v443 = vld [vmem:[%s2] sm:$0x1]
      %v445 = vlaneseq
      %v446 = vshrl.u32 %v445, 7
      %v447 = vsub.s32 0, %v446
      %v448 = vrot.slane %v443, %v447
      %vm450 = vcmask 130048
      %v452 = vsel %vm450, %v239, 0
      %v455 = vsel %vm450, %v246, 0
      %v458 = vsel %vm450, %v253, 0
      %v461 = vsel %vm450, %v260, 0
      %v464 = vsel %vm450, %v267, 0
      %v467 = vsel %vm450, %v274, 0
      %v470 = vsel %vm450, %v281, 0
      %v473 = vsel %vm450, %v288, 0
      %v476 = vsel %vm450, %v295, 0
      %v479 = vsel %vm450, %v302, 0
      %v482 = vsel %vm450, %v309, 0
      %v485 = vsel %vm450, %v316, 0
      %v488 = vsel %vm450, %v323, 0
      %v491 = vsel %vm450, %v330, 0
      %v494 = vsel %vm450, %v337, 0
      %v497 = vsel %vm450, %v344, 0
      %499 = vmatprep.subr.mxu0 0.0
      %500 = vmatpush1.msra.mxu0 %v345
      %501 = vmatprep.subr.mxu0 0.0
      %502 = vmatpush1.msra.mxu0 %v346
      %503 = vmatprep.subr.mxu0 0.0
      %504 = vmatpush1.msra.mxu0 %v347
      %505 = vmatprep.subr.mxu0 0.0
      %506 = vmatpush1.msra.mxu0 %v348
      %507 = vmatprep.subr.mxu0 0.0
      %508 = vmatpush1.msra.mxu0 %v349
      %509 = vmatprep.subr.mxu0 0.0
      %510 = vmatpush1.msra.mxu0 %v350
      %511 = vmatprep.subr.mxu0 0.0
      %512 = vmatpush1.msra.mxu0 %v351
      %513 = vmatprep.subr.mxu0 0.0
      %514 = vmatpush1.msra.mxu0 %v352
      %515 = vmatprep.subr.mxu0 0.0
      %516 = vmatpush1.msra.mxu0 %v353
      %517 = vmatprep.subr.mxu0 0.0
      %518 = vmatpush1.msra.mxu0 %v354
      %519 = vmatprep.subr.mxu0 0.0
      %520 = vmatpush1.msra.mxu0 %v355
      %521 = vmatprep.subr.mxu0 0.0
      %522 = vmatpush1.msra.mxu0 %v356
      %523 = vmatprep.subr.mxu0 0.0
      %524 = vmatpush1.msra.mxu0 %v357
      %525 = vmatprep.subr.mxu0 0.0
      %526 = vmatpush1.msra.mxu0 %v358
      %527 = vmatprep.subr.mxu0 0.0
      %528 = vmatpush1.msra.mxu0 %v359
      %529 = vmatprep.subr.mxu0 0.0
      %530 = vmatpush1.msra.mxu0 %v360
      %531 = vmatprep.subr.mxu0 0.0
      %532 = vmatpush1.msra.mxu0 %v361
      %533 = vmatprep.subr.mxu0 0.0
      %534 = vmatpush1.msra.mxu0 %v362
      %535 = vmatprep.subr.mxu0 0.0
      %536 = vmatpush1.msra.mxu0 %v363
      %537 = vmatprep.subr.mxu0 0.0
      %538 = vmatpush1.msra.mxu0 %v364
      %539 = vmatprep.subr.mxu0 0.0
      %540 = vmatpush1.msra.mxu0 %v365
      %541 = vmatprep.subr.mxu0 0.0
      %542 = vmatpush1.msra.mxu0 %v366
      %543 = vmatprep.subr.mxu0 0.0
      %544 = vmatpush1.msra.mxu0 %v367
      %545 = vmatprep.subr.mxu0 0.0
      %546 = vmatpush1.msra.mxu0 %v368
      %547 = vmatprep.subr.mxu0 0.0
      %548 = vmatpush1.msra.mxu0 %v369
      %549 = vmatprep.subr.mxu0 0.0
      %550 = vmatpush1.msra.mxu0 %v370
      %551 = vmatprep.subr.mxu0 0.0
      %552 = vmatpush1.msra.mxu0 %v371
      %553 = vmatprep.subr.mxu0 0.0
      %554 = vmatpush1.msra.mxu0 %v372
      %555 = vmatprep.subr.mxu0 0.0
      %556 = vmatpush1.msra.mxu0 %v373
      %557 = vmatprep.subr.mxu0 0.0
      %558 = vmatpush1.msra.mxu0 %v374
      %559 = vmatprep.subr.mxu0 0.0
      %560 = vmatpush1.msra.mxu0 %v375
      %561 = vmatprep.subr.mxu0 0.0
      %562 = vmatpush1.msra.mxu0 %v376
      %563 = vmatprep.mubr.f32.mxu0 %v234
      %564 = vmatmul.mubr.f32.gmra.mrb[0].mxu0 %v233
      %v565 = vpop.f32.mrb[0].mxu0
      %v566 = vadd.f32 %v448, %v565
      %v567 = vpop.f32.mrb[0].mxu0
      %568 = vmatprep.mubr.f32.mxu0 %v241
      %569 = vmatmul.mubr.f32.gmra.mrb[0].mxu0 %v240
      %v570 = vpop.f32.mrb[0].mxu0
      %v571 = vadd.f32 %v448, %v570
      %v572 = vpop.f32.mrb[0].mxu0
      %573 = vmatprep.mubr.f32.mxu0 %v248
      %574 = vmatmul.mubr.f32.gmra.mrb[0].mxu0 %v247
      %v575 = vpop.f32.mrb[0].mxu0
      %v576 = vadd.f32 %v448, %v575
      %v577 = vpop.f32.mrb[0].mxu0
      %578 = vmatprep.mubr.f32.mxu0 %v255
      %579 = vmatmul.mubr.f32.gmra.mrb[0].mxu0 %v254
      %v580 = vpop.f32.mrb[0].mxu0
      %v581 = vadd.f32 %v448, %v580
      %v582 = vpop.f32.mrb[0].mxu0
      %583 = vmatprep.mubr.f32.mxu0 %v262
      %584 = vmatmul.mubr.f32.gmra.mrb[0].mxu0 %v261
      %v585 = vpop.f32.mrb[0].mxu0
      %v586 = vadd.f32 %v448, %v585
      %v587 = vpop.f32.mrb[0].mxu0
      %588 = vmatprep.mubr.f32.mxu0 %v269
      %589 = vmatmul.mubr.f32.gmra.mrb[0].mxu0 %v268
      %v590 = vpop.f32.mrb[0].mxu0
      %v591 = vadd.f32 %v448, %v590
      %v592 = vpop.f32.mrb[0].mxu0
      %593 = vmatprep.mubr.f32.mxu0 %v276
      %594 = vmatmul.mubr.f32.gmra.mrb[0].mxu0 %v275
      %v595 = vpop.f32.mrb[0].mxu0
      %v596 = vadd.f32 %v448, %v595
      %v597 = vpop.f32.mrb[0].mxu0
      %598 = vmatprep.mubr.f32.mxu0 %v283
      %599 = vmatmul.mubr.f32.gmra.mrb[0].mxu0 %v282
      %v600 = vpop.f32.mrb[0].mxu0
      %v601 = vadd.f32 %v448, %v600
      %v602 = vpop.f32.mrb[0].mxu0
      %603 = vmatprep.mubr.f32.mxu0 %v290
      %604 = vmatmul.mubr.f32.gmra.mrb[0].mxu0 %v289
      %v605 = vpop.f32.mrb[0].mxu0
      %v606 = vadd.f32 %v448, %v605
      %v607 = vpop.f32.mrb[0].mxu0
      %608 = vmatprep.mubr.f32.mxu0 %v297
      %609 = vmatmul.mubr.f32.gmra.mrb[0].mxu0 %v296
      %v610 = vpop.f32.mrb[0].mxu0
      %v611 = vadd.f32 %v448, %v610
      %v612 = vpop.f32.mrb[0].mxu0
      %613 = vmatprep.mubr.f32.mxu0 %v304
      %614 = vmatmul.mubr.f32.gmra.mrb[0].mxu0 %v303
      %v615 = vpop.f32.mrb[0].mxu0
      %v616 = vadd.f32 %v448, %v615
      %v617 = vpop.f32.mrb[0].mxu0
      %618 = vmatprep.mubr.f32.mxu0 %v311
      %619 = vmatmul.mubr.f32.gmra.mrb[0].mxu0 %v310
      %v620 = vpop.f32.mrb[0].mxu0
      %v621 = vadd.f32 %v448, %v620
      %v622 = vpop.f32.mrb[0].mxu0
      %623 = vmatprep.mubr.f32.mxu0 %v318
      %624 = vmatmul.mubr.f32.gmra.mrb[0].mxu0 %v317
      %v625 = vpop.f32.mrb[0].mxu0
      %v626 = vadd.f32 %v448, %v625
      %v627 = vpop.f32.mrb[0].mxu0
      %628 = vmatprep.mubr.f32.mxu0 %v325
      %629 = vmatmul.mubr.f32.gmra.mrb[0].mxu0 %v324
      %v630 = vpop.f32.mrb[0].mxu0
      %v631 = vadd.f32 %v448, %v630
      %v632 = vpop.f32.mrb[0].mxu0
      %633 = vmatprep.mubr.f32.mxu0 %v332
      %634 = vmatmul.mubr.f32.gmra.mrb[0].mxu0 %v331
      %v635 = vpop.f32.mrb[0].mxu0
      %v636 = vadd.f32 %v448, %v635
      %v637 = vpop.f32.mrb[0].mxu0
      %638 = vmatprep.mubr.f32.mxu0 %v339
      %639 = vmatmul.mubr.f32.gmra.mrb[0].mxu0 %v338
      %v640 = vpop.f32.mrb[0].mxu0
      %v641 = vadd.f32 %v448, %v640
      %v642 = vpop.f32.mrb[0].mxu0
      %643 = vdwg.mxu0
      %644 = vmatprep.subr.mxu0 0.0
      %645 = vmatpush1.msra.mxu0 %v377
      %646 = vmatprep.subr.mxu0 0.0
      %647 = vmatpush1.msra.mxu0 %v378
      %648 = vmatprep.subr.mxu0 0.0
      %649 = vmatpush1.msra.mxu0 %v379
      %650 = vmatprep.subr.mxu0 0.0
      %651 = vmatpush1.msra.mxu0 %v380
      %652 = vmatprep.subr.mxu0 0.0
      %653 = vmatpush1.msra.mxu0 %v381
      %654 = vmatprep.subr.mxu0 0.0
      %655 = vmatpush1.msra.mxu0 %v382
      %656 = vmatprep.subr.mxu0 0.0
      %657 = vmatpush1.msra.mxu0 %v383
      %658 = vmatprep.subr.mxu0 0.0
      %659 = vmatpush1.msra.mxu0 %v384
      %660 = vmatprep.subr.mxu0 0.0
      %661 = vmatpush1.msra.mxu0 %v385
      %662 = vmatprep.subr.mxu0 0.0
      %663 = vmatpush1.msra.mxu0 %v386
      %664 = vmatprep.subr.mxu0 0.0
      %665 = vmatpush1.msra.mxu0 %v387
      %666 = vmatprep.subr.mxu0 0.0
      %667 = vmatpush1.msra.mxu0 %v388
      %668 = vmatprep.subr.mxu0 0.0
      %669 = vmatpush1.msra.mxu0 %v389
      %670 = vmatprep.subr.mxu0 0.0
      %671 = vmatpush1.msra.mxu0 %v390
      %672 = vmatprep.subr.mxu0 0.0
      %673 = vmatpush1.msra.mxu0 %v391
      %674 = vmatprep.subr.mxu0 0.0
      %675 = vmatpush1.msra.mxu0 %v392
      %676 = vmatprep.subr.mxu0 0.0
      %677 = vmatpush1.msra.mxu0 %v393
      %678 = vmatprep.subr.mxu0 0.0
      %679 = vmatpush1.msra.mxu0 %v394
      %680 = vmatprep.subr.mxu0 0.0
      %681 = vmatpush1.msra.mxu0 %v395
      %682 = vmatprep.subr.mxu0 0.0
      %683 = vmatpush1.msra.mxu0 %v396
      %684 = vmatprep.subr.mxu0 0.0
      %685 = vmatpush1.msra.mxu0 %v397
      %686 = vmatprep.subr.mxu0 0.0
      %687 = vmatpush1.msra.mxu0 %v398
      %688 = vmatprep.subr.mxu0 0.0
      %689 = vmatpush1.msra.mxu0 %v399
      %690 = vmatprep.subr.mxu0 0.0
      %691 = vmatpush1.msra.mxu0 %v400
      %692 = vmatprep.subr.mxu0 0.0
      %693 = vmatpush1.msra.mxu0 %v401
      %694 = vmatprep.subr.mxu0 0.0
      %695 = vmatpush1.msra.mxu0 %v402
      %696 = vmatprep.subr.mxu0 0.0
      %697 = vmatpush1.msra.mxu0 %v403
      %698 = vmatprep.subr.mxu0 0.0
      %699 = vmatpush1.msra.mxu0 %v404
      %700 = vmatprep.subr.mxu0 0.0
      %701 = vmatpush1.msra.mxu0 %v405
      %702 = vmatprep.subr.mxu0 0.0
      %703 = vmatpush1.msra.mxu0 %v406
      %704 = vmatprep.subr.mxu0 0.0
      %705 = vmatpush1.msra.mxu0 %v407
      %706 = vmatprep.subr.mxu0 0.0
      %707 = vmatpush1.msra.mxu0 %v408
      %708 = vmatprep.mubr.f32.mxu0 %v236
      %709 = vmatmul.mubr.f32.gmra.mrb[0].mxu0 %v235
      %v710 = vpop.f32.mrb[0].mxu0
      %v711 = vadd.f32 %v566, %v710
      %v712 = vpop.f32.mrb[0].mxu0
      %713 = vmatprep.mubr.f32.mxu0 %v243
      %714 = vmatmul.mubr.f32.gmra.mrb[0].mxu0 %v242
      %v715 = vpop.f32.mrb[0].mxu0
      %v716 = vadd.f32 %v571, %v715
      %v717 = vpop.f32.mrb[0].mxu0
      %718 = vmatprep.mubr.f32.mxu0 %v250
      %719 = vmatmul.mubr.f32.gmra.mrb[0].mxu0 %v249
      %v720 = vpop.f32.mrb[0].mxu0
      %v721 = vadd.f32 %v576, %v720
      %v722 = vpop.f32.mrb[0].mxu0
      %723 = vmatprep.mubr.f32.mxu0 %v257
      %724 = vmatmul.mubr.f32.gmra.mrb[0].mxu0 %v256
      %v725 = vpop.f32.mrb[0].mxu0
      %v726 = vadd.f32 %v581, %v725
      %v727 = vpop.f32.mrb[0].mxu0
      %728 = vmatprep.mubr.f32.mxu0 %v264
      %729 = vmatmul.mubr.f32.gmra.mrb[0].mxu0 %v263
      %v730 = vpop.f32.mrb[0].mxu0
      %v731 = vadd.f32 %v586, %v730
      %v732 = vpop.f32.mrb[0].mxu0
      %733 = vmatprep.mubr.f32.mxu0 %v271
      %734 = vmatmul.mubr.f32.gmra.mrb[0].mxu0 %v270
      %v735 = vpop.f32.mrb[0].mxu0
      %v736 = vadd.f32 %v591, %v735
      %v737 = vpop.f32.mrb[0].mxu0
      %738 = vmatprep.mubr.f32.mxu0 %v278
      %739 = vmatmul.mubr.f32.gmra.mrb[0].mxu0 %v277
      %v740 = vpop.f32.mrb[0].mxu0
      %v741 = vadd.f32 %v596, %v740
      %v742 = vpop.f32.mrb[0].mxu0
      %743 = vmatprep.mubr.f32.mxu0 %v285
      %744 = vmatmul.mubr.f32.gmra.mrb[0].mxu0 %v284
      %v745 = vpop.f32.mrb[0].mxu0
      %v746 = vadd.f32 %v601, %v745
      %v747 = vpop.f32.mrb[0].mxu0
      %748 = vmatprep.mubr.f32.mxu0 %v292
      %749 = vmatmul.mubr.f32.gmra.mrb[0].mxu0 %v291
      %v750 = vpop.f32.mrb[0].mxu0
      %v751 = vadd.f32 %v606, %v750
      %v752 = vpop.f32.mrb[0].mxu0
      %753 = vmatprep.mubr.f32.mxu0 %v299
      %754 = vmatmul.mubr.f32.gmra.mrb[0].mxu0 %v298
      %v755 = vpop.f32.mrb[0].mxu0
      %v756 = vadd.f32 %v611, %v755
      %v757 = vpop.f32.mrb[0].mxu0
      %758 = vmatprep.mubr.f32.mxu0 %v306
      %759 = vmatmul.mubr.f32.gmra.mrb[0].mxu0 %v305
      %v760 = vpop.f32.mrb[0].mxu0
      %v761 = vadd.f32 %v616, %v760
      %v762 = vpop.f32.mrb[0].mxu0
      %763 = vmatprep.mubr.f32.mxu0 %v313
      %764 = vmatmul.mubr.f32.gmra.mrb[0].mxu0 %v312
      %v765 = vpop.f32.mrb[0].mxu0
      %v766 = vadd.f32 %v621, %v765
      %v767 = vpop.f32.mrb[0].mxu0
      %768 = vmatprep.mubr.f32.mxu0 %v320
      %769 = vmatmul.mubr.f32.gmra.mrb[0].mxu0 %v319
      %v770 = vpop.f32.mrb[0].mxu0
      %v771 = vadd.f32 %v626, %v770
      %v772 = vpop.f32.mrb[0].mxu0
      %773 = vmatprep.mubr.f32.mxu0 %v327
      %774 = vmatmul.mubr.f32.gmra.mrb[0].mxu0 %v326
      %v775 = vpop.f32.mrb[0].mxu0
      %v776 = vadd.f32 %v631, %v775
      %v777 = vpop.f32.mrb[0].mxu0
      %778 = vmatprep.mubr.f32.mxu0 %v334
      %779 = vmatmul.mubr.f32.gmra.mrb[0].mxu0 %v333
      %v780 = vpop.f32.mrb[0].mxu0
      %v781 = vadd.f32 %v636, %v780
      %v782 = vpop.f32.mrb[0].mxu0
      %783 = vmatprep.mubr.f32.mxu0 %v341
      %784 = vmatmul.mubr.f32.gmra.mrb[0].mxu0 %v340
      %v785 = vpop.f32.mrb[0].mxu0
      %v786 = vadd.f32 %v641, %v785
      %v787 = vpop.f32.mrb[0].mxu0
      %788 = vdwg.mxu0
      %789 = vmatprep.subr.mxu0 0.0
      %790 = vmatpush1.msra.mxu0 %v409
      %791 = vmatprep.subr.mxu0 0.0
      %792 = vmatpush1.msra.mxu0 %v410
      %793 = vmatprep.subr.mxu0 0.0
      %794 = vmatpush1.msra.mxu0 %v411
      %795 = vmatprep.subr.mxu0 0.0
      %796 = vmatpush1.msra.mxu0 %v412
      %797 = vmatprep.subr.mxu0 0.0
      %798 = vmatpush1.msra.mxu0 %v413
      %799 = vmatprep.subr.mxu0 0.0
      %800 = vmatpush1.msra.mxu0 %v414
      %801 = vmatprep.subr.mxu0 0.0
      %802 = vmatpush1.msra.mxu0 %v415
      %803 = vmatprep.subr.mxu0 0.0
      %804 = vmatpush1.msra.mxu0 %v416
      %805 = vmatprep.subr.mxu0 0.0
      %806 = vmatpush1.msra.mxu0 %v417
      %807 = vmatprep.subr.mxu0 0.0
      %808 = vmatpush1.msra.mxu0 %v418
      %809 = vmatprep.subr.mxu0 0.0
      %810 = vmatpush1.msra.mxu0 %v419
      %811 = vmatprep.subr.mxu0 0.0
      %812 = vmatpush1.msra.mxu0 %v420
      %813 = vmatprep.subr.mxu0 0.0
      %814 = vmatpush1.msra.mxu0 %v421
      %815 = vmatprep.subr.mxu0 0.0
      %816 = vmatpush1.msra.mxu0 %v422
      %817 = vmatprep.subr.mxu0 0.0
      %818 = vmatpush1.msra.mxu0 %v423
      %819 = vmatprep.subr.mxu0 0.0
      %820 = vmatpush1.msra.mxu0 %v424
      %821 = vmatprep.subr.mxu0 0.0
      %822 = vmatpush1.msra.mxu0 %v425
      %823 = vmatprep.subr.mxu0 0.0
      %824 = vmatpush1.msra.mxu0 %v426
      %825 = vmatprep.subr.mxu0 0.0
      %826 = vmatpush1.msra.mxu0 %v427
      %827 = vmatprep.subr.mxu0 0.0
      %828 = vmatpush1.msra.mxu0 %v428
      %829 = vmatprep.subr.mxu0 0.0
      %830 = vmatpush1.msra.mxu0 %v429
      %831 = vmatprep.subr.mxu0 0.0
      %832 = vmatpush1.msra.mxu0 %v430
      %833 = vmatprep.subr.mxu0 0.0
      %834 = vmatpush1.msra.mxu0 %v431
      %835 = vmatprep.subr.mxu0 0.0
      %836 = vmatpush1.msra.mxu0 %v432
      %837 = vmatprep.subr.mxu0 0.0
      %838 = vmatpush1.msra.mxu0 %v433
      %839 = vmatprep.subr.mxu0 0.0
      %840 = vmatpush1.msra.mxu0 %v434
      %841 = vmatprep.subr.mxu0 0.0
      %842 = vmatpush1.msra.mxu0 %v435
      %843 = vmatprep.subr.mxu0 0.0
      %844 = vmatpush1.msra.mxu0 %v436
      %845 = vmatprep.subr.mxu0 0.0
      %846 = vmatpush1.msra.mxu0 %v437
      %847 = vmatprep.subr.mxu0 0.0
      %848 = vmatpush1.msra.mxu0 %v438
      %849 = vmatprep.subr.mxu0 0.0
      %850 = vmatpush1.msra.mxu0 %v439
      %851 = vmatprep.subr.mxu0 0.0
      %852 = vmatpush1.msra.mxu0 %v440
      %853 = vmatprep.mubr.f32.mxu0 %v238
      %854 = vmatmul.mubr.f32.gmra.mrb[0].mxu0 %v237
      %v855 = vpop.f32.mrb[0].mxu0
      %v856 = vadd.f32 %v711, %v855
      %v857 = vpop.f32.mrb[0].mxu0
      %858 = vmatprep.mubr.f32.mxu0 %v245
      %859 = vmatmul.mubr.f32.gmra.mrb[0].mxu0 %v244
      %v860 = vpop.f32.mrb[0].mxu0
      %v861 = vadd.f32 %v716, %v860
      %v862 = vpop.f32.mrb[0].mxu0
      %863 = vmatprep.mubr.f32.mxu0 %v252
      %864 = vmatmul.mubr.f32.gmra.mrb[0].mxu0 %v251
      %v865 = vpop.f32.mrb[0].mxu0
      %v866 = vadd.f32 %v721, %v865
      %v867 = vpop.f32.mrb[0].mxu0
      %868 = vmatprep.mubr.f32.mxu0 %v259
      %869 = vmatmul.mubr.f32.gmra.mrb[0].mxu0 %v258
      %v870 = vpop.f32.mrb[0].mxu0
      %v871 = vadd.f32 %v726, %v870
      %v872 = vpop.f32.mrb[0].mxu0
      %873 = vmatprep.mubr.f32.mxu0 %v266
      %874 = vmatmul.mubr.f32.gmra.mrb[0].mxu0 %v265
      %v875 = vpop.f32.mrb[0].mxu0
      %v876 = vadd.f32 %v731, %v875
      %v877 = vpop.f32.mrb[0].mxu0
      %878 = vmatprep.mubr.f32.mxu0 %v273
      %879 = vmatmul.mubr.f32.gmra.mrb[0].mxu0 %v272
      %v880 = vpop.f32.mrb[0].mxu0
      %v881 = vadd.f32 %v736, %v880
      %v882 = vpop.f32.mrb[0].mxu0
      %883 = vmatprep.mubr.f32.mxu0 %v280
      %884 = vmatmul.mubr.f32.gmra.mrb[0].mxu0 %v279
      %v885 = vpop.f32.mrb[0].mxu0
      %v886 = vadd.f32 %v741, %v885
      %v887 = vpop.f32.mrb[0].mxu0
      %888 = vmatprep.mubr.f32.mxu0 %v287
      %889 = vmatmul.mubr.f32.gmra.mrb[0].mxu0 %v286
      %v890 = vpop.f32.mrb[0].mxu0
      %v891 = vadd.f32 %v746, %v890
      %v892 = vpop.f32.mrb[0].mxu0
      %893 = vmatprep.mubr.f32.mxu0 %v294
      %894 = vmatmul.mubr.f32.gmra.mrb[0].mxu0 %v293
      %v895 = vpop.f32.mrb[0].mxu0
      %v896 = vadd.f32 %v751, %v895
      %v897 = vpop.f32.mrb[0].mxu0
      %898 = vmatprep.mubr.f32.mxu0 %v301
      %899 = vmatmul.mubr.f32.gmra.mrb[0].mxu0 %v300
      %v900 = vpop.f32.mrb[0].mxu0
      %v901 = vadd.f32 %v756, %v900
      %v902 = vpop.f32.mrb[0].mxu0
      %903 = vmatprep.mubr.f32.mxu0 %v308
      %904 = vmatmul.mubr.f32.gmra.mrb[0].mxu0 %v307
      %v905 = vpop.f32.mrb[0].mxu0
      %v906 = vadd.f32 %v761, %v905
      %v907 = vpop.f32.mrb[0].mxu0
      %908 = vmatprep.mubr.f32.mxu0 %v315
      %909 = vmatmul.mubr.f32.gmra.mrb[0].mxu0 %v314
      %v910 = vpop.f32.mrb[0].mxu0
      %v911 = vadd.f32 %v766, %v910
      %v912 = vpop.f32.mrb[0].mxu0
      %913 = vmatprep.mubr.f32.mxu0 %v322
      %914 = vmatmul.mubr.f32.gmra.mrb[0].mxu0 %v321
      %v915 = vpop.f32.mrb[0].mxu0
      %v916 = vadd.f32 %v771, %v915
      %v917 = vpop.f32.mrb[0].mxu0
      %918 = vmatprep.mubr.f32.mxu0 %v329
      %919 = vmatmul.mubr.f32.gmra.mrb[0].mxu0 %v328
      %v920 = vpop.f32.mrb[0].mxu0
      %v921 = vadd.f32 %v776, %v920
      %v922 = vpop.f32.mrb[0].mxu0
      %923 = vmatprep.mubr.f32.mxu0 %v336
      %924 = vmatmul.mubr.f32.gmra.mrb[0].mxu0 %v335
      %v925 = vpop.f32.mrb[0].mxu0
      %v926 = vadd.f32 %v781, %v925
      %v927 = vpop.f32.mrb[0].mxu0
      %928 = vmatprep.mubr.f32.mxu0 %v343
      %929 = vmatmul.mubr.f32.gmra.mrb[0].mxu0 %v342
      %v930 = vpop.f32.mrb[0].mxu0
      %v931 = vadd.f32 %v786, %v930
      %v932 = vpop.f32.mrb[0].mxu0
      %933 = vdwg.mxu0
      %934 = vmatprep.subr.mxu0 0.0
      %935 = vmatpush1.msra.mxu0 %v441
      %936 = vmatprep.subr.mxu0 0.0
      %937 = vmatpush1.msra.mxu0 %v442
      %938 = vmatprep.subr.mxu0 0.0
      %939 = vmatpush1.msra.mxu0 0.0
      %940 = vmatprep.subr.mxu0 0.0
      %941 = vmatpush1.msra.mxu0 0.0
      %942 = vmatprep.subr.mxu0 0.0
      %943 = vmatpush1.msra.mxu0 0.0
      %944 = vmatprep.subr.mxu0 0.0
      %945 = vmatpush1.msra.mxu0 0.0
      %946 = vmatprep.subr.mxu0 0.0
      %947 = vmatpush1.msra.mxu0 0.0
      %948 = vmatprep.subr.mxu0 0.0
      %949 = vmatpush1.msra.mxu0 0.0
      %950 = vmatprep.subr.mxu0 0.0
      %951 = vmatpush1.msra.mxu0 0.0
      %952 = vmatprep.subr.mxu0 0.0
      %953 = vmatpush1.msra.mxu0 0.0
      %954 = vmatprep.subr.mxu0 0.0
      %955 = vmatpush1.msra.mxu0 0.0
      %956 = vmatprep.subr.mxu0 0.0
      %957 = vmatpush1.msra.mxu0 0.0
      %958 = vmatprep.subr.mxu0 0.0
      %959 = vmatpush1.msra.mxu0 0.0
      %960 = vmatprep.subr.mxu0 0.0
      %961 = vmatpush1.msra.mxu0 0.0
      %962 = vmatprep.subr.mxu0 0.0
      %963 = vmatpush1.msra.mxu0 0.0
      %964 = vmatprep.subr.mxu0 0.0
      %965 = vmatpush1.msra.mxu0 0.0
      %966 = vmatprep.subr.mxu0 0.0
      %967 = vmatpush1.msra.mxu0 0.0
      %968 = vmatprep.subr.mxu0 0.0
      %969 = vmatpush1.msra.mxu0 0.0
      %970 = vmatprep.subr.mxu0 0.0
      %971 = vmatpush1.msra.mxu0 0.0
      %972 = vmatprep.subr.mxu0 0.0
      %973 = vmatpush1.msra.mxu0 0.0
      %974 = vmatprep.subr.mxu0 0.0
      %975 = vmatpush1.msra.mxu0 0.0
      %976 = vmatprep.subr.mxu0 0.0
      %977 = vmatpush1.msra.mxu0 0.0
      %978 = vmatprep.subr.mxu0 0.0
      %979 = vmatpush1.msra.mxu0 0.0
      %980 = vmatprep.subr.mxu0 0.0
      %981 = vmatpush1.msra.mxu0 0.0
      %982 = vmatprep.subr.mxu0 0.0
      %983 = vmatpush1.msra.mxu0 0.0
      %984 = vmatprep.subr.mxu0 0.0
      %985 = vmatpush1.msra.mxu0 0.0
      %986 = vmatprep.subr.mxu0 0.0
      %987 = vmatpush1.msra.mxu0 0.0
      %988 = vmatprep.subr.mxu0 0.0
      %989 = vmatpush1.msra.mxu0 0.0
      %990 = vmatprep.subr.mxu0 0.0
      %991 = vmatpush1.msra.mxu0 0.0
      %992 = vmatprep.subr.mxu0 0.0
      %993 = vmatpush1.msra.mxu0 0.0
      %994 = vmatprep.subr.mxu0 0.0
      %995 = vmatpush1.msra.mxu0 0.0
      %996 = vmatprep.subr.mxu0 0.0
      %997 = vmatpush1.msra.mxu0 0.0
      %998 = vmatprep.mubr.f32.mxu0 0.0
      %999 = vmatmul.mubr.f32.gmra.mrb[0].mxu0 %v452
      %v1000 = vpop.f32.mrb[0].mxu0
      %v1001 = vadd.f32 %v856, %v1000
      %v1002 = vpop.f32.mrb[0].mxu0
      %1003 = vmatprep.mubr.f32.mxu0 0.0
      %1004 = vmatmul.mubr.f32.gmra.mrb[0].mxu0 %v455
      %v1005 = vpop.f32.mrb[0].mxu0
      %v1006 = vadd.f32 %v861, %v1005
      %v1007 = vpop.f32.mrb[0].mxu0
      %1008 = vmatprep.mubr.f32.mxu0 0.0
      %1009 = vmatmul.mubr.f32.gmra.mrb[0].mxu0 %v458
      %v1010 = vpop.f32.mrb[0].mxu0
      %v1011 = vadd.f32 %v866, %v1010
      %v1012 = vpop.f32.mrb[0].mxu0
      %1013 = vmatprep.mubr.f32.mxu0 0.0
      %1014 = vmatmul.mubr.f32.gmra.mrb[0].mxu0 %v461
      %v1015 = vpop.f32.mrb[0].mxu0
      %v1016 = vadd.f32 %v871, %v1015
      %v1017 = vpop.f32.mrb[0].mxu0
      %1018 = vmatprep.mubr.f32.mxu0 0.0
      %1019 = vmatmul.mubr.f32.gmra.mrb[0].mxu0 %v464
      %v1020 = vpop.f32.mrb[0].mxu0
      %v1021 = vadd.f32 %v876, %v1020
      %v1022 = vpop.f32.mrb[0].mxu0
      %1023 = vmatprep.mubr.f32.mxu0 0.0
      %1024 = vmatmul.mubr.f32.gmra.mrb[0].mxu0 %v467
      %v1025 = vpop.f32.mrb[0].mxu0
      %v1026 = vadd.f32 %v881, %v1025
      %v1027 = vpop.f32.mrb[0].mxu0
      %1028 = vmatprep.mubr.f32.mxu0 0.0
      %1029 = vmatmul.mubr.f32.gmra.mrb[0].mxu0 %v470
      %v1030 = vpop.f32.mrb[0].mxu0
      %v1031 = vadd.f32 %v886, %v1030
      %v1032 = vpop.f32.mrb[0].mxu0
      %1033 = vmatprep.mubr.f32.mxu0 0.0
      %1034 = vmatmul.mubr.f32.gmra.mrb[0].mxu0 %v473
      %v1035 = vpop.f32.mrb[0].mxu0
      %v1036 = vadd.f32 %v891, %v1035
      %v1037 = vpop.f32.mrb[0].mxu0
      %1038 = vmatprep.mubr.f32.mxu0 0.0
      %1039 = vmatmul.mubr.f32.gmra.mrb[0].mxu0 %v476
      %v1040 = vpop.f32.mrb[0].mxu0
      %v1041 = vadd.f32 %v896, %v1040
      %v1042 = vpop.f32.mrb[0].mxu0
      %1043 = vmatprep.mubr.f32.mxu0 0.0
      %1044 = vmatmul.mubr.f32.gmra.mrb[0].mxu0 %v479
      %v1045 = vpop.f32.mrb[0].mxu0
      %v1046 = vadd.f32 %v901, %v1045
      %v1047 = vpop.f32.mrb[0].mxu0
      %1048 = vmatprep.mubr.f32.mxu0 0.0
      %1049 = vmatmul.mubr.f32.gmra.mrb[0].mxu0 %v482
      %v1050 = vpop.f32.mrb[0].mxu0
      %v1051 = vadd.f32 %v906, %v1050
      %v1052 = vpop.f32.mrb[0].mxu0
      %1053 = vmatprep.mubr.f32.mxu0 0.0
      %1054 = vmatmul.mubr.f32.gmra.mrb[0].mxu0 %v485
      %v1055 = vpop.f32.mrb[0].mxu0
      %v1056 = vadd.f32 %v911, %v1055
      %v1057 = vpop.f32.mrb[0].mxu0
      %1058 = vmatprep.mubr.f32.mxu0 0.0
      %1059 = vmatmul.mubr.f32.gmra.mrb[0].mxu0 %v488
      %v1060 = vpop.f32.mrb[0].mxu0
      %v1061 = vadd.f32 %v916, %v1060
      %v1062 = vpop.f32.mrb[0].mxu0
      %1063 = vmatprep.mubr.f32.mxu0 0.0
      %1064 = vmatmul.mubr.f32.gmra.mrb[0].mxu0 %v491
      %v1065 = vpop.f32.mrb[0].mxu0
      %v1066 = vadd.f32 %v921, %v1065
      %v1067 = vpop.f32.mrb[0].mxu0
      %1068 = vmatprep.mubr.f32.mxu0 0.0
      %1069 = vmatmul.mubr.f32.gmra.mrb[0].mxu0 %v494
      %v1070 = vpop.f32.mrb[0].mxu0
      %v1071 = vadd.f32 %v926, %v1070
      %v1072 = vpop.f32.mrb[0].mxu0
      %1073 = vmatprep.mubr.f32.mxu0 0.0
      %1074 = vmatmul.mubr.f32.gmra.mrb[0].mxu0 %v497
      %v1075 = vpop.f32.mrb[0].mxu0
      %v1076 = vadd.f32 %v931, %v1075
      %v1077 = vpop.f32.mrb[0].mxu0
      %1078 = vdwg.mxu0
      %v1079 = vld [vmem:[%s3] sm:$0xff]
      %v1080 = vld [vmem:[%s3 + $0x8] sm:$0xff]
      %v1081 = vld [vmem:[%s3 + $0x10] sm:$0xff]
      %v1082 = vld [vmem:[%s3 + $0x18] sm:$0xff]
      %v1083 = vld [vmem:[%s3 + $0x20] sm:$0xff]
      %v1084 = vld [vmem:[%s3 + $0x28] sm:$0xff]
      %v1085 = vld [vmem:[%s3 + $0x30] sm:$0xff]
      %v1086 = vld [vmem:[%s3 + $0x38] sm:$0xff]
      %v1087 = vld [vmem:[%s3 + $0x40] sm:$0xff]
      %v1088 = vld [vmem:[%s3 + $0x48] sm:$0xff]
      %v1089 = vld [vmem:[%s3 + $0x50] sm:$0xff]
      %v1090 = vld [vmem:[%s3 + $0x58] sm:$0xff]
      %v1091 = vld [vmem:[%s3 + $0x60] sm:$0xff]
      %v1092 = vld [vmem:[%s3 + $0x68] sm:$0xff]
      %v1093 = vld [vmem:[%s3 + $0x70] sm:$0xf]
      %v1094 = vld [vmem:[%s3 + $0x78] sm:$0xf]
      %v1095 = vld [vmem:[%s3 + $0x80] sm:$0xf]
      %v1096 = vld [vmem:[%s3 + $0x88] sm:$0xf]
      %v1097 = vld [vmem:[%s3 + $0x90] sm:$0xf]
      %v1098 = vld [vmem:[%s3 + $0x98] sm:$0xf]
      %v1099 = vld [vmem:[%s3 + $0xa0] sm:$0xf]
      %v1100 = vld [vmem:[%s4] sm:$0x7f]
      %v1102 = vlaneseq
      %v1103 = vshrl.u32 %v1102, 7
      %v1104 = vsub.s32 0, %v1103
      %v1105 = vrot.slane %v1100, %v1104
      %v1106 = vlaneseq
      %v1107 = vshrl.u32 %v1106, 7
      %v1108 = vsub.s32 1, %v1107
      %v1109 = vrot.slane %v1100, %v1108
      %v1110 = vlaneseq
      %v1111 = vshrl.u32 %v1110, 7
      %v1112 = vsub.s32 2, %v1111
      %v1113 = vrot.slane %v1100, %v1112
      %v1114 = vlaneseq
      %v1115 = vshrl.u32 %v1114, 7
      %v1116 = vsub.s32 3, %v1115
      %v1117 = vrot.slane %v1100, %v1116
      %v1118 = vlaneseq
      %v1119 = vshrl.u32 %v1118, 7
      %v1120 = vsub.s32 4, %v1119
      %v1121 = vrot.slane %v1100, %v1120
      %v1122 = vlaneseq
      %v1123 = vshrl.u32 %v1122, 7
      %v1124 = vsub.s32 5, %v1123
      %v1125 = vrot.slane %v1100, %v1124
      %v1126 = vlaneseq
      %v1127 = vshrl.u32 %v1126, 7
      %v1128 = vsub.s32 6, %v1127
      %v1129 = vrot.slane %v1100, %v1128
      %vm1137 = vcmask 162816
      %v1139 = vsel %vm1137, %v1001, 0
      %v1142 = vsel %vm1137, %v1006, 0
      %v1145 = vsel %vm1137, %v1011, 0
      %v1148 = vsel %vm1137, %v1016, 0
      %v1151 = vsel %vm1137, %v1021, 0
      %v1154 = vsel %vm1137, %v1026, 0
      %v1157 = vsel %vm1137, %v1031, 0
      %v1160 = vsel %vm1137, %v1036, 0
      %v1163 = vsel %vm1137, %v1041, 0
      %v1166 = vsel %vm1137, %v1046, 0
      %v1169 = vsel %vm1137, %v1051, 0
      %v1172 = vsel %vm1137, %v1056, 0
      %v1175 = vsel %vm1137, %v1061, 0
      %v1178 = vsel %vm1137, %v1066, 0
      %v1181 = vsel %vm1137, %v1071, 0
      %v1184 = vsel %vm1137, %v1076, 0
      %vm1186 = vcmask 1043456
      %v1188 = vsel %vm1186, %v1093, 0
      %v1191 = vsel %vm1186, %v1094, 0
      %v1194 = vsel %vm1186, %v1095, 0
      %v1197 = vsel %vm1186, %v1096, 0
      %v1200 = vsel %vm1186, %v1097, 0
      %v1203 = vsel %vm1186, %v1098, 0
      %v1206 = vsel %vm1186, %v1099, 0
      %1208 = vmatprep.subr.mxu0 %v1080
      %1209 = vmatpush1.msra.mxu0 %v1079
      %1210 = vmatprep.subr.mxu0 %v1087
      %1211 = vmatpush1.msra.mxu0 %v1086
      %1212 = vmatprep.subr.mxu0 %v1191
      %1213 = vmatpush1.msra.mxu0 %v1188
      %1214 = vmatprep.subr.mxu0 0.0
      %1215 = vmatpush1.msra.mxu0 0.0
      %1216 = vmatprep.subr.mxu0 0.0
      %1217 = vmatpush1.msra.mxu0 0.0
      %1218 = vmatprep.subr.mxu0 0.0
      %1219 = vmatpush1.msra.mxu0 0.0
      %1220 = vmatprep.subr.mxu0 0.0
      %1221 = vmatpush1.msra.mxu0 0.0
      %1222 = vmatprep.subr.mxu0 0.0
      %1223 = vmatpush1.msra.mxu0 0.0
      %1224 = vmatprep.subr.mxu0 0.0
      %1225 = vmatpush1.msra.mxu0 0.0
      %1226 = vmatprep.subr.mxu0 0.0
      %1227 = vmatpush1.msra.mxu0 0.0
      %1228 = vmatprep.subr.mxu0 0.0
      %1229 = vmatpush1.msra.mxu0 0.0
      %1230 = vmatprep.subr.mxu0 0.0
      %1231 = vmatpush1.msra.mxu0 0.0
      %1232 = vmatprep.subr.mxu0 0.0
      %1233 = vmatpush1.msra.mxu0 0.0
      %1234 = vmatprep.subr.mxu0 0.0
      %1235 = vmatpush1.msra.mxu0 0.0
      %1236 = vmatprep.subr.mxu0 0.0
      %1237 = vmatpush1.msra.mxu0 0.0
      %1238 = vmatprep.subr.mxu0 0.0
      %1239 = vmatpush1.msra.mxu0 0.0
      %1240 = vmatprep.subr.mxu0 0.0
      %1241 = vmatpush1.msra.mxu0 0.0
      %1242 = vmatprep.subr.mxu0 0.0
      %1243 = vmatpush1.msra.mxu0 0.0
      %1244 = vmatprep.subr.mxu0 0.0
      %1245 = vmatpush1.msra.mxu0 0.0
      %1246 = vmatprep.subr.mxu0 0.0
      %1247 = vmatpush1.msra.mxu0 0.0
      %1248 = vmatprep.subr.mxu0 0.0
      %1249 = vmatpush1.msra.mxu0 0.0
      %1250 = vmatprep.subr.mxu0 0.0
      %1251 = vmatpush1.msra.mxu0 0.0
      %1252 = vmatprep.subr.mxu0 0.0
      %1253 = vmatpush1.msra.mxu0 0.0
      %1254 = vmatprep.subr.mxu0 0.0
      %1255 = vmatpush1.msra.mxu0 0.0
      %1256 = vmatprep.subr.mxu0 0.0
      %1257 = vmatpush1.msra.mxu0 0.0
      %1258 = vmatprep.subr.mxu0 0.0
      %1259 = vmatpush1.msra.mxu0 0.0
      %1260 = vmatprep.subr.mxu0 0.0
      %1261 = vmatpush1.msra.mxu0 0.0
      %1262 = vmatprep.subr.mxu0 0.0
      %1263 = vmatpush1.msra.mxu0 0.0
      %1264 = vmatprep.subr.mxu0 0.0
      %1265 = vmatpush1.msra.mxu0 0.0
      %1266 = vmatprep.subr.mxu0 0.0
      %1267 = vmatpush1.msra.mxu0 0.0
      %1268 = vmatprep.subr.mxu0 0.0
      %1269 = vmatpush1.msra.mxu0 0.0
      %1270 = vmatprep.subr.mxu0 0.0
      %1271 = vmatpush1.msra.mxu0 0.0
      %1272 = vmatprep.mubr.f32.mxu0 0.0
      %1273 = vmatmul.mubr.f32.gmra.mrb[0].mxu0 %v1139
      %v1274 = vpop.f32.mrb[0].mxu0
      %v1275 = vadd.f32 %v1105, %v1274
      %v1276 = vpop.f32.mrb[0].mxu0
      %v1277 = vadd.f32 %v1109, %v1276
      %1278 = vmatprep.mubr.f32.mxu0 0.0
      %1279 = vmatmul.mubr.f32.gmra.mrb[0].mxu0 %v1142
      %v1280 = vpop.f32.mrb[0].mxu0
      %v1281 = vadd.f32 %v1105, %v1280
      %v1282 = vpop.f32.mrb[0].mxu0
      %v1283 = vadd.f32 %v1109, %v1282
      %1284 = vmatprep.mubr.f32.mxu0 0.0
      %1285 = vmatmul.mubr.f32.gmra.mrb[0].mxu0 %v1145
      %v1286 = vpop.f32.mrb[0].mxu0
      %v1287 = vadd.f32 %v1105, %v1286
      %v1288 = vpop.f32.mrb[0].mxu0
      %v1289 = vadd.f32 %v1109, %v1288
      %1290 = vmatprep.mubr.f32.mxu0 0.0
      %1291 = vmatmul.mubr.f32.gmra.mrb[0].mxu0 %v1148
      %v1292 = vpop.f32.mrb[0].mxu0
      %v1293 = vadd.f32 %v1105, %v1292
      %v1294 = vpop.f32.mrb[0].mxu0
      %v1295 = vadd.f32 %v1109, %v1294
      %1296 = vmatprep.mubr.f32.mxu0 0.0
      %1297 = vmatmul.mubr.f32.gmra.mrb[0].mxu0 %v1151
      %v1298 = vpop.f32.mrb[0].mxu0
      %v1299 = vadd.f32 %v1105, %v1298
      %v1300 = vpop.f32.mrb[0].mxu0
      %v1301 = vadd.f32 %v1109, %v1300
      %1302 = vmatprep.mubr.f32.mxu0 0.0
      %1303 = vmatmul.mubr.f32.gmra.mrb[0].mxu0 %v1154
      %v1304 = vpop.f32.mrb[0].mxu0
      %v1305 = vadd.f32 %v1105, %v1304
      %v1306 = vpop.f32.mrb[0].mxu0
      %v1307 = vadd.f32 %v1109, %v1306
      %1308 = vmatprep.mubr.f32.mxu0 0.0
      %1309 = vmatmul.mubr.f32.gmra.mrb[0].mxu0 %v1157
      %v1310 = vpop.f32.mrb[0].mxu0
      %v1311 = vadd.f32 %v1105, %v1310
      %v1312 = vpop.f32.mrb[0].mxu0
      %v1313 = vadd.f32 %v1109, %v1312
      %1314 = vmatprep.mubr.f32.mxu0 0.0
      %1315 = vmatmul.mubr.f32.gmra.mrb[0].mxu0 %v1160
      %v1316 = vpop.f32.mrb[0].mxu0
      %v1317 = vadd.f32 %v1105, %v1316
      %v1318 = vpop.f32.mrb[0].mxu0
      %v1319 = vadd.f32 %v1109, %v1318
      %1320 = vmatprep.mubr.f32.mxu0 0.0
      %1321 = vmatmul.mubr.f32.gmra.mrb[0].mxu0 %v1163
      %v1322 = vpop.f32.mrb[0].mxu0
      %v1323 = vadd.f32 %v1105, %v1322
      %v1324 = vpop.f32.mrb[0].mxu0
      %v1325 = vadd.f32 %v1109, %v1324
      %1326 = vmatprep.mubr.f32.mxu0 0.0
      %1327 = vmatmul.mubr.f32.gmra.mrb[0].mxu0 %v1166
      %v1328 = vpop.f32.mrb[0].mxu0
      %v1329 = vadd.f32 %v1105, %v1328
      %v1330 = vpop.f32.mrb[0].mxu0
      %v1331 = vadd.f32 %v1109, %v1330
      %1332 = vmatprep.mubr.f32.mxu0 0.0
      %1333 = vmatmul.mubr.f32.gmra.mrb[0].mxu0 %v1169
      %v1334 = vpop.f32.mrb[0].mxu0
      %v1335 = vadd.f32 %v1105, %v1334
      %v1336 = vpop.f32.mrb[0].mxu0
      %v1337 = vadd.f32 %v1109, %v1336
      %1338 = vmatprep.mubr.f32.mxu0 0.0
      %1339 = vmatmul.mubr.f32.gmra.mrb[0].mxu0 %v1172
      %v1340 = vpop.f32.mrb[0].mxu0
      %v1341 = vadd.f32 %v1105, %v1340
      %v1342 = vpop.f32.mrb[0].mxu0
      %v1343 = vadd.f32 %v1109, %v1342
      %1344 = vmatprep.mubr.f32.mxu0 0.0
      %1345 = vmatmul.mubr.f32.gmra.mrb[0].mxu0 %v1175
      %v1346 = vpop.f32.mrb[0].mxu0
      %v1347 = vadd.f32 %v1105, %v1346
      %v1348 = vpop.f32.mrb[0].mxu0
      %v1349 = vadd.f32 %v1109, %v1348
      %1350 = vmatprep.mubr.f32.mxu0 0.0
      %1351 = vmatmul.mubr.f32.gmra.mrb[0].mxu0 %v1178
      %v1352 = vpop.f32.mrb[0].mxu0
      %v1353 = vadd.f32 %v1105, %v1352
      %v1354 = vpop.f32.mrb[0].mxu0
      %v1355 = vadd.f32 %v1109, %v1354
      %1356 = vmatprep.mubr.f32.mxu0 0.0
      %1357 = vmatmul.mubr.f32.gmra.mrb[0].mxu0 %v1181
      %v1358 = vpop.f32.mrb[0].mxu0
      %v1359 = vadd.f32 %v1105, %v1358
      %v1360 = vpop.f32.mrb[0].mxu0
      %v1361 = vadd.f32 %v1109, %v1360
      %1362 = vmatprep.mubr.f32.mxu0 0.0
      %1363 = vmatmul.mubr.f32.gmra.mrb[0].mxu0 %v1184
      %v1364 = vpop.f32.mrb[0].mxu0
      %v1365 = vadd.f32 %v1105, %v1364
      %v1366 = vpop.f32.mrb[0].mxu0
      %v1367 = vadd.f32 %v1109, %v1366
      %1368 = vdwg.mxu0
      %1369 = vmatprep.subr.mxu0 %v1082
      %1370 = vmatpush1.msra.mxu0 %v1081
      %1371 = vmatprep.subr.mxu0 %v1089
      %1372 = vmatpush1.msra.mxu0 %v1088
      %1373 = vmatprep.subr.mxu0 %v1197
      %1374 = vmatpush1.msra.mxu0 %v1194
      %1375 = vmatprep.subr.mxu0 0.0
      %1376 = vmatpush1.msra.mxu0 0.0
      %1377 = vmatprep.subr.mxu0 0.0
      %1378 = vmatpush1.msra.mxu0 0.0
      %1379 = vmatprep.subr.mxu0 0.0
      %1380 = vmatpush1.msra.mxu0 0.0
      %1381 = vmatprep.subr.mxu0 0.0
      %1382 = vmatpush1.msra.mxu0 0.0
      %1383 = vmatprep.subr.mxu0 0.0
      %1384 = vmatpush1.msra.mxu0 0.0
      %1385 = vmatprep.subr.mxu0 0.0
      %1386 = vmatpush1.msra.mxu0 0.0
      %1387 = vmatprep.subr.mxu0 0.0
      %1388 = vmatpush1.msra.mxu0 0.0
      %1389 = vmatprep.subr.mxu0 0.0
      %1390 = vmatpush1.msra.mxu0 0.0
      %1391 = vmatprep.subr.mxu0 0.0
      %1392 = vmatpush1.msra.mxu0 0.0
      %1393 = vmatprep.subr.mxu0 0.0
      %1394 = vmatpush1.msra.mxu0 0.0
      %1395 = vmatprep.subr.mxu0 0.0
      %1396 = vmatpush1.msra.mxu0 0.0
      %1397 = vmatprep.subr.mxu0 0.0
      %1398 = vmatpush1.msra.mxu0 0.0
      %1399 = vmatprep.subr.mxu0 0.0
      %1400 = vmatpush1.msra.mxu0 0.0
      %1401 = vmatprep.subr.mxu0 0.0
      %1402 = vmatpush1.msra.mxu0 0.0
      %1403 = vmatprep.subr.mxu0 0.0
      %1404 = vmatpush1.msra.mxu0 0.0
      %1405 = vmatprep.subr.mxu0 0.0
      %1406 = vmatpush1.msra.mxu0 0.0
      %1407 = vmatprep.subr.mxu0 0.0
      %1408 = vmatpush1.msra.mxu0 0.0
      %1409 = vmatprep.subr.mxu0 0.0
      %1410 = vmatpush1.msra.mxu0 0.0
      %1411 = vmatprep.subr.mxu0 0.0
      %1412 = vmatpush1.msra.mxu0 0.0
      %1413 = vmatprep.subr.mxu0 0.0
      %1414 = vmatpush1.msra.mxu0 0.0
      %1415 = vmatprep.subr.mxu0 0.0
      %1416 = vmatpush1.msra.mxu0 0.0
      %1417 = vmatprep.subr.mxu0 0.0
      %1418 = vmatpush1.msra.mxu0 0.0
      %1419 = vmatprep.subr.mxu0 0.0
      %1420 = vmatpush1.msra.mxu0 0.0
      %1421 = vmatprep.subr.mxu0 0.0
      %1422 = vmatpush1.msra.mxu0 0.0
      %1423 = vmatprep.subr.mxu0 0.0
      %1424 = vmatpush1.msra.mxu0 0.0
      %1425 = vmatprep.subr.mxu0 0.0
      %1426 = vmatpush1.msra.mxu0 0.0
      %1427 = vmatprep.subr.mxu0 0.0
      %1428 = vmatpush1.msra.mxu0 0.0
      %1429 = vmatprep.subr.mxu0 0.0
      %1430 = vmatpush1.msra.mxu0 0.0
      %1431 = vmatprep.subr.mxu0 0.0
      %1432 = vmatpush1.msra.mxu0 0.0
      %1433 = vmatprep.mubr.f32.mxu0 0.0
      %1434 = vmatmul.mubr.f32.gmra.mrb[0].mxu0 %v1139
      %v1435 = vpop.f32.mrb[0].mxu0
      %v1436 = vadd.f32 %v1113, %v1435
      %v1437 = vpop.f32.mrb[0].mxu0
      %v1438 = vadd.f32 %v1117, %v1437
      %1439 = vmatprep.mubr.f32.mxu0 0.0
      %1440 = vmatmul.mubr.f32.gmra.mrb[0].mxu0 %v1142
      %v1441 = vpop.f32.mrb[0].mxu0
      %v1442 = vadd.f32 %v1113, %v1441
      %v1443 = vpop.f32.mrb[0].mxu0
      %v1444 = vadd.f32 %v1117, %v1443
      %1445 = vmatprep.mubr.f32.mxu0 0.0
      %1446 = vmatmul.mubr.f32.gmra.mrb[0].mxu0 %v1145
      %v1447 = vpop.f32.mrb[0].mxu0
      %v1448 = vadd.f32 %v1113, %v1447
      %v1449 = vpop.f32.mrb[0].mxu0
      %v1450 = vadd.f32 %v1117, %v1449
      %1451 = vmatprep.mubr.f32.mxu0 0.0
      %1452 = vmatmul.mubr.f32.gmra.mrb[0].mxu0 %v1148
      %v1453 = vpop.f32.mrb[0].mxu0
      %v1454 = vadd.f32 %v1113, %v1453
      %v1455 = vpop.f32.mrb[0].mxu0
      %v1456 = vadd.f32 %v1117, %v1455
      %1457 = vmatprep.mubr.f32.mxu0 0.0
      %1458 = vmatmul.mubr.f32.gmra.mrb[0].mxu0 %v1151
      %v1459 = vpop.f32.mrb[0].mxu0
      %v1460 = vadd.f32 %v1113, %v1459
      %v1461 = vpop.f32.mrb[0].mxu0
      %v1462 = vadd.f32 %v1117, %v1461
      %1463 = vmatprep.mubr.f32.mxu0 0.0
      %1464 = vmatmul.mubr.f32.gmra.mrb[0].mxu0 %v1154
      %v1465 = vpop.f32.mrb[0].mxu0
      %v1466 = vadd.f32 %v1113, %v1465
      %v1467 = vpop.f32.mrb[0].mxu0
      %v1468 = vadd.f32 %v1117, %v1467
      %1469 = vmatprep.mubr.f32.mxu0 0.0
      %1470 = vmatmul.mubr.f32.gmra.mrb[0].mxu0 %v1157
      %v1471 = vpop.f32.mrb[0].mxu0
      %v1472 = vadd.f32 %v1113, %v1471
      %v1473 = vpop.f32.mrb[0].mxu0
      %v1474 = vadd.f32 %v1117, %v1473
      %1475 = vmatprep.mubr.f32.mxu0 0.0
      %1476 = vmatmul.mubr.f32.gmra.mrb[0].mxu0 %v1160
      %v1477 = vpop.f32.mrb[0].mxu0
      %v1478 = vadd.f32 %v1113, %v1477
      %v1479 = vpop.f32.mrb[0].mxu0
      %v1480 = vadd.f32 %v1117, %v1479
      %1481 = vmatprep.mubr.f32.mxu0 0.0
      %1482 = vmatmul.mubr.f32.gmra.mrb[0].mxu0 %v1163
      %v1483 = vpop.f32.mrb[0].mxu0
      %v1484 = vadd.f32 %v1113, %v1483
      %v1485 = vpop.f32.mrb[0].mxu0
      %v1486 = vadd.f32 %v1117, %v1485
      %1487 = vmatprep.mubr.f32.mxu0 0.0
      %1488 = vmatmul.mubr.f32.gmra.mrb[0].mxu0 %v1166
      %v1489 = vpop.f32.mrb[0].mxu0
      %v1490 = vadd.f32 %v1113, %v1489
      %v1491 = vpop.f32.mrb[0].mxu0
      %v1492 = vadd.f32 %v1117, %v1491
      %1493 = vmatprep.mubr.f32.mxu0 0.0
      %1494 = vmatmul.mubr.f32.gmra.mrb[0].mxu0 %v1169
      %v1495 = vpop.f32.mrb[0].mxu0
      %v1496 = vadd.f32 %v1113, %v1495
      %v1497 = vpop.f32.mrb[0].mxu0
      %v1498 = vadd.f32 %v1117, %v1497
      %1499 = vmatprep.mubr.f32.mxu0 0.0
      %1500 = vmatmul.mubr.f32.gmra.mrb[0].mxu0 %v1172
      %v1501 = vpop.f32.mrb[0].mxu0
      %v1502 = vadd.f32 %v1113, %v1501
      %v1503 = vpop.f32.mrb[0].mxu0
      %v1504 = vadd.f32 %v1117, %v1503
      %1505 = vmatprep.mubr.f32.mxu0 0.0
      %1506 = vmatmul.mubr.f32.gmra.mrb[0].mxu0 %v1175
      %v1507 = vpop.f32.mrb[0].mxu0
      %v1508 = vadd.f32 %v1113, %v1507
      %v1509 = vpop.f32.mrb[0].mxu0
      %v1510 = vadd.f32 %v1117, %v1509
      %1511 = vmatprep.mubr.f32.mxu0 0.0
      %1512 = vmatmul.mubr.f32.gmra.mrb[0].mxu0 %v1178
      %v1513 = vpop.f32.mrb[0].mxu0
      %v1514 = vadd.f32 %v1113, %v1513
      %v1515 = vpop.f32.mrb[0].mxu0
      %v1516 = vadd.f32 %v1117, %v1515
      %1517 = vmatprep.mubr.f32.mxu0 0.0
      %1518 = vmatmul.mubr.f32.gmra.mrb[0].mxu0 %v1181
      %v1519 = vpop.f32.mrb[0].mxu0
      %v1520 = vadd.f32 %v1113, %v1519
      %v1521 = vpop.f32.mrb[0].mxu0
      %v1522 = vadd.f32 %v1117, %v1521
      %1523 = vmatprep.mubr.f32.mxu0 0.0
      %1524 = vmatmul.mubr.f32.gmra.mrb[0].mxu0 %v1184
      %v1525 = vpop.f32.mrb[0].mxu0
      %v1526 = vadd.f32 %v1113, %v1525
      %v1527 = vpop.f32.mrb[0].mxu0
      %v1528 = vadd.f32 %v1117, %v1527
      %1529 = vdwg.mxu0
      %1530 = vmatprep.subr.mxu0 %v1084
      %1531 = vmatpush1.msra.mxu0 %v1083
      %1532 = vmatprep.subr.mxu0 %v1091
      %1533 = vmatpush1.msra.mxu0 %v1090
      %1534 = vmatprep.subr.mxu0 %v1203
      %1535 = vmatpush1.msra.mxu0 %v1200
      %1536 = vmatprep.subr.mxu0 0.0
      %1537 = vmatpush1.msra.mxu0 0.0
      %1538 = vmatprep.subr.mxu0 0.0
      %1539 = vmatpush1.msra.mxu0 0.0
      %1540 = vmatprep.subr.mxu0 0.0
      %1541 = vmatpush1.msra.mxu0 0.0
      %1542 = vmatprep.subr.mxu0 0.0
      %1543 = vmatpush1.msra.mxu0 0.0
      %1544 = vmatprep.subr.mxu0 0.0
      %1545 = vmatpush1.msra.mxu0 0.0
      %1546 = vmatprep.subr.mxu0 0.0
      %1547 = vmatpush1.msra.mxu0 0.0
      %1548 = vmatprep.subr.mxu0 0.0
      %1549 = vmatpush1.msra.mxu0 0.0
      %1550 = vmatprep.subr.mxu0 0.0
      %1551 = vmatpush1.msra.mxu0 0.0
      %1552 = vmatprep.subr.mxu0 0.0
      %1553 = vmatpush1.msra.mxu0 0.0
      %1554 = vmatprep.subr.mxu0 0.0
      %1555 = vmatpush1.msra.mxu0 0.0
      %1556 = vmatprep.subr.mxu0 0.0
      %1557 = vmatpush1.msra.mxu0 0.0
      %1558 = vmatprep.subr.mxu0 0.0
      %1559 = vmatpush1.msra.mxu0 0.0
      %1560 = vmatprep.subr.mxu0 0.0
      %1561 = vmatpush1.msra.mxu0 0.0
      %1562 = vmatprep.subr.mxu0 0.0
      %1563 = vmatpush1.msra.mxu0 0.0
      %1564 = vmatprep.subr.mxu0 0.0
      %1565 = vmatpush1.msra.mxu0 0.0
      %1566 = vmatprep.subr.mxu0 0.0
      %1567 = vmatpush1.msra.mxu0 0.0
      %1568 = vmatprep.subr.mxu0 0.0
      %1569 = vmatpush1.msra.mxu0 0.0
      %1570 = vmatprep.subr.mxu0 0.0
      %1571 = vmatpush1.msra.mxu0 0.0
      %1572 = vmatprep.subr.mxu0 0.0
      %1573 = vmatpush1.msra.mxu0 0.0
      %1574 = vmatprep.subr.mxu0 0.0
      %1575 = vmatpush1.msra.mxu0 0.0
      %1576 = vmatprep.subr.mxu0 0.0
      %1577 = vmatpush1.msra.mxu0 0.0
      %1578 = vmatprep.subr.mxu0 0.0
      %1579 = vmatpush1.msra.mxu0 0.0
      %1580 = vmatprep.subr.mxu0 0.0
      %1581 = vmatpush1.msra.mxu0 0.0
      %1582 = vmatprep.subr.mxu0 0.0
      %1583 = vmatpush1.msra.mxu0 0.0
      %1584 = vmatprep.subr.mxu0 0.0
      %1585 = vmatpush1.msra.mxu0 0.0
      %1586 = vmatprep.subr.mxu0 0.0
      %1587 = vmatpush1.msra.mxu0 0.0
      %1588 = vmatprep.subr.mxu0 0.0
      %1589 = vmatpush1.msra.mxu0 0.0
      %1590 = vmatprep.subr.mxu0 0.0
      %1591 = vmatpush1.msra.mxu0 0.0
      %1592 = vmatprep.subr.mxu0 0.0
      %1593 = vmatpush1.msra.mxu0 0.0
      %1594 = vmatprep.mubr.f32.mxu0 0.0
      %1595 = vmatmul.mubr.f32.gmra.mrb[0].mxu0 %v1139
      %v1596 = vpop.f32.mrb[0].mxu0
      %v1597 = vadd.f32 %v1121, %v1596
      %v1598 = vpop.f32.mrb[0].mxu0
      %v1599 = vadd.f32 %v1125, %v1598
      %1600 = vmatprep.mubr.f32.mxu0 0.0
      %1601 = vmatmul.mubr.f32.gmra.mrb[0].mxu0 %v1142
      %v1602 = vpop.f32.mrb[0].mxu0
      %v1603 = vadd.f32 %v1121, %v1602
      %v1604 = vpop.f32.mrb[0].mxu0
      %v1605 = vadd.f32 %v1125, %v1604
      %1606 = vmatprep.mubr.f32.mxu0 0.0
      %1607 = vmatmul.mubr.f32.gmra.mrb[0].mxu0 %v1145
      %v1608 = vpop.f32.mrb[0].mxu0
      %v1609 = vadd.f32 %v1121, %v1608
      %v1610 = vpop.f32.mrb[0].mxu0
      %v1611 = vadd.f32 %v1125, %v1610
      %1612 = vmatprep.mubr.f32.mxu0 0.0
      %1613 = vmatmul.mubr.f32.gmra.mrb[0].mxu0 %v1148
      %v1614 = vpop.f32.mrb[0].mxu0
      %v1615 = vadd.f32 %v1121, %v1614
      %v1616 = vpop.f32.mrb[0].mxu0
      %v1617 = vadd.f32 %v1125, %v1616
      %1618 = vmatprep.mubr.f32.mxu0 0.0
      %1619 = vmatmul.mubr.f32.gmra.mrb[0].mxu0 %v1151
      %v1620 = vpop.f32.mrb[0].mxu0
      %v1621 = vadd.f32 %v1121, %v1620
      %v1622 = vpop.f32.mrb[0].mxu0
      %v1623 = vadd.f32 %v1125, %v1622
      %1624 = vmatprep.mubr.f32.mxu0 0.0
      %1625 = vmatmul.mubr.f32.gmra.mrb[0].mxu0 %v1154
      %v1626 = vpop.f32.mrb[0].mxu0
      %v1627 = vadd.f32 %v1121, %v1626
      %v1628 = vpop.f32.mrb[0].mxu0
      %v1629 = vadd.f32 %v1125, %v1628
      %1630 = vmatprep.mubr.f32.mxu0 0.0
      %1631 = vmatmul.mubr.f32.gmra.mrb[0].mxu0 %v1157
      %v1632 = vpop.f32.mrb[0].mxu0
      %v1633 = vadd.f32 %v1121, %v1632
      %v1634 = vpop.f32.mrb[0].mxu0
      %v1635 = vadd.f32 %v1125, %v1634
      %1636 = vmatprep.mubr.f32.mxu0 0.0
      %1637 = vmatmul.mubr.f32.gmra.mrb[0].mxu0 %v1160
      %v1638 = vpop.f32.mrb[0].mxu0
      %v1639 = vadd.f32 %v1121, %v1638
      %v1640 = vpop.f32.mrb[0].mxu0
      %v1641 = vadd.f32 %v1125, %v1640
      %1642 = vmatprep.mubr.f32.mxu0 0.0
      %1643 = vmatmul.mubr.f32.gmra.mrb[0].mxu0 %v1163
      %v1644 = vpop.f32.mrb[0].mxu0
      %v1645 = vadd.f32 %v1121, %v1644
      %v1646 = vpop.f32.mrb[0].mxu0
      %v1647 = vadd.f32 %v1125, %v1646
      %1648 = vmatprep.mubr.f32.mxu0 0.0
      %1649 = vmatmul.mubr.f32.gmra.mrb[0].mxu0 %v1166
      %v1650 = vpop.f32.mrb[0].mxu0
      %v1651 = vadd.f32 %v1121, %v1650
      %v1652 = vpop.f32.mrb[0].mxu0
      %v1653 = vadd.f32 %v1125, %v1652
      %1654 = vmatprep.mubr.f32.mxu0 0.0
      %1655 = vmatmul.mubr.f32.gmra.mrb[0].mxu0 %v1169
      %v1656 = vpop.f32.mrb[0].mxu0
      %v1657 = vadd.f32 %v1121, %v1656
      %v1658 = vpop.f32.mrb[0].mxu0
      %v1659 = vadd.f32 %v1125, %v1658
      %1660 = vmatprep.mubr.f32.mxu0 0.0
      %1661 = vmatmul.mubr.f32.gmra.mrb[0].mxu0 %v1172
      %v1662 = vpop.f32.mrb[0].mxu0
      %v1663 = vadd.f32 %v1121, %v1662
      %v1664 = vpop.f32.mrb[0].mxu0
      %v1665 = vadd.f32 %v1125, %v1664
      %1666 = vmatprep.mubr.f32.mxu0 0.0
      %1667 = vmatmul.mubr.f32.gmra.mrb[0].mxu0 %v1175
      %v1668 = vpop.f32.mrb[0].mxu0
      %v1669 = vadd.f32 %v1121, %v1668
      %v1670 = vpop.f32.mrb[0].mxu0
      %v1671 = vadd.f32 %v1125, %v1670
      %1672 = vmatprep.mubr.f32.mxu0 0.0
      %1673 = vmatmul.mubr.f32.gmra.mrb[0].mxu0 %v1178
      %v1674 = vpop.f32.mrb[0].mxu0
      %v1675 = vadd.f32 %v1121, %v1674
      %v1676 = vpop.f32.mrb[0].mxu0
      %v1677 = vadd.f32 %v1125, %v1676
      %1678 = vmatprep.mubr.f32.mxu0 0.0
      %1679 = vmatmul.mubr.f32.gmra.mrb[0].mxu0 %v1181
      %v1680 = vpop.f32.mrb[0].mxu0
      %v1681 = vadd.f32 %v1121, %v1680
      %v1682 = vpop.f32.mrb[0].mxu0
      %v1683 = vadd.f32 %v1125, %v1682
      %1684 = vmatprep.mubr.f32.mxu0 0.0
      %1685 = vmatmul.mubr.f32.gmra.mrb[0].mxu0 %v1184
      %v1686 = vpop.f32.mrb[0].mxu0
      %v1687 = vadd.f32 %v1121, %v1686
      %v1688 = vpop.f32.mrb[0].mxu0
      %v1689 = vadd.f32 %v1125, %v1688
      %1690 = vdwg.mxu0
      %1691 = vmatprep.subr.mxu0 0.0
      %1692 = vmatpush1.msra.mxu0 %v1085
      %1693 = vmatprep.subr.mxu0 0.0
      %1694 = vmatpush1.msra.mxu0 %v1092
      %1695 = vmatprep.subr.mxu0 0.0
      %1696 = vmatpush1.msra.mxu0 %v1206
      %1697 = vmatprep.subr.mxu0 0.0
      %1698 = vmatpush1.msra.mxu0 0.0
      %1699 = vmatprep.subr.mxu0 0.0
      %1700 = vmatpush1.msra.mxu0 0.0
      %1701 = vmatprep.subr.mxu0 0.0
      %1702 = vmatpush1.msra.mxu0 0.0
      %1703 = vmatprep.subr.mxu0 0.0
      %1704 = vmatpush1.msra.mxu0 0.0
      %1705 = vmatprep.subr.mxu0 0.0
      %1706 = vmatpush1.msra.mxu0 0.0
      %1707 = vmatprep.subr.mxu0 0.0
      %1708 = vmatpush1.msra.mxu0 0.0
      %1709 = vmatprep.subr.mxu0 0.0
      %1710 = vmatpush1.msra.mxu0 0.0
      %1711 = vmatprep.subr.mxu0 0.0
      %1712 = vmatpush1.msra.mxu0 0.0
      %1713 = vmatprep.subr.mxu0 0.0
      %1714 = vmatpush1.msra.mxu0 0.0
      %1715 = vmatprep.subr.mxu0 0.0
      %1716 = vmatpush1.msra.mxu0 0.0
      %1717 = vmatprep.subr.mxu0 0.0
      %1718 = vmatpush1.msra.mxu0 0.0
      %1719 = vmatprep.subr.mxu0 0.0
      %1720 = vmatpush1.msra.mxu0 0.0
      %1721 = vmatprep.subr.mxu0 0.0
      %1722 = vmatpush1.msra.mxu0 0.0
      %1723 = vmatprep.subr.mxu0 0.0
      %1724 = vmatpush1.msra.mxu0 0.0
      %1725 = vmatprep.subr.mxu0 0.0
      %1726 = vmatpush1.msra.mxu0 0.0
      %1727 = vmatprep.subr.mxu0 0.0
      %1728 = vmatpush1.msra.mxu0 0.0
      %1729 = vmatprep.subr.mxu0 0.0
      %1730 = vmatpush1.msra.mxu0 0.0
      %1731 = vmatprep.subr.mxu0 0.0
      %1732 = vmatpush1.msra.mxu0 0.0
      %1733 = vmatprep.subr.mxu0 0.0
      %1734 = vmatpush1.msra.mxu0 0.0
      %1735 = vmatprep.subr.mxu0 0.0
      %1736 = vmatpush1.msra.mxu0 0.0
      %1737 = vmatprep.subr.mxu0 0.0
      %1738 = vmatpush1.msra.mxu0 0.0
      %1739 = vmatprep.subr.mxu0 0.0
      %1740 = vmatpush1.msra.mxu0 0.0
      %1741 = vmatprep.subr.mxu0 0.0
      %1742 = vmatpush1.msra.mxu0 0.0
      %1743 = vmatprep.subr.mxu0 0.0
      %1744 = vmatpush1.msra.mxu0 0.0
      %1745 = vmatprep.subr.mxu0 0.0
      %1746 = vmatpush1.msra.mxu0 0.0
      %1747 = vmatprep.subr.mxu0 0.0
      %1748 = vmatpush1.msra.mxu0 0.0
      %1749 = vmatprep.subr.mxu0 0.0
      %1750 = vmatpush1.msra.mxu0 0.0
      %1751 = vmatprep.subr.mxu0 0.0
      %1752 = vmatpush1.msra.mxu0 0.0
      %1753 = vmatprep.subr.mxu0 0.0
      %1754 = vmatpush1.msra.mxu0 0.0
      %1755 = vmatprep.mubr.f32.mxu0 0.0
      %1756 = vmatmul.mubr.f32.gmra.mrb[0].mxu0 %v1139
      %v1757 = vpop.f32.mrb[0].mxu0
      %v1758 = vadd.f32 %v1129, %v1757
      %v1759 = vpop.f32.mrb[0].mxu0
      %1760 = vmatprep.mubr.f32.mxu0 0.0
      %1761 = vmatmul.mubr.f32.gmra.mrb[0].mxu0 %v1142
      %v1762 = vpop.f32.mrb[0].mxu0
      %v1763 = vadd.f32 %v1129, %v1762
      %v1764 = vpop.f32.mrb[0].mxu0
      %1765 = vmatprep.mubr.f32.mxu0 0.0
      %1766 = vmatmul.mubr.f32.gmra.mrb[0].mxu0 %v1145
      %v1767 = vpop.f32.mrb[0].mxu0
      %v1768 = vadd.f32 %v1129, %v1767
      %v1769 = vpop.f32.mrb[0].mxu0
      %1770 = vmatprep.mubr.f32.mxu0 0.0
      %1771 = vmatmul.mubr.f32.gmra.mrb[0].mxu0 %v1148
      %v1772 = vpop.f32.mrb[0].mxu0
      %v1773 = vadd.f32 %v1129, %v1772
      %v1774 = vpop.f32.mrb[0].mxu0
      %1775 = vmatprep.mubr.f32.mxu0 0.0
      %1776 = vmatmul.mubr.f32.gmra.mrb[0].mxu0 %v1151
      %v1777 = vpop.f32.mrb[0].mxu0
      %v1778 = vadd.f32 %v1129, %v1777
      %v1779 = vpop.f32.mrb[0].mxu0
      %1780 = vmatprep.mubr.f32.mxu0 0.0
      %1781 = vmatmul.mubr.f32.gmra.mrb[0].mxu0 %v1154
      %v1782 = vpop.f32.mrb[0].mxu0
      %v1783 = vadd.f32 %v1129, %v1782
      %v1784 = vpop.f32.mrb[0].mxu0
      %1785 = vmatprep.mubr.f32.mxu0 0.0
      %1786 = vmatmul.mubr.f32.gmra.mrb[0].mxu0 %v1157
      %v1787 = vpop.f32.mrb[0].mxu0
      %v1788 = vadd.f32 %v1129, %v1787
      %v1789 = vpop.f32.mrb[0].mxu0
      %1790 = vmatprep.mubr.f32.mxu0 0.0
      %1791 = vmatmul.mubr.f32.gmra.mrb[0].mxu0 %v1160
      %v1792 = vpop.f32.mrb[0].mxu0
      %v1793 = vadd.f32 %v1129, %v1792
      %v1794 = vpop.f32.mrb[0].mxu0
      %1795 = vmatprep.mubr.f32.mxu0 0.0
      %1796 = vmatmul.mubr.f32.gmra.mrb[0].mxu0 %v1163
      %v1797 = vpop.f32.mrb[0].mxu0
      %v1798 = vadd.f32 %v1129, %v1797
      %v1799 = vpop.f32.mrb[0].mxu0
      %1800 = vmatprep.mubr.f32.mxu0 0.0
      %1801 = vmatmul.mubr.f32.gmra.mrb[0].mxu0 %v1166
      %v1802 = vpop.f32.mrb[0].mxu0
      %v1803 = vadd.f32 %v1129, %v1802
      %v1804 = vpop.f32.mrb[0].mxu0
      %1805 = vmatprep.mubr.f32.mxu0 0.0
      %1806 = vmatmul.mubr.f32.gmra.mrb[0].mxu0 %v1169
      %v1807 = vpop.f32.mrb[0].mxu0
      %v1808 = vadd.f32 %v1129, %v1807
      %v1809 = vpop.f32.mrb[0].mxu0
      %1810 = vmatprep.mubr.f32.mxu0 0.0
      %1811 = vmatmul.mubr.f32.gmra.mrb[0].mxu0 %v1172
      %v1812 = vpop.f32.mrb[0].mxu0
      %v1813 = vadd.f32 %v1129, %v1812
      %v1814 = vpop.f32.mrb[0].mxu0
      %1815 = vmatprep.mubr.f32.mxu0 0.0
      %1816 = vmatmul.mubr.f32.gmra.mrb[0].mxu0 %v1175
      %v1817 = vpop.f32.mrb[0].mxu0
      %v1818 = vadd.f32 %v1129, %v1817
      %v1819 = vpop.f32.mrb[0].mxu0
      %1820 = vmatprep.mubr.f32.mxu0 0.0
      %1821 = vmatmul.mubr.f32.gmra.mrb[0].mxu0 %v1178
      %v1822 = vpop.f32.mrb[0].mxu0
      %v1823 = vadd.f32 %v1129, %v1822
      %v1824 = vpop.f32.mrb[0].mxu0
      %1825 = vmatprep.mubr.f32.mxu0 0.0
      %1826 = vmatmul.mubr.f32.gmra.mrb[0].mxu0 %v1181
      %v1827 = vpop.f32.mrb[0].mxu0
      %v1828 = vadd.f32 %v1129, %v1827
      %v1829 = vpop.f32.mrb[0].mxu0
      %1830 = vmatprep.mubr.f32.mxu0 0.0
      %1831 = vmatmul.mubr.f32.gmra.mrb[0].mxu0 %v1184
      %v1832 = vpop.f32.mrb[0].mxu0
      %v1833 = vadd.f32 %v1129, %v1832
      %v1834 = vpop.f32.mrb[0].mxu0
      %1835 = vdwg.mxu0
      %1836 = vst [vmem:[%s231] sm:$0xff] %v1275
      %1837 = vst [vmem:[%s231 + $0x8] sm:$0xff] %v1277
      %1838 = vst [vmem:[%s231 + $0x10] sm:$0xff] %v1436
      %1839 = vst [vmem:[%s231 + $0x18] sm:$0xff] %v1438
      %1840 = vst [vmem:[%s231 + $0x20] sm:$0xff] %v1597
      %1841 = vst [vmem:[%s231 + $0x28] sm:$0xff] %v1599
      %1842 = vst.msk [vmem:[%s231 + $0x30] sm:$0xff] %vm450, %v1758
      %1843 = vst [vmem:[%s231 + $0x38] sm:$0xff] %v1281
      %1844 = vst [vmem:[%s231 + $0x40] sm:$0xff] %v1283
      %1845 = vst [vmem:[%s231 + $0x48] sm:$0xff] %v1442
      %1846 = vst [vmem:[%s231 + $0x50] sm:$0xff] %v1444
      %1847 = vst [vmem:[%s231 + $0x58] sm:$0xff] %v1603
      %1848 = vst [vmem:[%s231 + $0x60] sm:$0xff] %v1605
      %1849 = vst.msk [vmem:[%s231 + $0x68] sm:$0xff] %vm450, %v1763
      %1850 = vst [vmem:[%s231 + $0x70] sm:$0xff] %v1287
      %1851 = vst [vmem:[%s231 + $0x78] sm:$0xff] %v1289
      %1852 = vst [vmem:[%s231 + $0x80] sm:$0xff] %v1448
      %1853 = vst [vmem:[%s231 + $0x88] sm:$0xff] %v1450
      %1854 = vst [vmem:[%s231 + $0x90] sm:$0xff] %v1609
      %1855 = vst [vmem:[%s231 + $0x98] sm:$0xff] %v1611
      %1856 = vst.msk [vmem:[%s231 + $0xa0] sm:$0xff] %vm450, %v1768
      %1857 = vst [vmem:[%s231 + $0xa8] sm:$0xff] %v1293
      %1858 = vst [vmem:[%s231 + $0xb0] sm:$0xff] %v1295
      %1859 = vst [vmem:[%s231 + $0xb8] sm:$0xff] %v1454
      %1860 = vst [vmem:[%s231 + $0xc0] sm:$0xff] %v1456
      %1861 = vst [vmem:[%s231 + $0xc8] sm:$0xff] %v1615
      %1862 = vst [vmem:[%s231 + $0xd0] sm:$0xff] %v1617
      %1863 = vst.msk [vmem:[%s231 + $0xd8] sm:$0xff] %vm450, %v1773
      %1864 = vst [vmem:[%s231 + $0xe0] sm:$0xff] %v1299
      %1865 = vst [vmem:[%s231 + $0xe8] sm:$0xff] %v1301
      %1866 = vst [vmem:[%s231 + $0xf0] sm:$0xff] %v1460
      %1867 = vst [vmem:[%s231 + $0xf8] sm:$0xff] %v1462
      %1868 = vst [vmem:[%s231 + $0x100] sm:$0xff] %v1621
      %1869 = vst [vmem:[%s231 + $0x108] sm:$0xff] %v1623
      %1870 = vst.msk [vmem:[%s231 + $0x110] sm:$0xff] %vm450, %v1778
      %1871 = vst [vmem:[%s231 + $0x118] sm:$0xff] %v1305
      %1872 = vst [vmem:[%s231 + $0x120] sm:$0xff] %v1307
      %1873 = vst [vmem:[%s231 + $0x128] sm:$0xff] %v1466
      %1874 = vst [vmem:[%s231 + $0x130] sm:$0xff] %v1468
      %1875 = vst [vmem:[%s231 + $0x138] sm:$0xff] %v1627
      %1876 = vst [vmem:[%s231 + $0x140] sm:$0xff] %v1629
      %1877 = vst.msk [vmem:[%s231 + $0x148] sm:$0xff] %vm450, %v1783
      %1878 = vst [vmem:[%s231 + $0x150] sm:$0xff] %v1311
      %1879 = vst [vmem:[%s231 + $0x158] sm:$0xff] %v1313
      %1880 = vst [vmem:[%s231 + $0x160] sm:$0xff] %v1472
      %1881 = vst [vmem:[%s231 + $0x168] sm:$0xff] %v1474
      %1882 = vst [vmem:[%s231 + $0x170] sm:$0xff] %v1633
      %1883 = vst [vmem:[%s231 + $0x178] sm:$0xff] %v1635
      %1884 = vst.msk [vmem:[%s231 + $0x180] sm:$0xff] %vm450, %v1788
      %1885 = vst [vmem:[%s231 + $0x188] sm:$0xff] %v1317
      %1886 = vst [vmem:[%s231 + $0x190] sm:$0xff] %v1319
      %1887 = vst [vmem:[%s231 + $0x198] sm:$0xff] %v1478
      %1888 = vst [vmem:[%s231 + $0x1a0] sm:$0xff] %v1480
      %1889 = vst [vmem:[%s231 + $0x1a8] sm:$0xff] %v1639
      %1890 = vst [vmem:[%s231 + $0x1b0] sm:$0xff] %v1641
      %1891 = vst.msk [vmem:[%s231 + $0x1b8] sm:$0xff] %vm450, %v1793
      %1892 = vst [vmem:[%s231 + $0x1c0] sm:$0xff] %v1323
      %1893 = vst [vmem:[%s231 + $0x1c8] sm:$0xff] %v1325
      %1894 = vst [vmem:[%s231 + $0x1d0] sm:$0xff] %v1484
      %1895 = vst [vmem:[%s231 + $0x1d8] sm:$0xff] %v1486
      %1896 = vst [vmem:[%s231 + $0x1e0] sm:$0xff] %v1645
      %1897 = vst [vmem:[%s231 + $0x1e8] sm:$0xff] %v1647
      %1898 = vst.msk [vmem:[%s231 + $0x1f0] sm:$0xff] %vm450, %v1798
      %1899 = vst [vmem:[%s231 + $0x1f8] sm:$0xff] %v1329
      %1900 = vst [vmem:[%s231 + $0x200] sm:$0xff] %v1331
      %1901 = vst [vmem:[%s231 + $0x208] sm:$0xff] %v1490
      %1902 = vst [vmem:[%s231 + $0x210] sm:$0xff] %v1492
      %1903 = vst [vmem:[%s231 + $0x218] sm:$0xff] %v1651
      %1904 = vst [vmem:[%s231 + $0x220] sm:$0xff] %v1653
      %1905 = vst.msk [vmem:[%s231 + $0x228] sm:$0xff] %vm450, %v1803
      %1906 = vst [vmem:[%s231 + $0x230] sm:$0xff] %v1335
      %1907 = vst [vmem:[%s231 + $0x238] sm:$0xff] %v1337
      %1908 = vst [vmem:[%s231 + $0x240] sm:$0xff] %v1496
      %1909 = vst [vmem:[%s231 + $0x248] sm:$0xff] %v1498
      %1910 = vst [vmem:[%s231 + $0x250] sm:$0xff] %v1657
      %1911 = vst [vmem:[%s231 + $0x258] sm:$0xff] %v1659
      %1912 = vst.msk [vmem:[%s231 + $0x260] sm:$0xff] %vm450, %v1808
      %1913 = vst [vmem:[%s231 + $0x268] sm:$0xff] %v1341
      %1914 = vst [vmem:[%s231 + $0x270] sm:$0xff] %v1343
      %1915 = vst [vmem:[%s231 + $0x278] sm:$0xff] %v1502
      %1916 = vst [vmem:[%s231 + $0x280] sm:$0xff] %v1504
      %1917 = vst [vmem:[%s231 + $0x288] sm:$0xff] %v1663
      %1918 = vst [vmem:[%s231 + $0x290] sm:$0xff] %v1665
      %1919 = vst.msk [vmem:[%s231 + $0x298] sm:$0xff] %vm450, %v1813
      %1920 = vst [vmem:[%s231 + $0x2a0] sm:$0xff] %v1347
      %1921 = vst [vmem:[%s231 + $0x2a8] sm:$0xff] %v1349
      %1922 = vst [vmem:[%s231 + $0x2b0] sm:$0xff] %v1508
      %1923 = vst [vmem:[%s231 + $0x2b8] sm:$0xff] %v1510
      %1924 = vst [vmem:[%s231 + $0x2c0] sm:$0xff] %v1669
      %1925 = vst [vmem:[%s231 + $0x2c8] sm:$0xff] %v1671
      %1926 = vst.msk [vmem:[%s231 + $0x2d0] sm:$0xff] %vm450, %v1818
      %1927 = vst [vmem:[%s231 + $0x2d8] sm:$0xff] %v1353
      %1928 = vst [vmem:[%s231 + $0x2e0] sm:$0xff] %v1355
      %1929 = vst [vmem:[%s231 + $0x2e8] sm:$0xff] %v1514
      %1930 = vst [vmem:[%s231 + $0x2f0] sm:$0xff] %v1516
      %1931 = vst [vmem:[%s231 + $0x2f8] sm:$0xff] %v1675
      %1932 = vst [vmem:[%s231 + $0x300] sm:$0xff] %v1677
      %1933 = vst.msk [vmem:[%s231 + $0x308] sm:$0xff] %vm450, %v1823
      %1934 = vst [vmem:[%s231 + $0x310] sm:$0xff] %v1359
      %1935 = vst [vmem:[%s231 + $0x318] sm:$0xff] %v1361
      %1936 = vst [vmem:[%s231 + $0x320] sm:$0xff] %v1520
      %1937 = vst [vmem:[%s231 + $0x328] sm:$0xff] %v1522
      %1938 = vst [vmem:[%s231 + $0x330] sm:$0xff] %v1681
      %1939 = vst [vmem:[%s231 + $0x338] sm:$0xff] %v1683
      %1940 = vst.msk [vmem:[%s231 + $0x340] sm:$0xff] %vm450, %v1828
      %1941 = vst [vmem:[%s231 + $0x348] sm:$0xff] %v1365
      %1942 = vst [vmem:[%s231 + $0x350] sm:$0xff] %v1367
      %1943 = vst [vmem:[%s231 + $0x358] sm:$0xff] %v1526
      %1944 = vst [vmem:[%s231 + $0x360] sm:$0xff] %v1528
      %1945 = vst [vmem:[%s231 + $0x368] sm:$0xff] %v1687
      %1946 = vst [vmem:[%s231 + $0x370] sm:$0xff] %v1689
      %1947 = vst.msk [vmem:[%s231 + $0x378] sm:$0xff] %vm450, %v1833
      %s1948 = smul.u32 16, %s16
      %p1949 = scmp.lt.s32.totalorder %s1948, 31
      %s1950 = scalar_select %p1949, %s1948, 31
      %s1951 = smul.addr %s1950, 7
      %s1952 = smul.addr %s1951, 8
      %s1953 = scalar_lea.vmem %s5, %s1952
      // Predicated region
      $region41: #{tpu_custom_call.1} parent=39 // pred_check
        %p1954 = pneg %p144
      $region42: #{tpu_custom_call.1} parent=39 // pred_check_branch
        %1956 = sbr.rel (%p1954) target = $region44
      $region43: #{tpu_custom_call.1} parent=39 // pred_region
        %s1957 = smul.u32 16, %s16
      $region44: #{tpu_custom_call.1} parent=39 // pred_fallthru
        _
    $region40: #{tpu_custom_call.1} parent=5 // pred_fallthru
      _
    %p1958 = scmp.le.s32.totalorder 2, %s11
    // Predicated region
    $region45: #{tpu_custom_call.1} parent=5 // pred_check
      %p1959 = pneg %p1958
    $region46: #{tpu_custom_call.1} parent=5 // pred_check_branch
      %1961 = sbr.rel (%p1959) target = $region48
    $region47: #{tpu_custom_call.1} parent=5 // pred_region
      %s1962 = ssub.s32 %s11, 2
      // Predicated region
      $region49: #{tpu_custom_call.1} parent=47 // pred_check
        %p1963 = pneg %p150
      $region50: #{tpu_custom_call.1} parent=47 // pred_check_branch
        %1965 = sbr.rel (%p1963) target = $region52
      $region51: #{tpu_custom_call.1} parent=47 // pred_region
        %s1966 = smul.u32 16, %s17
        %p1967 = scmp.lt.s32.totalorder %s1966, 31
        %s1968 = scalar_select %p1967, %s1966, 31
        %s1969 = smul.addr %s1968, 7
        %s1970 = smul.addr %s1969, 8
        %s1971 = scalar_lea.vmem %s5, %s1970
      $region52: #{tpu_custom_call.1} parent=47 // pred_fallthru
        _
    $region48: #{tpu_custom_call.1} parent=5 // pred_fallthru
      _
  $region6: #{tpu_custom_call.1} parent=0 // loop_footer
    %s15 = sadd.s32 1, %s11
  $region7: #{tpu_custom_call.1} parent=0 // loop_footer_branch
    %10 = sbr.rel target = $region3
  $region8: #{tpu_custom_call.1} parent=0 // loop_exit
    _

// kernel: tpu_custom_call.1
$region0: #{tpu_custom_call.1}
  #allocation0 [shape = 'u32[]', space=smem, size = 0x4, offset = 0x4, fixed_abs, tag = 'smem constant byte address 0x4 - core index']
  #allocation1 [shape = 'u32[144,128]{1,0:T(1,128)}', space=vmem, size = 0x12000, scoped, tag = 'internal scratch']
  %s0 = inlined_call_operand.vmem [shape: f32[256,784], index: 0, kind: input, shape index: {}, may-alias: {0,5}]
  %s1 = inlined_call_operand.vmem [shape: f32[784,20], index: 1, kind: input, shape index: {}]
  %s2 = inlined_call_operand.vmem [shape: f32[1,20], index: 2, kind: input, shape index: {}]
  %s3 = inlined_call_operand.vmem [shape: f32[20,784], index: 3, kind: input, shape index: {}]
  %s4 = inlined_call_operand.vmem [shape: f32[1,784], index: 4, kind: input, shape index: {}]
  %s5 = inlined_call_operand.vmem [shape: f32[256,784], index: 5, kind: output, shape index: {}, may-alias: {0,5}]
  %s6 = sld [smem:[#allocation0]]
  $region53: #{tpu_custom_call.1} parent=0
    _
  %s8 = ssub.s32 1, %s6
  %s9 = scalar_select 0, %s8, %s6
  loop: start=0, step=1, limit=4
  $region2: #{tpu_custom_call.1} parent=0 // loop_pre_header
    _
  $region3: #{tpu_custom_call.1} parent=0 // loop_header
    %s11 = sphi 0, %s15
    %p12 = scmp.ge.s32.totalorder %s11, 4
    %s21 = sphi 0, %s23
    %s24 = sphi 0, %s21
    %s25 = sphi 0, %s24
    %s41 = sphi 0, %s25
    %s45 = sphi 0, %s45
    %s47 = sphi 0, %s45
    %s48 = sphi 0, %s47
    %s62 = sphi 0, %s48
    %s66 = sphi 0, %s66
    %s68 = sphi 0, %s66
    %s69 = sphi 0, %s68
    %s83 = sphi 0, %s69
    %s87 = sphi 0, %s87
    %s89 = sphi 0, %s87
    %s90 = sphi 0, %s89
    %s104 = sphi 0, %s90
    %s108 = sphi 0, %s108
    %s110 = sphi 0, %s108
    %s111 = sphi 0, %s110
    %s125 = sphi 0, %s111
    %s131 = sphi 0, %s133
    %s134 = sphi 0, %s131
    %s135 = sphi 0, %s134
    %s151 = sphi 0, %s135
  $region4: #{tpu_custom_call.1} parent=0 // loop_header_branch
    %14 = sbr.rel (%p12) target = $region8
  $region5: #{tpu_custom_call.1} parent=0 // loop_body
    %s16 = ssub.s32 %s11, 1
    %s17 = ssub.s32 %s11, 2
    %s18 = sadd.s32 %s11, 1
    %s19 = ssub.s32 %s11, %s18
    %p20 = scmp.eq.s32.totalorder %s19, 0
    %s22 = sadd.s32 %s21, 1
    %s23 = scalar_select %p20, %s21, %s22
    %p26 = pneg %p20
    %p27 = scmp.eq.s32.totalorder %s11, 1
    %p28 = por %p26, %p27
    %p29 = scmp.ne.s32.totalorder %s21, %s24
    %p30 = scmp.eq.s32.totalorder %s11, 0
    %p31 = por %p29, %p30
    %p32 = scmp.ne.s32.totalorder %s21, %s24
    %p33 = scmp.eq.s32.totalorder %s16, 1
    %p34 = por %p32, %p33
    %p35 = scmp.ne.s32.totalorder %s24, %s25
    %p36 = scmp.eq.s32.totalorder %s16, 0
    %p37 = por %p35, %p36
    %p38 = scmp.ne.s32.totalorder %s24, %s25
    %p39 = scmp.eq.s32.totalorder %s17, 1
    %p40 = por %p38, %p39
    %p42 = scmp.ne.s32.totalorder %s25, %s41
    %p43 = scmp.eq.s32.totalorder %s17, 0
    %p44 = por %p42, %p43
    %s46 = sadd.s32 %s45, 1
    %p49 = scmp.eq.s32.totalorder %s11, 1
    %p50 = scmp.ne.s32.totalorder %s45, %s47
    %p51 = scmp.eq.s32.totalorder %s11, 0
    %p52 = por %p50, %p51
    %p53 = scmp.ne.s32.totalorder %s45, %s47
    %p54 = scmp.eq.s32.totalorder %s16, 1
    %p55 = por %p53, %p54
    %p56 = scmp.ne.s32.totalorder %s47, %s48
    %p57 = scmp.eq.s32.totalorder %s16, 0
    %p58 = por %p56, %p57
    %p59 = scmp.ne.s32.totalorder %s47, %s48
    %p60 = scmp.eq.s32.totalorder %s17, 1
    %p61 = por %p59, %p60
    %p63 = scmp.ne.s32.totalorder %s48, %s62
    %p64 = scmp.eq.s32.totalorder %s17, 0
    %p65 = por %p63, %p64
    %s67 = sadd.s32 %s66, 1
    %p70 = scmp.eq.s32.totalorder %s11, 1
    %p71 = scmp.ne.s32.totalorder %s66, %s68
    %p72 = scmp.eq.s32.totalorder %s11, 0
    %p73 = por %p71, %p72
    %p74 = scmp.ne.s32.totalorder %s66, %s68
    %p75 = scmp.eq.s32.totalorder %s16, 1
    %p76 = por %p74, %p75
    %p77 = scmp.ne.s32.totalorder %s68, %s69
    %p78 = scmp.eq.s32.totalorder %s16, 0
    %p79 = por %p77, %p78
    %p80 = scmp.ne.s32.totalorder %s68, %s69
    %p81 = scmp.eq.s32.totalorder %s17, 1
    %p82 = por %p80, %p81
    %p84 = scmp.ne.s32.totalorder %s69, %s83
    %p85 = scmp.eq.s32.totalorder %s17, 0
    %p86 = por %p84, %p85
    %s88 = sadd.s32 %s87, 1
    %p91 = scmp.eq.s32.totalorder %s11, 1
    %p92 = scmp.ne.s32.totalorder %s87, %s89
    %p93 = scmp.eq.s32.totalorder %s11, 0
    %p94 = por %p92, %p93
    %p95 = scmp.ne.s32.totalorder %s87, %s89
    %p96 = scmp.eq.s32.totalorder %s16, 1
    %p97 = por %p95, %p96
    %p98 = scmp.ne.s32.totalorder %s89, %s90
    %p99 = scmp.eq.s32.totalorder %s16, 0
    %p100 = por %p98, %p99
    %p101 = scmp.ne.s32.totalorder %s89, %s90
    %p102 = scmp.eq.s32.totalorder %s17, 1
    %p103 = por %p101, %p102
    %p105 = scmp.ne.s32.totalorder %s90, %s104
    %p106 = scmp.eq.s32.totalorder %s17, 0
    %p107 = por %p105, %p106
    %s109 = sadd.s32 %s108, 1
    %p112 = scmp.eq.s32.totalorder %s11, 1
    %p113 = scmp.ne.s32.totalorder %s108, %s110
    %p114 = scmp.eq.s32.totalorder %s11, 0
    %p115 = por %p113, %p114
    %p116 = scmp.ne.s32.totalorder %s108, %s110
    %p117 = scmp.eq.s32.totalorder %s16, 1
    %p118 = por %p116, %p117
    %p119 = scmp.ne.s32.totalorder %s110, %s111
    %p120 = scmp.eq.s32.totalorder %s16, 0
    %p121 = por %p119, %p120
    %p122 = scmp.ne.s32.totalorder %s110, %s111
    %p123 = scmp.eq.s32.totalorder %s17, 1
    %p124 = por %p122, %p123
    %p126 = scmp.ne.s32.totalorder %s111, %s125
    %p127 = scmp.eq.s32.totalorder %s17, 0
    %p128 = por %p126, %p127
    %s129 = ssub.s32 %s11, %s18
    %p130 = scmp.eq.s32.totalorder %s129, 0
    %s132 = sadd.s32 %s131, 1
    %s133 = scalar_select %p130, %s131, %s132
    %p136 = pneg %p130
    %p137 = scmp.eq.s32.totalorder %s11, 1
    %p138 = por %p136, %p137
    %p139 = scmp.ne.s32.totalorder %s131, %s134
    %p140 = scmp.eq.s32.totalorder %s11, 0
    %p141 = por %p139, %p140
    %p142 = scmp.ne.s32.totalorder %s131, %s134
    %p143 = scmp.eq.s32.totalorder %s16, 1
    %p144 = por %p142, %p143
    %p145 = scmp.ne.s32.totalorder %s134, %s135
    %p146 = scmp.eq.s32.totalorder %s16, 0
    %p147 = por %p145, %p146
    %p148 = scmp.ne.s32.totalorder %s134, %s135
    %p149 = scmp.eq.s32.totalorder %s17, 1
    %p150 = por %p148, %p149
    %p152 = scmp.ne.s32.totalorder %s135, %s151
    %p153 = scmp.eq.s32.totalorder %s17, 0
    %p154 = por %p152, %p153
    %p155 = scmp.le.s32.totalorder 1, %s11
    %p156 = scmp.lt.s32.totalorder %s11, 3
    %p157 = pnand %p155, %p156
    %p158 = pneg %p157
    // Predicated region
    $region9: #{tpu_custom_call.1} parent=5 // pred_check
      _
    $region10: #{tpu_custom_call.1} parent=5 // pred_check_branch
      %160 = sbr.rel (%p157) target = $region12
    $region11: #{tpu_custom_call.1} parent=5 // pred_region
      %s161 = ssub.s32 %s11, 1
      // Predicated region
      $region13: #{tpu_custom_call.1} parent=11 // pred_check
        %p162 = pneg %p58
      $region14: #{tpu_custom_call.1} parent=11 // pred_check_branch
        %164 = sbr.rel (%p162) target = $region16
      $region15: #{tpu_custom_call.1} parent=11 // pred_region
        _
      $region16: #{tpu_custom_call.1} parent=11 // pred_fallthru
        _
      // Predicated region
      $region17: #{tpu_custom_call.1} parent=11 // pred_check
        %p165 = pneg %p79
      $region18: #{tpu_custom_call.1} parent=11 // pred_check_branch
        %167 = sbr.rel (%p165) target = $region20
      $region19: #{tpu_custom_call.1} parent=11 // pred_region
        _
      $region20: #{tpu_custom_call.1} parent=11 // pred_fallthru
        _
      // Predicated region
      $region21: #{tpu_custom_call.1} parent=11 // pred_check
        %p168 = pneg %p100
      $region22: #{tpu_custom_call.1} parent=11 // pred_check_branch
        %170 = sbr.rel (%p168) target = $region24
      $region23: #{tpu_custom_call.1} parent=11 // pred_region
        _
      $region24: #{tpu_custom_call.1} parent=11 // pred_fallthru
        _
      // Predicated region
      $region25: #{tpu_custom_call.1} parent=11 // pred_check
        %p171 = pneg %p121
      $region26: #{tpu_custom_call.1} parent=11 // pred_check_branch
        %173 = sbr.rel (%p171) target = $region28
      $region27: #{tpu_custom_call.1} parent=11 // pred_region
        _
      $region28: #{tpu_custom_call.1} parent=11 // pred_fallthru
        _
    $region12: #{tpu_custom_call.1} parent=5 // pred_fallthru
      _
    %p174 = scmp.lt.s32.totalorder %s11, 2
    // Predicated region
    $region29: #{tpu_custom_call.1} parent=5 // pred_check
      %p175 = pneg %p174
    $region30: #{tpu_custom_call.1} parent=5 // pred_check_branch
      %177 = sbr.rel (%p175) target = $region32
    $region31: #{tpu_custom_call.1} parent=5 // pred_region
      // Predicated region
      $region33: #{tpu_custom_call.1} parent=31 // pred_check
        %p178 = pneg %p31
      $region34: #{tpu_custom_call.1} parent=31 // pred_check_branch
        %180 = sbr.rel (%p178) target = $region36
      $region35: #{tpu_custom_call.1} parent=31 // pred_region
        %s181 = smul.u32 16, %s11
        %p182 = scmp.lt.s32.totalorder %s181, 31
        %s183 = scalar_select %p182, %s181, 31
        %s184 = smul.addr %s183, 7
        %s185 = smul.addr %s184, 8
        %s186 = scalar_lea.vmem %s0, %s185
        %s187 = smul.u32 16, %s11
      $region36: #{tpu_custom_call.1} parent=31 // pred_fallthru
        _
    $region32: #{tpu_custom_call.1} parent=5 // pred_fallthru
      _
    %p188 = scmp.le.s32.totalorder 1, %s11
    %p189 = scmp.lt.s32.totalorder %s11, 3
    %p190 = pnand %p188, %p189
    %p191 = pneg %p190
    // Predicated region
    $region37: #{tpu_custom_call.1} parent=5 // pred_check
      _
    $region38: #{tpu_custom_call.1} parent=5 // pred_check_branch
      %193 = sbr.rel (%p190) target = $region40
    $region39: #{tpu_custom_call.1} parent=5 // pred_region
      %s194 = ssub.s32 %s11, 1
      %s195 = smul.u32 16, %s16
      %p196 = scmp.lt.s32.totalorder %s195, 31
      %s197 = scalar_select %p196, %s195, 31
      %s198 = smul.addr %s197, 7
      %s199 = smul.addr %s198, 8
      %s200 = scalar_lea.vmem %s0, %s199
      %p201 = pneg %p37
      %p202 = pneg %p34
      %p203 = pneg %p58
      %p204 = pneg %p55
      %p205 = pneg %p79
      %p206 = pneg %p76
      %p207 = pneg %p100
      %p208 = pneg %p97
      %p209 = pneg %p121
      %p210 = pneg %p118
      %p211 = pneg %p147
      %p212 = pneg %p144
      %s213 = smul.u32 16, %s16
      %p214 = scmp.lt.s32.totalorder %s213, 31
      %s215 = scalar_select %p214, %s213, 31
      %s216 = smul.addr %s215, 7
      %s217 = smul.addr %s216, 8
      %s218 = scalar_lea.vmem %s5, %s217
      %s219 = smul.u32 16, %s16
      %p220 = scmp.lt.s32.totalorder %s219, 31
      %s221 = scalar_select %p220, %s219, 31
      %s222 = smul.addr %s221, 7
      %s223 = smul.addr %s222, 8
      %s224 = scalar_lea.vmem %s0, %s223
      %s225 = smul.u32 16, %s16
      %s226 = smul.u32 16, %s16
      %p227 = scmp.lt.s32.totalorder %s226, 31
      %s228 = scalar_select %p227, %s226, 31
      %s229 = smul.addr %s228, 7
      %s230 = smul.addr %s229, 8
      %s231 = scalar_lea.vmem %s5, %s230
      %s232 = smul.u32 16, %s16
      %v233 = vld [vmem:[%s224] sm:$0xff]
      %v234 = vld [vmem:[%s224 + $0x8] sm:$0xff]
      %v235 = vld [vmem:[%s224 + $0x10] sm:$0xff]
      %v236 = vld [vmem:[%s224 + $0x18] sm:$0xff]
      %v237 = vld [vmem:[%s224 + $0x20] sm:$0xff]
      %v238 = vld [vmem:[%s224 + $0x28] sm:$0xff]
      %v239 = vld [vmem:[%s224 + $0x30] sm:$0xff]
      %v240 = vld [vmem:[%s224 + $0x38] sm:$0xff]
      %v241 = vld [vmem:[%s224 + $0x40] sm:$0xff]
      %v242 = vld [vmem:[%s224 + $0x48] sm:$0xff]
      %v243 = vld [vmem:[%s224 + $0x50] sm:$0xff]
      %v244 = vld [vmem:[%s224 + $0x58] sm:$0xff]
      %v245 = vld [vmem:[%s224 + $0x60] sm:$0xff]
      %v246 = vld [vmem:[%s224 + $0x68] sm:$0xff]
      %v247 = vld [vmem:[%s224 + $0x70] sm:$0xff]
      %v248 = vld [vmem:[%s224 + $0x78] sm:$0xff]
      %v249 = vld [vmem:[%s224 + $0x80] sm:$0xff]
      %v250 = vld [vmem:[%s224 + $0x88] sm:$0xff]
      %v251 = vld [vmem:[%s224 + $0x90] sm:$0xff]
      %v252 = vld [vmem:[%s224 + $0x98] sm:$0xff]
      %v253 = vld [vmem:[%s224 + $0xa0] sm:$0xff]
      %v254 = vld [vmem:[%s224 + $0xa8] sm:$0xff]
      %v255 = vld [vmem:[%s224 + $0xb0] sm:$0xff]
      %v256 = vld [vmem:[%s224 + $0xb8] sm:$0xff]
      %v257 = vld [vmem:[%s224 + $0xc0] sm:$0xff]
      %v258 = vld [vmem:[%s224 + $0xc8] sm:$0xff]
      %v259 = vld [vmem:[%s224 + $0xd0] sm:$0xff]
      %v260 = vld [vmem:[%s224 + $0xd8] sm:$0xff]
      %v261 = vld [vmem:[%s224 + $0xe0] sm:$0xff]
      %v262 = vld [vmem:[%s224 + $0xe8] sm:$0xff]
      %v263 = vld [vmem:[%s224 + $0xf0] sm:$0xff]
      %v264 = vld [vmem:[%s224 + $0xf8] sm:$0xff]
      %v265 = vld [vmem:[%s224 + $0x100] sm:$0xff]
      %v266 = vld [vmem:[%s224 + $0x108] sm:$0xff]
      %v267 = vld [vmem:[%s224 + $0x110] sm:$0xff]
      %v268 = vld [vmem:[%s224 + $0x118] sm:$0xff]
      %v269 = vld [vmem:[%s224 + $0x120] sm:$0xff]
      %v270 = vld [vmem:[%s224 + $0x128] sm:$0xff]
      %v271 = vld [vmem:[%s224 + $0x130] sm:$0xff]
      %v272 = vld [vmem:[%s224 + $0x138] sm:$0xff]
      %v273 = vld [vmem:[%s224 + $0x140] sm:$0xff]
      %v274 = vld [vmem:[%s224 + $0x148] sm:$0xff]
      %v275 = vld [vmem:[%s224 + $0x150] sm:$0xff]
      %v276 = vld [vmem:[%s224 + $0x158] sm:$0xff]
      %v277 = vld [vmem:[%s224 + $0x160] sm:$0xff]
      %v278 = vld [vmem:[%s224 + $0x168] sm:$0xff]
      %v279 = vld [vmem:[%s224 + $0x170] sm:$0xff]
      %v280 = vld [vmem:[%s224 + $0x178] sm:$0xff]
      %v281 = vld [vmem:[%s224 + $0x180] sm:$0xff]
      %v282 = vld [vmem:[%s224 + $0x188] sm:$0xff]
      %v283 = vld [vmem:[%s224 + $0x190] sm:$0xff]
      %v284 = vld [vmem:[%s224 + $0x198] sm:$0xff]
      %v285 = vld [vmem:[%s224 + $0x1a0] sm:$0xff]
      %v286 = vld [vmem:[%s224 + $0x1a8] sm:$0xff]
      %v287 = vld [vmem:[%s224 + $0x1b0] sm:$0xff]
      %v288 = vld [vmem:[%s224 + $0x1b8] sm:$0xff]
      %v289 = vld [vmem:[%s224 + $0x1c0] sm:$0xff]
      %v290 = vld [vmem:[%s224 + $0x1c8] sm:$0xff]
      %v291 = vld [vmem:[%s224 + $0x1d0] sm:$0xff]
      %v292 = vld [vmem:[%s224 + $0x1d8] sm:$0xff]
      %v293 = vld [vmem:[%s224 + $0x1e0] sm:$0xff]
      %v294 = vld [vmem:[%s224 + $0x1e8] sm:$0xff]
      %v295 = vld [vmem:[%s224 + $0x1f0] sm:$0xff]
      %v296 = vld [vmem:[%s224 + $0x1f8] sm:$0xff]
      %v297 = vld [vmem:[%s224 + $0x200] sm:$0xff]
      %v298 = vld [vmem:[%s224 + $0x208] sm:$0xff]
      %v299 = vld [vmem:[%s224 + $0x210] sm:$0xff]
      %v300 = vld [vmem:[%s224 + $0x218] sm:$0xff]
      %v301 = vld [vmem:[%s224 + $0x220] sm:$0xff]
      %v302 = vld [vmem:[%s224 + $0x228] sm:$0xff]
      %v303 = vld [vmem:[%s224 + $0x230] sm:$0xff]
      %v304 = vld [vmem:[%s224 + $0x238] sm:$0xff]
      %v305 = vld [vmem:[%s224 + $0x240] sm:$0xff]
      %v306 = vld [vmem:[%s224 + $0x248] sm:$0xff]
      %v307 = vld [vmem:[%s224 + $0x250] sm:$0xff]
      %v308 = vld [vmem:[%s224 + $0x258] sm:$0xff]
      %v309 = vld [vmem:[%s224 + $0x260] sm:$0xff]
      %v310 = vld [vmem:[%s224 + $0x268] sm:$0xff]
      %v311 = vld [vmem:[%s224 + $0x270] sm:$0xff]
      %v312 = vld [vmem:[%s224 + $0x278] sm:$0xff]
      %v313 = vld [vmem:[%s224 + $0x280] sm:$0xff]
      %v314 = vld [vmem:[%s224 + $0x288] sm:$0xff]
      %v315 = vld [vmem:[%s224 + $0x290] sm:$0xff]
      %v316 = vld [vmem:[%s224 + $0x298] sm:$0xff]
      %v317 = vld [vmem:[%s224 + $0x2a0] sm:$0xff]
      %v318 = vld [vmem:[%s224 + $0x2a8] sm:$0xff]
      %v319 = vld [vmem:[%s224 + $0x2b0] sm:$0xff]
      %v320 = vld [vmem:[%s224 + $0x2b8] sm:$0xff]
      %v321 = vld [vmem:[%s224 + $0x2c0] sm:$0xff]
      %v322 = vld [vmem:[%s224 + $0x2c8] sm:$0xff]
      %v323 = vld [vmem:[%s224 + $0x2d0] sm:$0xff]
      %v324 = vld [vmem:[%s224 + $0x2d8] sm:$0xff]
      %v325 = vld [vmem:[%s224 + $0x2e0] sm:$0xff]
      %v326 = vld [vmem:[%s224 + $0x2e8] sm:$0xff]
      %v327 = vld [vmem:[%s224 + $0x2f0] sm:$0xff]
      %v328 = vld [vmem:[%s224 + $0x2f8] sm:$0xff]
      %v329 = vld [vmem:[%s224 + $0x300] sm:$0xff]
      %v330 = vld [vmem:[%s224 + $0x308] sm:$0xff]
      %v331 = vld [vmem:[%s224 + $0x310] sm:$0xff]
      %v332 = vld [vmem:[%s224 + $0x318] sm:$0xff]
      %v333 = vld [vmem:[%s224 + $0x320] sm:$0xff]
      %v334 = vld [vmem:[%s224 + $0x328] sm:$0xff]
      %v335 = vld [vmem:[%s224 + $0x330] sm:$0xff]
      %v336 = vld [vmem:[%s224 + $0x338] sm:$0xff]
      %v337 = vld [vmem:[%s224 + $0x340] sm:$0xff]
      %v338 = vld [vmem:[%s224 + $0x348] sm:$0xff]
      %v339 = vld [vmem:[%s224 + $0x350] sm:$0xff]
      %v340 = vld [vmem:[%s224 + $0x358] sm:$0xff]
      %v341 = vld [vmem:[%s224 + $0x360] sm:$0xff]
      %v342 = vld [vmem:[%s224 + $0x368] sm:$0xff]
      %v343 = vld [vmem:[%s224 + $0x370] sm:$0xff]
      %v344 = vld [vmem:[%s224 + $0x378] sm:$0xff]
      %v345 = vld [vmem:[%s1] sm:$0xff]
      %v346 = vld [vmem:[%s1 + $0x8] sm:$0xff]
      %v347 = vld [vmem:[%s1 + $0x10] sm:$0xff]
      %v348 = vld [vmem:[%s1 + $0x18] sm:$0xff]
      %v349 = vld [vmem:[%s1 + $0x20] sm:$0xff]
      %v350 = vld [vmem:[%s1 + $0x28] sm:$0xff]
      %v351 = vld [vmem:[%s1 + $0x30] sm:$0xff]
      %v352 = vld [vmem:[%s1 + $0x38] sm:$0xff]
      %v353 = vld [vmem:[%s1 + $0x40] sm:$0xff]
      %v354 = vld [vmem:[%s1 + $0x48] sm:$0xff]
      %v355 = vld [vmem:[%s1 + $0x50] sm:$0xff]
      %v356 = vld [vmem:[%s1 + $0x58] sm:$0xff]
      %v357 = vld [vmem:[%s1 + $0x60] sm:$0xff]
      %v358 = vld [vmem:[%s1 + $0x68] sm:$0xff]
      %v359 = vld [vmem:[%s1 + $0x70] sm:$0xff]
      %v360 = vld [vmem:[%s1 + $0x78] sm:$0xff]
      %v361 = vld [vmem:[%s1 + $0x80] sm:$0xff]
      %v362 = vld [vmem:[%s1 + $0x88] sm:$0xff]
      %v363 = vld [vmem:[%s1 + $0x90] sm:$0xff]
      %v364 = vld [vmem:[%s1 + $0x98] sm:$0xff]
      %v365 = vld [vmem:[%s1 + $0xa0] sm:$0xff]
      %v366 = vld [vmem:[%s1 + $0xa8] sm:$0xff]
      %v367 = vld [vmem:[%s1 + $0xb0] sm:$0xff]
      %v368 = vld [vmem:[%s1 + $0xb8] sm:$0xff]
      %v369 = vld [vmem:[%s1 + $0xc0] sm:$0xff]
      %v370 = vld [vmem:[%s1 + $0xc8] sm:$0xff]
      %v371 = vld [vmem:[%s1 + $0xd0] sm:$0xff]
      %v372 = vld [vmem:[%s1 + $0xd8] sm:$0xff]
      %v373 = vld [vmem:[%s1 + $0xe0] sm:$0xff]
      %v374 = vld [vmem:[%s1 + $0xe8] sm:$0xff]
      %v375 = vld [vmem:[%s1 + $0xf0] sm:$0xff]
      %v376 = vld [vmem:[%s1 + $0xf8] sm:$0xff]
      %v377 = vld [vmem:[%s1 + $0x100] sm:$0xff]
      %v378 = vld [vmem:[%s1 + $0x108] sm:$0xff]
      %v379 = vld [vmem:[%s1 + $0x110] sm:$0xff]
      %v380 = vld [vmem:[%s1 + $0x118] sm:$0xff]
      %v381 = vld [vmem:[%s1 + $0x120] sm:$0xff]
      %v382 = vld [vmem:[%s1 + $0x128] sm:$0xff]
      %v383 = vld [vmem:[%s1 + $0x130] sm:$0xff]
      %v384 = vld [vmem:[%s1 + $0x138] sm:$0xff]
      %v385 = vld [vmem:[%s1 + $0x140] sm:$0xff]
      %v386 = vld [vmem:[%s1 + $0x148] sm:$0xff]
      %v387 = vld [vmem:[%s1 + $0x150] sm:$0xff]
      %v388 = vld [vmem:[%s1 + $0x158] sm:$0xff]
      %v389 = vld [vmem:[%s1 + $0x160] sm:$0xff]
      %v390 = vld [vmem:[%s1 + $0x168] sm:$0xff]
      %v391 = vld [vmem:[%s1 + $0x170] sm:$0xff]
      %v392 = vld [vmem:[%s1 + $0x178] sm:$0xff]
      %v393 = vld [vmem:[%s1 + $0x180] sm:$0xff]
      %v394 = vld [vmem:[%s1 + $0x188] sm:$0xff]
      %v395 = vld [vmem:[%s1 + $0x190] sm:$0xff]
      %v396 = vld [vmem:[%s1 + $0x198] sm:$0xff]
      %v397 = vld [vmem:[%s1 + $0x1a0] sm:$0xff]
      %v398 = vld [vmem:[%s1 + $0x1a8] sm:$0xff]
      %v399 = vld [vmem:[%s1 + $0x1b0] sm:$0xff]
      %v400 = vld [vmem:[%s1 + $0x1b8] sm:$0xff]
      %v401 = vld [vmem:[%s1 + $0x1c0] sm:$0xff]
      %v402 = vld [vmem:[%s1 + $0x1c8] sm:$0xff]
      %v403 = vld [vmem:[%s1 + $0x1d0] sm:$0xff]
      %v404 = vld [vmem:[%s1 + $0x1d8] sm:$0xff]
      %v405 = vld [vmem:[%s1 + $0x1e0] sm:$0xff]
      %v406 = vld [vmem:[%s1 + $0x1e8] sm:$0xff]
      %v407 = vld [vmem:[%s1 + $0x1f0] sm:$0xff]
      %v408 = vld [vmem:[%s1 + $0x1f8] sm:$0xff]
      %v409 = vld [vmem:[%s1 + $0x200] sm:$0xff]
      %v410 = vld [vmem:[%s1 + $0x208] sm:$0xff]
      %v411 = vld [vmem:[%s1 + $0x210] sm:$0xff]
      %v412 = vld [vmem:[%s1 + $0x218] sm:$0xff]
      %v413 = vld [vmem:[%s1 + $0x220] sm:$0xff]
      %v414 = vld [vmem:[%s1 + $0x228] sm:$0xff]
      %v415 = vld [vmem:[%s1 + $0x230] sm:$0xff]
      %v416 = vld [vmem:[%s1 + $0x238] sm:$0xff]
      %v417 = vld [vmem:[%s1 + $0x240] sm:$0xff]
      %v418 = vld [vmem:[%s1 + $0x248] sm:$0xff]
      %v419 = vld [vmem:[%s1 + $0x250] sm:$0xff]
      %v420 = vld [vmem:[%s1 + $0x258] sm:$0xff]
      %v421 = vld [vmem:[%s1 + $0x260] sm:$0xff]
      %v422 = vld [vmem:[%s1 + $0x268] sm:$0xff]
      %v423 = vld [vmem:[%s1 + $0x270] sm:$0xff]
      %v424 = vld [vmem:[%s1 + $0x278] sm:$0xff]
      %v425 = vld [vmem:[%s1 + $0x280] sm:$0xff]
      %v426 = vld [vmem:[%s1 + $0x288] sm:$0xff]
      %v427 = vld [vmem:[%s1 + $0x290] sm:$0xff]
      %v428 = vld [vmem:[%s1 + $0x298] sm:$0xff]
      %v429 = vld [vmem:[%s1 + $0x2a0] sm:$0xff]
      %v430 = vld [vmem:[%s1 + $0x2a8] sm:$0xff]
      %v431 = vld [vmem:[%s1 + $0x2b0] sm:$0xff]
      %v432 = vld [vmem:[%s1 + $0x2b8] sm:$0xff]
      %v433 = vld [vmem:[%s1 + $0x2c0] sm:$0xff]
      %v434 = vld [vmem:[%s1 + $0x2c8] sm:$0xff]
      %v435 = vld [vmem:[%s1 + $0x2d0] sm:$0xff]
      %v436 = vld [vmem:[%s1 + $0x2d8] sm:$0xff]
      %v437 = vld [vmem:[%s1 + $0x2e0] sm:$0xff]
      %v438 = vld [vmem:[%s1 + $0x2e8] sm:$0xff]
      %v439 = vld [vmem:[%s1 + $0x2f0] sm:$0xff]
      %v440 = vld [vmem:[%s1 + $0x2f8] sm:$0xff]
      %v441 = vld [vmem:[%s1 + $0x300] sm:$0xff]
      %v442 = vld [vmem:[%s1 + $0x308] sm:$0xff]
      %v443 = vld [vmem:[%s2] sm:$0x1]
      %v445 = vlaneseq
      %v446 = vshrl.u32 %v445, 7
      %v447 = vsub.s32 0, %v446
      %v448 = vrot.slane %v443, %v447
      %vm450 = vcmask 130048
      %v452 = vsel %vm450, %v239, 0
      %v455 = vsel %vm450, %v246, 0
      %v458 = vsel %vm450, %v253, 0
      %v461 = vsel %vm450, %v260, 0
      %v464 = vsel %vm450, %v267, 0
      %v467 = vsel %vm450, %v274, 0
      %v470 = vsel %vm450, %v281, 0
      %v473 = vsel %vm450, %v288, 0
      %v476 = vsel %vm450, %v295, 0
      %v479 = vsel %vm450, %v302, 0
      %v482 = vsel %vm450, %v309, 0
      %v485 = vsel %vm450, %v316, 0
      %v488 = vsel %vm450, %v323, 0
      %v491 = vsel %vm450, %v330, 0
      %v494 = vsel %vm450, %v337, 0
      %v497 = vsel %vm450, %v344, 0
      %499 = vmatprep.subr.mxu0 0.0
      %500 = vmatpush1.msra.mxu0 %v345
      %501 = vmatprep.subr.mxu0 0.0
      %502 = vmatpush1.msra.mxu0 %v346
      %503 = vmatprep.subr.mxu0 0.0
      %504 = vmatpush1.msra.mxu0 %v347
      %505 = vmatprep.subr.mxu0 0.0
      %506 = vmatpush1.msra.mxu0 %v348
      %507 = vmatprep.subr.mxu0 0.0
      %508 = vmatpush1.msra.mxu0 %v349
      %509 = vmatprep.subr.mxu0 0.0
      %510 = vmatpush1.msra.mxu0 %v350
      %511 = vmatprep.subr.mxu0 0.0
      %512 = vmatpush1.msra.mxu0 %v351
      %513 = vmatprep.subr.mxu0 0.0
      %514 = vmatpush1.msra.mxu0 %v352
      %515 = vmatprep.subr.mxu0 0.0
      %516 = vmatpush1.msra.mxu0 %v353
      %517 = vmatprep.subr.mxu0 0.0
      %518 = vmatpush1.msra.mxu0 %v354
      %519 = vmatprep.subr.mxu0 0.0
      %520 = vmatpush1.msra.mxu0 %v355
      %521 = vmatprep.subr.mxu0 0.0
      %522 = vmatpush1.msra.mxu0 %v356
      %523 = vmatprep.subr.mxu0 0.0
      %524 = vmatpush1.msra.mxu0 %v357
      %525 = vmatprep.subr.mxu0 0.0
      %526 = vmatpush1.msra.mxu0 %v358
      %527 = vmatprep.subr.mxu0 0.0
      %528 = vmatpush1.msra.mxu0 %v359
      %529 = vmatprep.subr.mxu0 0.0
      %530 = vmatpush1.msra.mxu0 %v360
      %531 = vmatprep.subr.mxu0 0.0
      %532 = vmatpush1.msra.mxu0 %v361
      %533 = vmatprep.subr.mxu0 0.0
      %534 = vmatpush1.msra.mxu0 %v362
      %535 = vmatprep.subr.mxu0 0.0
      %536 = vmatpush1.msra.mxu0 %v363
      %537 = vmatprep.subr.mxu0 0.0
      %538 = vmatpush1.msra.mxu0 %v364
      %539 = vmatprep.subr.mxu0 0.0
      %540 = vmatpush1.msra.mxu0 %v365
      %541 = vmatprep.subr.mxu0 0.0
      %542 = vmatpush1.msra.mxu0 %v366
      %543 = vmatprep.subr.mxu0 0.0
      %544 = vmatpush1.msra.mxu0 %v367
      %545 = vmatprep.subr.mxu0 0.0
      %546 = vmatpush1.msra.mxu0 %v368
      %547 = vmatprep.subr.mxu0 0.0
      %548 = vmatpush1.msra.mxu0 %v369
      %549 = vmatprep.subr.mxu0 0.0
      %550 = vmatpush1.msra.mxu0 %v370
      %551 = vmatprep.subr.mxu0 0.0
      %552 = vmatpush1.msra.mxu0 %v371
      %553 = vmatprep.subr.mxu0 0.0
      %554 = vmatpush1.msra.mxu0 %v372
      %555 = vmatprep.subr.mxu0 0.0
      %556 = vmatpush1.msra.mxu0 %v373
      %557 = vmatprep.subr.mxu0 0.0
      %558 = vmatpush1.msra.mxu0 %v374
      %559 = vmatprep.subr.mxu0 0.0
      %560 = vmatpush1.msra.mxu0 %v375
      %561 = vmatprep.subr.mxu0 0.0
      %562 = vmatpush1.msra.mxu0 %v376
      %563 = vmatprep.mubr.f32.mxu0 %v234
      %564 = vmatmul.mubr.f32.gmra.mrb[0].mxu0 %v233
      %v565 = vpop.f32.mrb[0].mxu0
      %v566 = vadd.f32 %v448, %v565
      %v567 = vpop.f32.mrb[0].mxu0
      %568 = vmatprep.mubr.f32.mxu0 %v241
      %569 = vmatmul.mubr.f32.gmra.mrb[0].mxu0 %v240
      %v570 = vpop.f32.mrb[0].mxu0
      %v571 = vadd.f32 %v448, %v570
      %v572 = vpop.f32.mrb[0].mxu0
      %573 = vmatprep.mubr.f32.mxu0 %v248
      %574 = vmatmul.mubr.f32.gmra.mrb[0].mxu0 %v247
      %v575 = vpop.f32.mrb[0].mxu0
      %v576 = vadd.f32 %v448, %v575
      %v577 = vpop.f32.mrb[0].mxu0
      %578 = vmatprep.mubr.f32.mxu0 %v255
      %579 = vmatmul.mubr.f32.gmra.mrb[0].mxu0 %v254
      %v580 = vpop.f32.mrb[0].mxu0
      %v581 = vadd.f32 %v448, %v580
      %v582 = vpop.f32.mrb[0].mxu0
      %583 = vmatprep.mubr.f32.mxu0 %v262
      %584 = vmatmul.mubr.f32.gmra.mrb[0].mxu0 %v261
      %v585 = vpop.f32.mrb[0].mxu0
      %v586 = vadd.f32 %v448, %v585
      %v587 = vpop.f32.mrb[0].mxu0
      %588 = vmatprep.mubr.f32.mxu0 %v269
      %589 = vmatmul.mubr.f32.gmra.mrb[0].mxu0 %v268
      %v590 = vpop.f32.mrb[0].mxu0
      %v591 = vadd.f32 %v448, %v590
      %v592 = vpop.f32.mrb[0].mxu0
      %593 = vmatprep.mubr.f32.mxu0 %v276
      %594 = vmatmul.mubr.f32.gmra.mrb[0].mxu0 %v275
      %v595 = vpop.f32.mrb[0].mxu0
      %v596 = vadd.f32 %v448, %v595
      %v597 = vpop.f32.mrb[0].mxu0
      %598 = vmatprep.mubr.f32.mxu0 %v283
      %599 = vmatmul.mubr.f32.gmra.mrb[0].mxu0 %v282
      %v600 = vpop.f32.mrb[0].mxu0
      %v601 = vadd.f32 %v448, %v600
      %v602 = vpop.f32.mrb[0].mxu0
      %603 = vmatprep.mubr.f32.mxu0 %v290
      %604 = vmatmul.mubr.f32.gmra.mrb[0].mxu0 %v289
      %v605 = vpop.f32.mrb[0].mxu0
      %v606 = vadd.f32 %v448, %v605
      %v607 = vpop.f32.mrb[0].mxu0
      %608 = vmatprep.mubr.f32.mxu0 %v297
      %609 = vmatmul.mubr.f32.gmra.mrb[0].mxu0 %v296
      %v610 = vpop.f32.mrb[0].mxu0
      %v611 = vadd.f32 %v448, %v610
      %v612 = vpop.f32.mrb[0].mxu0
      %613 = vmatprep.mubr.f32.mxu0 %v304
      %614 = vmatmul.mubr.f32.gmra.mrb[0].mxu0 %v303
      %v615 = vpop.f32.mrb[0].mxu0
      %v616 = vadd.f32 %v448, %v615
      %v617 = vpop.f32.mrb[0].mxu0
      %618 = vmatprep.mubr.f32.mxu0 %v311
      %619 = vmatmul.mubr.f32.gmra.mrb[0].mxu0 %v310
      %v620 = vpop.f32.mrb[0].mxu0
      %v621 = vadd.f32 %v448, %v620
      %v622 = vpop.f32.mrb[0].mxu0
      %623 = vmatprep.mubr.f32.mxu0 %v318
      %624 = vmatmul.mubr.f32.gmra.mrb[0].mxu0 %v317
      %v625 = vpop.f32.mrb[0].mxu0
      %v626 = vadd.f32 %v448, %v625
      %v627 = vpop.f32.mrb[0].mxu0
      %628 = vmatprep.mubr.f32.mxu0 %v325
      %629 = vmatmul.mubr.f32.gmra.mrb[0].mxu0 %v324
      %v630 = vpop.f32.mrb[0].mxu0
      %v631 = vadd.f32 %v448, %v630
      %v632 = vpop.f32.mrb[0].mxu0
      %633 = vmatprep.mubr.f32.mxu0 %v332
      %634 = vmatmul.mubr.f32.gmra.mrb[0].mxu0 %v331
      %v635 = vpop.f32.mrb[0].mxu0
      %v636 = vadd.f32 %v448, %v635
      %v637 = vpop.f32.mrb[0].mxu0
      %638 = vmatprep.mubr.f32.mxu0 %v339
      %639 = vmatmul.mubr.f32.gmra.mrb[0].mxu0 %v338
      %v640 = vpop.f32.mrb[0].mxu0
      %v641 = vadd.f32 %v448, %v640
      %v642 = vpop.f32.mrb[0].mxu0
      %643 = vdwg.mxu0
      %644 = vmatprep.subr.mxu0 0.0
      %645 = vmatpush1.msra.mxu0 %v377
      %646 = vmatprep.subr.mxu0 0.0
      %647 = vmatpush1.msra.mxu0 %v378
      %648 = vmatprep.subr.mxu0 0.0
      %649 = vmatpush1.msra.mxu0 %v379
      %650 = vmatprep.subr.mxu0 0.0
      %651 = vmatpush1.msra.mxu0 %v380
      %652 = vmatprep.subr.mxu0 0.0
      %653 = vmatpush1.msra.mxu0 %v381
      %654 = vmatprep.subr.mxu0 0.0
      %655 = vmatpush1.msra.mxu0 %v382
      %656 = vmatprep.subr.mxu0 0.0
      %657 = vmatpush1.msra.mxu0 %v383
      %658 = vmatprep.subr.mxu0 0.0
      %659 = vmatpush1.msra.mxu0 %v384
      %660 = vmatprep.subr.mxu0 0.0
      %661 = vmatpush1.msra.mxu0 %v385
      %662 = vmatprep.subr.mxu0 0.0
      %663 = vmatpush1.msra.mxu0 %v386
      %664 = vmatprep.subr.mxu0 0.0
      %665 = vmatpush1.msra.mxu0 %v387
      %666 = vmatprep.subr.mxu0 0.0
      %667 = vmatpush1.msra.mxu0 %v388
      %668 = vmatprep.subr.mxu0 0.0
      %669 = vmatpush1.msra.mxu0 %v389
      %670 = vmatprep.subr.mxu0 0.0
      %671 = vmatpush1.msra.mxu0 %v390
      %672 = vmatprep.subr.mxu0 0.0
      %673 = vmatpush1.msra.mxu0 %v391
      %674 = vmatprep.subr.mxu0 0.0
      %675 = vmatpush1.msra.mxu0 %v392
      %676 = vmatprep.subr.mxu0 0.0
      %677 = vmatpush1.msra.mxu0 %v393
      %678 = vmatprep.subr.mxu0 0.0
      %679 = vmatpush1.msra.mxu0 %v394
      %680 = vmatprep.subr.mxu0 0.0
      %681 = vmatpush1.msra.mxu0 %v395
      %682 = vmatprep.subr.mxu0 0.0
      %683 = vmatpush1.msra.mxu0 %v396
      %684 = vmatprep.subr.mxu0 0.0
      %685 = vmatpush1.msra.mxu0 %v397
      %686 = vmatprep.subr.mxu0 0.0
      %687 = vmatpush1.msra.mxu0 %v398
      %688 = vmatprep.subr.mxu0 0.0
      %689 = vmatpush1.msra.mxu0 %v399
      %690 = vmatprep.subr.mxu0 0.0
      %691 = vmatpush1.msra.mxu0 %v400
      %692 = vmatprep.subr.mxu0 0.0
      %693 = vmatpush1.msra.mxu0 %v401
      %694 = vmatprep.subr.mxu0 0.0
      %695 = vmatpush1.msra.mxu0 %v402
      %696 = vmatprep.subr.mxu0 0.0
      %697 = vmatpush1.msra.mxu0 %v403
      %698 = vmatprep.subr.mxu0 0.0
      %699 = vmatpush1.msra.mxu0 %v404
      %700 = vmatprep.subr.mxu0 0.0
      %701 = vmatpush1.msra.mxu0 %v405
      %702 = vmatprep.subr.mxu0 0.0
      %703 = vmatpush1.msra.mxu0 %v406
      %704 = vmatprep.subr.mxu0 0.0
      %705 = vmatpush1.msra.mxu0 %v407
      %706 = vmatprep.subr.mxu0 0.0
      %707 = vmatpush1.msra.mxu0 %v408
      %708 = vmatprep.mubr.f32.mxu0 %v236
      %709 = vmatmul.mubr.f32.gmra.mrb[0].mxu0 %v235
      %v710 = vpop.f32.mrb[0].mxu0
      %v711 = vadd.f32 %v566, %v710
      %v712 = vpop.f32.mrb[0].mxu0
      %713 = vmatprep.mubr.f32.mxu0 %v243
      %714 = vmatmul.mubr.f32.gmra.mrb[0].mxu0 %v242
      %v715 = vpop.f32.mrb[0].mxu0
      %v716 = vadd.f32 %v571, %v715
      %v717 = vpop.f32.mrb[0].mxu0
      %718 = vmatprep.mubr.f32.mxu0 %v250
      %719 = vmatmul.mubr.f32.gmra.mrb[0].mxu0 %v249
      %v720 = vpop.f32.mrb[0].mxu0
      %v721 = vadd.f32 %v576, %v720
      %v722 = vpop.f32.mrb[0].mxu0
      %723 = vmatprep.mubr.f32.mxu0 %v257
      %724 = vmatmul.mubr.f32.gmra.mrb[0].mxu0 %v256
      %v725 = vpop.f32.mrb[0].mxu0
      %v726 = vadd.f32 %v581, %v725
      %v727 = vpop.f32.mrb[0].mxu0
      %728 = vmatprep.mubr.f32.mxu0 %v264
      %729 = vmatmul.mubr.f32.gmra.mrb[0].mxu0 %v263
      %v730 = vpop.f32.mrb[0].mxu0
      %v731 = vadd.f32 %v586, %v730
      %v732 = vpop.f32.mrb[0].mxu0
      %733 = vmatprep.mubr.f32.mxu0 %v271
      %734 = vmatmul.mubr.f32.gmra.mrb[0].mxu0 %v270
      %v735 = vpop.f32.mrb[0].mxu0
      %v736 = vadd.f32 %v591, %v735
      %v737 = vpop.f32.mrb[0].mxu0
      %738 = vmatprep.mubr.f32.mxu0 %v278
      %739 = vmatmul.mubr.f32.gmra.mrb[0].mxu0 %v277
      %v740 = vpop.f32.mrb[0].mxu0
      %v741 = vadd.f32 %v596, %v740
      %v742 = vpop.f32.mrb[0].mxu0
      %743 = vmatprep.mubr.f32.mxu0 %v285
      %744 = vmatmul.mubr.f32.gmra.mrb[0].mxu0 %v284
      %v745 = vpop.f32.mrb[0].mxu0
      %v746 = vadd.f32 %v601, %v745
      %v747 = vpop.f32.mrb[0].mxu0
      %748 = vmatprep.mubr.f32.mxu0 %v292
      %749 = vmatmul.mubr.f32.gmra.mrb[0].mxu0 %v291
      %v750 = vpop.f32.mrb[0].mxu0
      %v751 = vadd.f32 %v606, %v750
      %v752 = vpop.f32.mrb[0].mxu0
      %753 = vmatprep.mubr.f32.mxu0 %v299
      %754 = vmatmul.mubr.f32.gmra.mrb[0].mxu0 %v298
      %v755 = vpop.f32.mrb[0].mxu0
      %v756 = vadd.f32 %v611, %v755
      %v757 = vpop.f32.mrb[0].mxu0
      %758 = vmatprep.mubr.f32.mxu0 %v306
      %759 = vmatmul.mubr.f32.gmra.mrb[0].mxu0 %v305
      %v760 = vpop.f32.mrb[0].mxu0
      %v761 = vadd.f32 %v616, %v760
      %v762 = vpop.f32.mrb[0].mxu0
      %763 = vmatprep.mubr.f32.mxu0 %v313
      %764 = vmatmul.mubr.f32.gmra.mrb[0].mxu0 %v312
      %v765 = vpop.f32.mrb[0].mxu0
      %v766 = vadd.f32 %v621, %v765
      %v767 = vpop.f32.mrb[0].mxu0
      %768 = vmatprep.mubr.f32.mxu0 %v320
      %769 = vmatmul.mubr.f32.gmra.mrb[0].mxu0 %v319
      %v770 = vpop.f32.mrb[0].mxu0
      %v771 = vadd.f32 %v626, %v770
      %v772 = vpop.f32.mrb[0].mxu0
      %773 = vmatprep.mubr.f32.mxu0 %v327
      %774 = vmatmul.mubr.f32.gmra.mrb[0].mxu0 %v326
      %v775 = vpop.f32.mrb[0].mxu0
      %v776 = vadd.f32 %v631, %v775
      %v777 = vpop.f32.mrb[0].mxu0
      %778 = vmatprep.mubr.f32.mxu0 %v334
      %779 = vmatmul.mubr.f32.gmra.mrb[0].mxu0 %v333
      %v780 = vpop.f32.mrb[0].mxu0
      %v781 = vadd.f32 %v636, %v780
      %v782 = vpop.f32.mrb[0].mxu0
      %783 = vmatprep.mubr.f32.mxu0 %v341
      %784 = vmatmul.mubr.f32.gmra.mrb[0].mxu0 %v340
      %v785 = vpop.f32.mrb[0].mxu0
      %v786 = vadd.f32 %v641, %v785
      %v787 = vpop.f32.mrb[0].mxu0
      %788 = vdwg.mxu0
      %789 = vmatprep.subr.mxu0 0.0
      %790 = vmatpush1.msra.mxu0 %v409
      %791 = vmatprep.subr.mxu0 0.0
      %792 = vmatpush1.msra.mxu0 %v410
      %793 = vmatprep.subr.mxu0 0.0
      %794 = vmatpush1.msra.mxu0 %v411
      %795 = vmatprep.subr.mxu0 0.0
      %796 = vmatpush1.msra.mxu0 %v412
      %797 = vmatprep.subr.mxu0 0.0
      %798 = vmatpush1.msra.mxu0 %v413
      %799 = vmatprep.subr.mxu0 0.0
      %800 = vmatpush1.msra.mxu0 %v414
      %801 = vmatprep.subr.mxu0 0.0
      %802 = vmatpush1.msra.mxu0 %v415
      %803 = vmatprep.subr.mxu0 0.0
      %804 = vmatpush1.msra.mxu0 %v416
      %805 = vmatprep.subr.mxu0 0.0
      %806 = vmatpush1.msra.mxu0 %v417
      %807 = vmatprep.subr.mxu0 0.0
      %808 = vmatpush1.msra.mxu0 %v418
      %809 = vmatprep.subr.mxu0 0.0
      %810 = vmatpush1.msra.mxu0 %v419
      %811 = vmatprep.subr.mxu0 0.0
      %812 = vmatpush1.msra.mxu0 %v420
      %813 = vmatprep.subr.mxu0 0.0
      %814 = vmatpush1.msra.mxu0 %v421
      %815 = vmatprep.subr.mxu0 0.0
      %816 = vmatpush1.msra.mxu0 %v422
      %817 = vmatprep.subr.mxu0 0.0
      %818 = vmatpush1.msra.mxu0 %v423
      %819 = vmatprep.subr.mxu0 0.0
      %820 = vmatpush1.msra.mxu0 %v424
      %821 = vmatprep.subr.mxu0 0.0
      %822 = vmatpush1.msra.mxu0 %v425
      %823 = vmatprep.subr.mxu0 0.0
      %824 = vmatpush1.msra.mxu0 %v426
      %825 = vmatprep.subr.mxu0 0.0
      %826 = vmatpush1.msra.mxu0 %v427
      %827 = vmatprep.subr.mxu0 0.0
      %828 = vmatpush1.msra.mxu0 %v428
      %829 = vmatprep.subr.mxu0 0.0
      %830 = vmatpush1.msra.mxu0 %v429
      %831 = vmatprep.subr.mxu0 0.0
      %832 = vmatpush1.msra.mxu0 %v430
      %833 = vmatprep.subr.mxu0 0.0
      %834 = vmatpush1.msra.mxu0 %v431
      %835 = vmatprep.subr.mxu0 0.0
      %836 = vmatpush1.msra.mxu0 %v432
      %837 = vmatprep.subr.mxu0 0.0
      %838 = vmatpush1.msra.mxu0 %v433
      %839 = vmatprep.subr.mxu0 0.0
      %840 = vmatpush1.msra.mxu0 %v434
      %841 = vmatprep.subr.mxu0 0.0
      %842 = vmatpush1.msra.mxu0 %v435
      %843 = vmatprep.subr.mxu0 0.0
      %844 = vmatpush1.msra.mxu0 %v436
      %845 = vmatprep.subr.mxu0 0.0
      %846 = vmatpush1.msra.mxu0 %v437
      %847 = vmatprep.subr.mxu0 0.0
      %848 = vmatpush1.msra.mxu0 %v438
      %849 = vmatprep.subr.mxu0 0.0
      %850 = vmatpush1.msra.mxu0 %v439
      %851 = vmatprep.subr.mxu0 0.0
      %852 = vmatpush1.msra.mxu0 %v440
      %853 = vmatprep.mubr.f32.mxu0 %v238
      %854 = vmatmul.mubr.f32.gmra.mrb[0].mxu0 %v237
      %v855 = vpop.f32.mrb[0].mxu0
      %v856 = vadd.f32 %v711, %v855
      %v857 = vpop.f32.mrb[0].mxu0
      %858 = vmatprep.mubr.f32.mxu0 %v245
      %859 = vmatmul.mubr.f32.gmra.mrb[0].mxu0 %v244
      %v860 = vpop.f32.mrb[0].mxu0
      %v861 = vadd.f32 %v716, %v860
      %v862 = vpop.f32.mrb[0].mxu0
      %863 = vmatprep.mubr.f32.mxu0 %v252
      %864 = vmatmul.mubr.f32.gmra.mrb[0].mxu0 %v251
      %v865 = vpop.f32.mrb[0].mxu0
      %v866 = vadd.f32 %v721, %v865
      %v867 = vpop.f32.mrb[0].mxu0
      %868 = vmatprep.mubr.f32.mxu0 %v259
      %869 = vmatmul.mubr.f32.gmra.mrb[0].mxu0 %v258
      %v870 = vpop.f32.mrb[0].mxu0
      %v871 = vadd.f32 %v726, %v870
      %v872 = vpop.f32.mrb[0].mxu0
      %873 = vmatprep.mubr.f32.mxu0 %v266
      %874 = vmatmul.mubr.f32.gmra.mrb[0].mxu0 %v265
      %v875 = vpop.f32.mrb[0].mxu0
      %v876 = vadd.f32 %v731, %v875
      %v877 = vpop.f32.mrb[0].mxu0
      %878 = vmatprep.mubr.f32.mxu0 %v273
      %879 = vmatmul.mubr.f32.gmra.mrb[0].mxu0 %v272
      %v880 = vpop.f32.mrb[0].mxu0
      %v881 = vadd.f32 %v736, %v880
      %v882 = vpop.f32.mrb[0].mxu0
      %883 = vmatprep.mubr.f32.mxu0 %v280
      %884 = vmatmul.mubr.f32.gmra.mrb[0].mxu0 %v279
      %v885 = vpop.f32.mrb[0].mxu0
      %v886 = vadd.f32 %v741, %v885
      %v887 = vpop.f32.mrb[0].mxu0
      %888 = vmatprep.mubr.f32.mxu0 %v287
      %889 = vmatmul.mubr.f32.gmra.mrb[0].mxu0 %v286
      %v890 = vpop.f32.mrb[0].mxu0
      %v891 = vadd.f32 %v746, %v890
      %v892 = vpop.f32.mrb[0].mxu0
      %893 = vmatprep.mubr.f32.mxu0 %v294
      %894 = vmatmul.mubr.f32.gmra.mrb[0].mxu0 %v293
      %v895 = vpop.f32.mrb[0].mxu0
      %v896 = vadd.f32 %v751, %v895
      %v897 = vpop.f32.mrb[0].mxu0
      %898 = vmatprep.mubr.f32.mxu0 %v301
      %899 = vmatmul.mubr.f32.gmra.mrb[0].mxu0 %v300
      %v900 = vpop.f32.mrb[0].mxu0
      %v901 = vadd.f32 %v756, %v900
      %v902 = vpop.f32.mrb[0].mxu0
      %903 = vmatprep.mubr.f32.mxu0 %v308
      %904 = vmatmul.mubr.f32.gmra.mrb[0].mxu0 %v307
      %v905 = vpop.f32.mrb[0].mxu0
      %v906 = vadd.f32 %v761, %v905
      %v907 = vpop.f32.mrb[0].mxu0
      %908 = vmatprep.mubr.f32.mxu0 %v315
      %909 = vmatmul.mubr.f32.gmra.mrb[0].mxu0 %v314
      %v910 = vpop.f32.mrb[0].mxu0
      %v911 = vadd.f32 %v766, %v910
      %v912 = vpop.f32.mrb[0].mxu0
      %913 = vmatprep.mubr.f32.mxu0 %v322
      %914 = vmatmul.mubr.f32.gmra.mrb[0].mxu0 %v321
      %v915 = vpop.f32.mrb[0].mxu0
      %v916 = vadd.f32 %v771, %v915
      %v917 = vpop.f32.mrb[0].mxu0
      %918 = vmatprep.mubr.f32.mxu0 %v329
      %919 = vmatmul.mubr.f32.gmra.mrb[0].mxu0 %v328
      %v920 = vpop.f32.mrb[0].mxu0
      %v921 = vadd.f32 %v776, %v920
      %v922 = vpop.f32.mrb[0].mxu0
      %923 = vmatprep.mubr.f32.mxu0 %v336
      %924 = vmatmul.mubr.f32.gmra.mrb[0].mxu0 %v335
      %v925 = vpop.f32.mrb[0].mxu0
      %v926 = vadd.f32 %v781, %v925
      %v927 = vpop.f32.mrb[0].mxu0
      %928 = vmatprep.mubr.f32.mxu0 %v343
      %929 = vmatmul.mubr.f32.gmra.mrb[0].mxu0 %v342
      %v930 = vpop.f32.mrb[0].mxu0
      %v931 = vadd.f32 %v786, %v930
      %v932 = vpop.f32.mrb[0].mxu0
      %933 = vdwg.mxu0
      %934 = vmatprep.subr.mxu0 0.0
      %935 = vmatpush1.msra.mxu0 %v441
      %936 = vmatprep.subr.mxu0 0.0
      %937 = vmatpush1.msra.mxu0 %v442
      %938 = vmatprep.subr.mxu0 0.0
      %939 = vmatpush1.msra.mxu0 0.0
      %940 = vmatprep.subr.mxu0 0.0
      %941 = vmatpush1.msra.mxu0 0.0
      %942 = vmatprep.subr.mxu0 0.0
      %943 = vmatpush1.msra.mxu0 0.0
      %944 = vmatprep.subr.mxu0 0.0
      %945 = vmatpush1.msra.mxu0 0.0
      %946 = vmatprep.subr.mxu0 0.0
      %947 = vmatpush1.msra.mxu0 0.0
      %948 = vmatprep.subr.mxu0 0.0
      %949 = vmatpush1.msra.mxu0 0.0
      %950 = vmatprep.subr.mxu0 0.0
      %951 = vmatpush1.msra.mxu0 0.0
      %952 = vmatprep.subr.mxu0 0.0
      %953 = vmatpush1.msra.mxu0 0.0
      %954 = vmatprep.subr.mxu0 0.0
      %955 = vmatpush1.msra.mxu0 0.0
      %956 = vmatprep.subr.mxu0 0.0
      %957 = vmatpush1.msra.mxu0 0.0
      %958 = vmatprep.subr.mxu0 0.0
      %959 = vmatpush1.msra.mxu0 0.0
      %960 = vmatprep.subr.mxu0 0.0
      %961 = vmatpush1.msra.mxu0 0.0
      %962 = vmatprep.subr.mxu0 0.0
      %963 = vmatpush1.msra.mxu0 0.0
      %964 = vmatprep.subr.mxu0 0.0
      %965 = vmatpush1.msra.mxu0 0.0
      %966 = vmatprep.subr.mxu0 0.0
      %967 = vmatpush1.msra.mxu0 0.0
      %968 = vmatprep.subr.mxu0 0.0
      %969 = vmatpush1.msra.mxu0 0.0
      %970 = vmatprep.subr.mxu0 0.0
      %971 = vmatpush1.msra.mxu0 0.0
      %972 = vmatprep.subr.mxu0 0.0
      %973 = vmatpush1.msra.mxu0 0.0
      %974 = vmatprep.subr.mxu0 0.0
      %975 = vmatpush1.msra.mxu0 0.0
      %976 = vmatprep.subr.mxu0 0.0
      %977 = vmatpush1.msra.mxu0 0.0
      %978 = vmatprep.subr.mxu0 0.0
      %979 = vmatpush1.msra.mxu0 0.0
      %980 = vmatprep.subr.mxu0 0.0
      %981 = vmatpush1.msra.mxu0 0.0
      %982 = vmatprep.subr.mxu0 0.0
      %983 = vmatpush1.msra.mxu0 0.0
      %984 = vmatprep.subr.mxu0 0.0
      %985 = vmatpush1.msra.mxu0 0.0
      %986 = vmatprep.subr.mxu0 0.0
      %987 = vmatpush1.msra.mxu0 0.0
      %988 = vmatprep.subr.mxu0 0.0
      %989 = vmatpush1.msra.mxu0 0.0
      %990 = vmatprep.subr.mxu0 0.0
      %991 = vmatpush1.msra.mxu0 0.0
      %992 = vmatprep.subr.mxu0 0.0
      %993 = vmatpush1.msra.mxu0 0.0
      %994 = vmatprep.subr.mxu0 0.0
      %995 = vmatpush1.msra.mxu0 0.0
      %996 = vmatprep.subr.mxu0 0.0
      %997 = vmatpush1.msra.mxu0 0.0
      %998 = vmatprep.mubr.f32.mxu0 0.0
      %999 = vmatmul.mubr.f32.gmra.mrb[0].mxu0 %v452
      %v1000 = vpop.f32.mrb[0].mxu0
      %v1001 = vadd.f32 %v856, %v1000
      %v1002 = vpop.f32.mrb[0].mxu0
      %1003 = vmatprep.mubr.f32.mxu0 0.0
      %1004 = vmatmul.mubr.f32.gmra.mrb[0].mxu0 %v455
      %v1005 = vpop.f32.mrb[0].mxu0
      %v1006 = vadd.f32 %v861, %v1005
      %v1007 = vpop.f32.mrb[0].mxu0
      %1008 = vmatprep.mubr.f32.mxu0 0.0
      %1009 = vmatmul.mubr.f32.gmra.mrb[0].mxu0 %v458
      %v1010 = vpop.f32.mrb[0].mxu0
      %v1011 = vadd.f32 %v866, %v1010
      %v1012 = vpop.f32.mrb[0].mxu0
      %1013 = vmatprep.mubr.f32.mxu0 0.0
      %1014 = vmatmul.mubr.f32.gmra.mrb[0].mxu0 %v461
      %v1015 = vpop.f32.mrb[0].mxu0
      %v1016 = vadd.f32 %v871, %v1015
      %v1017 = vpop.f32.mrb[0].mxu0
      %1018 = vmatprep.mubr.f32.mxu0 0.0
      %1019 = vmatmul.mubr.f32.gmra.mrb[0].mxu0 %v464
      %v1020 = vpop.f32.mrb[0].mxu0
      %v1021 = vadd.f32 %v876, %v1020
      %v1022 = vpop.f32.mrb[0].mxu0
      %1023 = vmatprep.mubr.f32.mxu0 0.0
      %1024 = vmatmul.mubr.f32.gmra.mrb[0].mxu0 %v467
      %v1025 = vpop.f32.mrb[0].mxu0
      %v1026 = vadd.f32 %v881, %v1025
      %v1027 = vpop.f32.mrb[0].mxu0
      %1028 = vmatprep.mubr.f32.mxu0 0.0
      %1029 = vmatmul.mubr.f32.gmra.mrb[0].mxu0 %v470
      %v1030 = vpop.f32.mrb[0].mxu0
      %v1031 = vadd.f32 %v886, %v1030
      %v1032 = vpop.f32.mrb[0].mxu0
      %1033 = vmatprep.mubr.f32.mxu0 0.0
      %1034 = vmatmul.mubr.f32.gmra.mrb[0].mxu0 %v473
      %v1035 = vpop.f32.mrb[0].mxu0
      %v1036 = vadd.f32 %v891, %v1035
      %v1037 = vpop.f32.mrb[0].mxu0
      %1038 = vmatprep.mubr.f32.mxu0 0.0
      %1039 = vmatmul.mubr.f32.gmra.mrb[0].mxu0 %v476
      %v1040 = vpop.f32.mrb[0].mxu0
      %v1041 = vadd.f32 %v896, %v1040
      %v1042 = vpop.f32.mrb[0].mxu0
      %1043 = vmatprep.mubr.f32.mxu0 0.0
      %1044 = vmatmul.mubr.f32.gmra.mrb[0].mxu0 %v479
      %v1045 = vpop.f32.mrb[0].mxu0
      %v1046 = vadd.f32 %v901, %v1045
      %v1047 = vpop.f32.mrb[0].mxu0
      %1048 = vmatprep.mubr.f32.mxu0 0.0
      %1049 = vmatmul.mubr.f32.gmra.mrb[0].mxu0 %v482
      %v1050 = vpop.f32.mrb[0].mxu0
      %v1051 = vadd.f32 %v906, %v1050
      %v1052 = vpop.f32.mrb[0].mxu0
      %1053 = vmatprep.mubr.f32.mxu0 0.0
      %1054 = vmatmul.mubr.f32.gmra.mrb[0].mxu0 %v485
      %v1055 = vpop.f32.mrb[0].mxu0
      %v1056 = vadd.f32 %v911, %v1055
      %v1057 = vpop.f32.mrb[0].mxu0
      %1058 = vmatprep.mubr.f32.mxu0 0.0
      %1059 = vmatmul.mubr.f32.gmra.mrb[0].mxu0 %v488
      %v1060 = vpop.f32.mrb[0].mxu0
      %v1061 = vadd.f32 %v916, %v1060
      %v1062 = vpop.f32.mrb[0].mxu0
      %1063 = vmatprep.mubr.f32.mxu0 0.0
      %1064 = vmatmul.mubr.f32.gmra.mrb[0].mxu0 %v491
      %v1065 = vpop.f32.mrb[0].mxu0
      %v1066 = vadd.f32 %v921, %v1065
      %v1067 = vpop.f32.mrb[0].mxu0
      %1068 = vmatprep.mubr.f32.mxu0 0.0
      %1069 = vmatmul.mubr.f32.gmra.mrb[0].mxu0 %v494
      %v1070 = vpop.f32.mrb[0].mxu0
      %v1071 = vadd.f32 %v926, %v1070
      %v1072 = vpop.f32.mrb[0].mxu0
      %1073 = vmatprep.mubr.f32.mxu0 0.0
      %1074 = vmatmul.mubr.f32.gmra.mrb[0].mxu0 %v497
      %v1075 = vpop.f32.mrb[0].mxu0
      %v1076 = vadd.f32 %v931, %v1075
      %v1077 = vpop.f32.mrb[0].mxu0
      %1078 = vdwg.mxu0
      %v1079 = vld [vmem:[%s3] sm:$0xff]
      %v1080 = vld [vmem:[%s3 + $0x8] sm:$0xff]
      %v1081 = vld [vmem:[%s3 + $0x10] sm:$0xff]
      %v1082 = vld [vmem:[%s3 + $0x18] sm:$0xff]
      %v1083 = vld [vmem:[%s3 + $0x20] sm:$0xff]
      %v1084 = vld [vmem:[%s3 + $0x28] sm:$0xff]
      %v1085 = vld [vmem:[%s3 + $0x30] sm:$0xff]
      %v1086 = vld [vmem:[%s3 + $0x38] sm:$0xff]
      %v1087 = vld [vmem:[%s3 + $0x40] sm:$0xff]
      %v1088 = vld [vmem:[%s3 + $0x48] sm:$0xff]
      %v1089 = vld [vmem:[%s3 + $0x50] sm:$0xff]
      %v1090 = vld [vmem:[%s3 + $0x58] sm:$0xff]
      %v1091 = vld [vmem:[%s3 + $0x60] sm:$0xff]
      %v1092 = vld [vmem:[%s3 + $0x68] sm:$0xff]
      %v1093 = vld [vmem:[%s3 + $0x70] sm:$0xf]
      %v1094 = vld [vmem:[%s3 + $0x78] sm:$0xf]
      %v1095 = vld [vmem:[%s3 + $0x80] sm:$0xf]
      %v1096 = vld [vmem:[%s3 + $0x88] sm:$0xf]
      %v1097 = vld [vmem:[%s3 + $0x90] sm:$0xf]
      %v1098 = vld [vmem:[%s3 + $0x98] sm:$0xf]
      %v1099 = vld [vmem:[%s3 + $0xa0] sm:$0xf]
      %v1100 = vld [vmem:[%s4] sm:$0x7f]
      %v1102 = vlaneseq
      %v1103 = vshrl.u32 %v1102, 7
      %v1104 = vsub.s32 0, %v1103
      %v1105 = vrot.slane %v1100, %v1104
      %v1106 = vlaneseq
      %v1107 = vshrl.u32 %v1106, 7
      %v1108 = vsub.s32 1, %v1107
      %v1109 = vrot.slane %v1100, %v1108
      %v1110 = vlaneseq
      %v1111 = vshrl.u32 %v1110, 7
      %v1112 = vsub.s32 2, %v1111
      %v1113 = vrot.slane %v1100, %v1112
      %v1114 = vlaneseq
      %v1115 = vshrl.u32 %v1114, 7
      %v1116 = vsub.s32 3, %v1115
      %v1117 = vrot.slane %v1100, %v1116
      %v1118 = vlaneseq
      %v1119 = vshrl.u32 %v1118, 7
      %v1120 = vsub.s32 4, %v1119
      %v1121 = vrot.slane %v1100, %v1120
      %v1122 = vlaneseq
      %v1123 = vshrl.u32 %v1122, 7
      %v1124 = vsub.s32 5, %v1123
      %v1125 = vrot.slane %v1100, %v1124
      %v1126 = vlaneseq
      %v1127 = vshrl.u32 %v1126, 7
      %v1128 = vsub.s32 6, %v1127
      %v1129 = vrot.slane %v1100, %v1128
      %vm1137 = vcmask 162816
      %v1139 = vsel %vm1137, %v1001, 0
      %v1142 = vsel %vm1137, %v1006, 0
      %v1145 = vsel %vm1137, %v1011, 0
      %v1148 = vsel %vm1137, %v1016, 0
      %v1151 = vsel %vm1137, %v1021, 0
      %v1154 = vsel %vm1137, %v1026, 0
      %v1157 = vsel %vm1137, %v1031, 0
      %v1160 = vsel %vm1137, %v1036, 0
      %v1163 = vsel %vm1137, %v1041, 0
      %v1166 = vsel %vm1137, %v1046, 0
      %v1169 = vsel %vm1137, %v1051, 0
      %v1172 = vsel %vm1137, %v1056, 0
      %v1175 = vsel %vm1137, %v1061, 0
      %v1178 = vsel %vm1137, %v1066, 0
      %v1181 = vsel %vm1137, %v1071, 0
      %v1184 = vsel %vm1137, %v1076, 0
      %vm1186 = vcmask 1043456
      %v1188 = vsel %vm1186, %v1093, 0
      %v1191 = vsel %vm1186, %v1094, 0
      %v1194 = vsel %vm1186, %v1095, 0
      %v1197 = vsel %vm1186, %v1096, 0
      %v1200 = vsel %vm1186, %v1097, 0
      %v1203 = vsel %vm1186, %v1098, 0
      %v1206 = vsel %vm1186, %v1099, 0
      %1208 = vmatprep.subr.mxu0 %v1080
      %1209 = vmatpush1.msra.mxu0 %v1079
      %1210 = vmatprep.subr.mxu0 %v1087
      %1211 = vmatpush1.msra.mxu0 %v1086
      %1212 = vmatprep.subr.mxu0 %v1191
      %1213 = vmatpush1.msra.mxu0 %v1188
      %1214 = vmatprep.subr.mxu0 0.0
      %1215 = vmatpush1.msra.mxu0 0.0
      %1216 = vmatprep.subr.mxu0 0.0
      %1217 = vmatpush1.msra.mxu0 0.0
      %1218 = vmatprep.subr.mxu0 0.0
      %1219 = vmatpush1.msra.mxu0 0.0
      %1220 = vmatprep.subr.mxu0 0.0
      %1221 = vmatpush1.msra.mxu0 0.0
      %1222 = vmatprep.subr.mxu0 0.0
      %1223 = vmatpush1.msra.mxu0 0.0
      %1224 = vmatprep.subr.mxu0 0.0
      %1225 = vmatpush1.msra.mxu0 0.0
      %1226 = vmatprep.subr.mxu0 0.0
      %1227 = vmatpush1.msra.mxu0 0.0
      %1228 = vmatprep.subr.mxu0 0.0
      %1229 = vmatpush1.msra.mxu0 0.0
      %1230 = vmatprep.subr.mxu0 0.0
      %1231 = vmatpush1.msra.mxu0 0.0
      %1232 = vmatprep.subr.mxu0 0.0
      %1233 = vmatpush1.msra.mxu0 0.0
      %1234 = vmatprep.subr.mxu0 0.0
      %1235 = vmatpush1.msra.mxu0 0.0
      %1236 = vmatprep.subr.mxu0 0.0
      %1237 = vmatpush1.msra.mxu0 0.0
      %1238 = vmatprep.subr.mxu0 0.0
      %1239 = vmatpush1.msra.mxu0 0.0
      %1240 = vmatprep.subr.mxu0 0.0
      %1241 = vmatpush1.msra.mxu0 0.0
      %1242 = vmatprep.subr.mxu0 0.0
      %1243 = vmatpush1.msra.mxu0 0.0
      %1244 = vmatprep.subr.mxu0 0.0
      %1245 = vmatpush1.msra.mxu0 0.0
      %1246 = vmatprep.subr.mxu0 0.0
      %1247 = vmatpush1.msra.mxu0 0.0
      %1248 = vmatprep.subr.mxu0 0.0
      %1249 = vmatpush1.msra.mxu0 0.0
      %1250 = vmatprep.subr.mxu0 0.0
      %1251 = vmatpush1.msra.mxu0 0.0
      %1252 = vmatprep.subr.mxu0 0.0
      %1253 = vmatpush1.msra.mxu0 0.0
      %1254 = vmatprep.subr.mxu0 0.0
      %1255 = vmatpush1.msra.mxu0 0.0
      %1256 = vmatprep.subr.mxu0 0.0
      %1257 = vmatpush1.msra.mxu0 0.0
      %1258 = vmatprep.subr.mxu0 0.0
      %1259 = vmatpush1.msra.mxu0 0.0
      %1260 = vmatprep.subr.mxu0 0.0
      %1261 = vmatpush1.msra.mxu0 0.0
      %1262 = vmatprep.subr.mxu0 0.0
      %1263 = vmatpush1.msra.mxu0 0.0
      %1264 = vmatprep.subr.mxu0 0.0
      %1265 = vmatpush1.msra.mxu0 0.0
      %1266 = vmatprep.subr.mxu0 0.0
      %1267 = vmatpush1.msra.mxu0 0.0
      %1268 = vmatprep.subr.mxu0 0.0
      %1269 = vmatpush1.msra.mxu0 0.0
      %1270 = vmatprep.subr.mxu0 0.0
      %1271 = vmatpush1.msra.mxu0 0.0
      %1272 = vmatprep.mubr.f32.mxu0 0.0
      %1273 = vmatmul.mubr.f32.gmra.mrb[0].mxu0 %v1139
      %v1274 = vpop.f32.mrb[0].mxu0
      %v1275 = vadd.f32 %v1105, %v1274
      %v1276 = vpop.f32.mrb[0].mxu0
      %v1277 = vadd.f32 %v1109, %v1276
      %1278 = vmatprep.mubr.f32.mxu0 0.0
      %1279 = vmatmul.mubr.f32.gmra.mrb[0].mxu0 %v1142
      %v1280 = vpop.f32.mrb[0].mxu0
      %v1281 = vadd.f32 %v1105, %v1280
      %v1282 = vpop.f32.mrb[0].mxu0
      %v1283 = vadd.f32 %v1109, %v1282
      %1284 = vmatprep.mubr.f32.mxu0 0.0
      %1285 = vmatmul.mubr.f32.gmra.mrb[0].mxu0 %v1145
      %v1286 = vpop.f32.mrb[0].mxu0
      %v1287 = vadd.f32 %v1105, %v1286
      %v1288 = vpop.f32.mrb[0].mxu0
      %v1289 = vadd.f32 %v1109, %v1288
      %1290 = vmatprep.mubr.f32.mxu0 0.0
      %1291 = vmatmul.mubr.f32.gmra.mrb[0].mxu0 %v1148
      %v1292 = vpop.f32.mrb[0].mxu0
      %v1293 = vadd.f32 %v1105, %v1292
      %v1294 = vpop.f32.mrb[0].mxu0
      %v1295 = vadd.f32 %v1109, %v1294
      %1296 = vmatprep.mubr.f32.mxu0 0.0
      %1297 = vmatmul.mubr.f32.gmra.mrb[0].mxu0 %v1151
      %v1298 = vpop.f32.mrb[0].mxu0
      %v1299 = vadd.f32 %v1105, %v1298
      %v1300 = vpop.f32.mrb[0].mxu0
      %v1301 = vadd.f32 %v1109, %v1300
      %1302 = vmatprep.mubr.f32.mxu0 0.0
      %1303 = vmatmul.mubr.f32.gmra.mrb[0].mxu0 %v1154
      %v1304 = vpop.f32.mrb[0].mxu0
      %v1305 = vadd.f32 %v1105, %v1304
      %v1306 = vpop.f32.mrb[0].mxu0
      %v1307 = vadd.f32 %v1109, %v1306
      %1308 = vmatprep.mubr.f32.mxu0 0.0
      %1309 = vmatmul.mubr.f32.gmra.mrb[0].mxu0 %v1157
      %v1310 = vpop.f32.mrb[0].mxu0
      %v1311 = vadd.f32 %v1105, %v1310
      %v1312 = vpop.f32.mrb[0].mxu0
      %v1313 = vadd.f32 %v1109, %v1312
      %1314 = vmatprep.mubr.f32.mxu0 0.0
      %1315 = vmatmul.mubr.f32.gmra.mrb[0].mxu0 %v1160
      %v1316 = vpop.f32.mrb[0].mxu0
      %v1317 = vadd.f32 %v1105, %v1316
      %v1318 = vpop.f32.mrb[0].mxu0
      %v1319 = vadd.f32 %v1109, %v1318
      %1320 = vmatprep.mubr.f32.mxu0 0.0
      %1321 = vmatmul.mubr.f32.gmra.mrb[0].mxu0 %v1163
      %v1322 = vpop.f32.mrb[0].mxu0
      %v1323 = vadd.f32 %v1105, %v1322
      %v1324 = vpop.f32.mrb[0].mxu0
      %v1325 = vadd.f32 %v1109, %v1324
      %1326 = vmatprep.mubr.f32.mxu0 0.0
      %1327 = vmatmul.mubr.f32.gmra.mrb[0].mxu0 %v1166
      %v1328 = vpop.f32.mrb[0].mxu0
      %v1329 = vadd.f32 %v1105, %v1328
      %v1330 = vpop.f32.mrb[0].mxu0
      %v1331 = vadd.f32 %v1109, %v1330
      %1332 = vmatprep.mubr.f32.mxu0 0.0
      %1333 = vmatmul.mubr.f32.gmra.mrb[0].mxu0 %v1169
      %v1334 = vpop.f32.mrb[0].mxu0
      %v1335 = vadd.f32 %v1105, %v1334
      %v1336 = vpop.f32.mrb[0].mxu0
      %v1337 = vadd.f32 %v1109, %v1336
      %1338 = vmatprep.mubr.f32.mxu0 0.0
      %1339 = vmatmul.mubr.f32.gmra.mrb[0].mxu0 %v1172
      %v1340 = vpop.f32.mrb[0].mxu0
      %v1341 = vadd.f32 %v1105, %v1340
      %v1342 = vpop.f32.mrb[0].mxu0
      %v1343 = vadd.f32 %v1109, %v1342
      %1344 = vmatprep.mubr.f32.mxu0 0.0
      %1345 = vmatmul.mubr.f32.gmra.mrb[0].mxu0 %v1175
      %v1346 = vpop.f32.mrb[0].mxu0
      %v1347 = vadd.f32 %v1105, %v1346
      %v1348 = vpop.f32.mrb[0].mxu0
      %v1349 = vadd.f32 %v1109, %v1348
      %1350 = vmatprep.mubr.f32.mxu0 0.0
      %1351 = vmatmul.mubr.f32.gmra.mrb[0].mxu0 %v1178
      %v1352 = vpop.f32.mrb[0].mxu0
      %v1353 = vadd.f32 %v1105, %v1352
      %v1354 = vpop.f32.mrb[0].mxu0
      %v1355 = vadd.f32 %v1109, %v1354
      %1356 = vmatprep.mubr.f32.mxu0 0.0
      %1357 = vmatmul.mubr.f32.gmra.mrb[0].mxu0 %v1181
      %v1358 = vpop.f32.mrb[0].mxu0
      %v1359 = vadd.f32 %v1105, %v1358
      %v1360 = vpop.f32.mrb[0].mxu0
      %v1361 = vadd.f32 %v1109, %v1360
      %1362 = vmatprep.mubr.f32.mxu0 0.0
      %1363 = vmatmul.mubr.f32.gmra.mrb[0].mxu0 %v1184
      %v1364 = vpop.f32.mrb[0].mxu0
      %v1365 = vadd.f32 %v1105, %v1364
      %v1366 = vpop.f32.mrb[0].mxu0
      %v1367 = vadd.f32 %v1109, %v1366
      %1368 = vdwg.mxu0
      %1369 = vmatprep.subr.mxu0 %v1082
      %1370 = vmatpush1.msra.mxu0 %v1081
      %1371 = vmatprep.subr.mxu0 %v1089
      %1372 = vmatpush1.msra.mxu0 %v1088
      %1373 = vmatprep.subr.mxu0 %v1197
      %1374 = vmatpush1.msra.mxu0 %v1194
      %1375 = vmatprep.subr.mxu0 0.0
      %1376 = vmatpush1.msra.mxu0 0.0
      %1377 = vmatprep.subr.mxu0 0.0
      %1378 = vmatpush1.msra.mxu0 0.0
      %1379 = vmatprep.subr.mxu0 0.0
      %1380 = vmatpush1.msra.mxu0 0.0
      %1381 = vmatprep.subr.mxu0 0.0
      %1382 = vmatpush1.msra.mxu0 0.0
      %1383 = vmatprep.subr.mxu0 0.0
      %1384 = vmatpush1.msra.mxu0 0.0
      %1385 = vmatprep.subr.mxu0 0.0
      %1386 = vmatpush1.msra.mxu0 0.0
      %1387 = vmatprep.subr.mxu0 0.0
      %1388 = vmatpush1.msra.mxu0 0.0
      %1389 = vmatprep.subr.mxu0 0.0
      %1390 = vmatpush1.msra.mxu0 0.0
      %1391 = vmatprep.subr.mxu0 0.0
      %1392 = vmatpush1.msra.mxu0 0.0
      %1393 = vmatprep.subr.mxu0 0.0
      %1394 = vmatpush1.msra.mxu0 0.0
      %1395 = vmatprep.subr.mxu0 0.0
      %1396 = vmatpush1.msra.mxu0 0.0
      %1397 = vmatprep.subr.mxu0 0.0
      %1398 = vmatpush1.msra.mxu0 0.0
      %1399 = vmatprep.subr.mxu0 0.0
      %1400 = vmatpush1.msra.mxu0 0.0
      %1401 = vmatprep.subr.mxu0 0.0
      %1402 = vmatpush1.msra.mxu0 0.0
      %1403 = vmatprep.subr.mxu0 0.0
      %1404 = vmatpush1.msra.mxu0 0.0
      %1405 = vmatprep.subr.mxu0 0.0
      %1406 = vmatpush1.msra.mxu0 0.0
      %1407 = vmatprep.subr.mxu0 0.0
      %1408 = vmatpush1.msra.mxu0 0.0
      %1409 = vmatprep.subr.mxu0 0.0
      %1410 = vmatpush1.msra.mxu0 0.0
      %1411 = vmatprep.subr.mxu0 0.0
      %1412 = vmatpush1.msra.mxu0 0.0
      %1413 = vmatprep.subr.mxu0 0.0
      %1414 = vmatpush1.msra.mxu0 0.0
      %1415 = vmatprep.subr.mxu0 0.0
      %1416 = vmatpush1.msra.mxu0 0.0
      %1417 = vmatprep.subr.mxu0 0.0
      %1418 = vmatpush1.msra.mxu0 0.0
      %1419 = vmatprep.subr.mxu0 0.0
      %1420 = vmatpush1.msra.mxu0 0.0
      %1421 = vmatprep.subr.mxu0 0.0
      %1422 = vmatpush1.msra.mxu0 0.0
      %1423 = vmatprep.subr.mxu0 0.0
      %1424 = vmatpush1.msra.mxu0 0.0
      %1425 = vmatprep.subr.mxu0 0.0
      %1426 = vmatpush1.msra.mxu0 0.0
      %1427 = vmatprep.subr.mxu0 0.0
      %1428 = vmatpush1.msra.mxu0 0.0
      %1429 = vmatprep.subr.mxu0 0.0
      %1430 = vmatpush1.msra.mxu0 0.0
      %1431 = vmatprep.subr.mxu0 0.0
      %1432 = vmatpush1.msra.mxu0 0.0
      %1433 = vmatprep.mubr.f32.mxu0 0.0
      %1434 = vmatmul.mubr.f32.gmra.mrb[0].mxu0 %v1139
      %v1435 = vpop.f32.mrb[0].mxu0
      %v1436 = vadd.f32 %v1113, %v1435
      %v1437 = vpop.f32.mrb[0].mxu0
      %v1438 = vadd.f32 %v1117, %v1437
      %1439 = vmatprep.mubr.f32.mxu0 0.0
      %1440 = vmatmul.mubr.f32.gmra.mrb[0].mxu0 %v1142
      %v1441 = vpop.f32.mrb[0].mxu0
      %v1442 = vadd.f32 %v1113, %v1441
      %v1443 = vpop.f32.mrb[0].mxu0
      %v1444 = vadd.f32 %v1117, %v1443
      %1445 = vmatprep.mubr.f32.mxu0 0.0
      %1446 = vmatmul.mubr.f32.gmra.mrb[0].mxu0 %v1145
      %v1447 = vpop.f32.mrb[0].mxu0
      %v1448 = vadd.f32 %v1113, %v1447
      %v1449 = vpop.f32.mrb[0].mxu0
      %v1450 = vadd.f32 %v1117, %v1449
      %1451 = vmatprep.mubr.f32.mxu0 0.0
      %1452 = vmatmul.mubr.f32.gmra.mrb[0].mxu0 %v1148
      %v1453 = vpop.f32.mrb[0].mxu0
      %v1454 = vadd.f32 %v1113, %v1453
      %v1455 = vpop.f32.mrb[0].mxu0
      %v1456 = vadd.f32 %v1117, %v1455
      %1457 = vmatprep.mubr.f32.mxu0 0.0
      %1458 = vmatmul.mubr.f32.gmra.mrb[0].mxu0 %v1151
      %v1459 = vpop.f32.mrb[0].mxu0
      %v1460 = vadd.f32 %v1113, %v1459
      %v1461 = vpop.f32.mrb[0].mxu0
      %v1462 = vadd.f32 %v1117, %v1461
      %1463 = vmatprep.mubr.f32.mxu0 0.0
      %1464 = vmatmul.mubr.f32.gmra.mrb[0].mxu0 %v1154
      %v1465 = vpop.f32.mrb[0].mxu0
      %v1466 = vadd.f32 %v1113, %v1465
      %v1467 = vpop.f32.mrb[0].mxu0
      %v1468 = vadd.f32 %v1117, %v1467
      %1469 = vmatprep.mubr.f32.mxu0 0.0
      %1470 = vmatmul.mubr.f32.gmra.mrb[0].mxu0 %v1157
      %v1471 = vpop.f32.mrb[0].mxu0
      %v1472 = vadd.f32 %v1113, %v1471
      %v1473 = vpop.f32.mrb[0].mxu0
      %v1474 = vadd.f32 %v1117, %v1473
      %1475 = vmatprep.mubr.f32.mxu0 0.0
      %1476 = vmatmul.mubr.f32.gmra.mrb[0].mxu0 %v1160
      %v1477 = vpop.f32.mrb[0].mxu0
      %v1478 = vadd.f32 %v1113, %v1477
      %v1479 = vpop.f32.mrb[0].mxu0
      %v1480 = vadd.f32 %v1117, %v1479
      %1481 = vmatprep.mubr.f32.mxu0 0.0
      %1482 = vmatmul.mubr.f32.gmra.mrb[0].mxu0 %v1163
      %v1483 = vpop.f32.mrb[0].mxu0
      %v1484 = vadd.f32 %v1113, %v1483
      %v1485 = vpop.f32.mrb[0].mxu0
      %v1486 = vadd.f32 %v1117, %v1485
      %1487 = vmatprep.mubr.f32.mxu0 0.0
      %1488 = vmatmul.mubr.f32.gmra.mrb[0].mxu0 %v1166
      %v1489 = vpop.f32.mrb[0].mxu0
      %v1490 = vadd.f32 %v1113, %v1489
      %v1491 = vpop.f32.mrb[0].mxu0
      %v1492 = vadd.f32 %v1117, %v1491
      %1493 = vmatprep.mubr.f32.mxu0 0.0
      %1494 = vmatmul.mubr.f32.gmra.mrb[0].mxu0 %v1169
      %v1495 = vpop.f32.mrb[0].mxu0
      %v1496 = vadd.f32 %v1113, %v1495
      %v1497 = vpop.f32.mrb[0].mxu0
      %v1498 = vadd.f32 %v1117, %v1497
      %1499 = vmatprep.mubr.f32.mxu0 0.0
      %1500 = vmatmul.mubr.f32.gmra.mrb[0].mxu0 %v1172
      %v1501 = vpop.f32.mrb[0].mxu0
      %v1502 = vadd.f32 %v1113, %v1501
      %v1503 = vpop.f32.mrb[0].mxu0
      %v1504 = vadd.f32 %v1117, %v1503
      %1505 = vmatprep.mubr.f32.mxu0 0.0
      %1506 = vmatmul.mubr.f32.gmra.mrb[0].mxu0 %v1175
      %v1507 = vpop.f32.mrb[0].mxu0
      %v1508 = vadd.f32 %v1113, %v1507
      %v1509 = vpop.f32.mrb[0].mxu0
      %v1510 = vadd.f32 %v1117, %v1509
      %1511 = vmatprep.mubr.f32.mxu0 0.0
      %1512 = vmatmul.mubr.f32.gmra.mrb[0].mxu0 %v1178
      %v1513 = vpop.f32.mrb[0].mxu0
      %v1514 = vadd.f32 %v1113, %v1513
      %v1515 = vpop.f32.mrb[0].mxu0
      %v1516 = vadd.f32 %v1117, %v1515
      %1517 = vmatprep.mubr.f32.mxu0 0.0
      %1518 = vmatmul.mubr.f32.gmra.mrb[0].mxu0 %v1181
      %v1519 = vpop.f32.mrb[0].mxu0
      %v1520 = vadd.f32 %v1113, %v1519
      %v1521 = vpop.f32.mrb[0].mxu0
      %v1522 = vadd.f32 %v1117, %v1521
      %1523 = vmatprep.mubr.f32.mxu0 0.0
      %1524 = vmatmul.mubr.f32.gmra.mrb[0].mxu0 %v1184
      %v1525 = vpop.f32.mrb[0].mxu0
      %v1526 = vadd.f32 %v1113, %v1525
      %v1527 = vpop.f32.mrb[0].mxu0
      %v1528 = vadd.f32 %v1117, %v1527
      %1529 = vdwg.mxu0
      %1530 = vmatprep.subr.mxu0 %v1084
      %1531 = vmatpush1.msra.mxu0 %v1083
      %1532 = vmatprep.subr.mxu0 %v1091
      %1533 = vmatpush1.msra.mxu0 %v1090
      %1534 = vmatprep.subr.mxu0 %v1203
      %1535 = vmatpush1.msra.mxu0 %v1200
      %1536 = vmatprep.subr.mxu0 0.0
      %1537 = vmatpush1.msra.mxu0 0.0
      %1538 = vmatprep.subr.mxu0 0.0
      %1539 = vmatpush1.msra.mxu0 0.0
      %1540 = vmatprep.subr.mxu0 0.0
      %1541 = vmatpush1.msra.mxu0 0.0
      %1542 = vmatprep.subr.mxu0 0.0
      %1543 = vmatpush1.msra.mxu0 0.0
      %1544 = vmatprep.subr.mxu0 0.0
      %1545 = vmatpush1.msra.mxu0 0.0
      %1546 = vmatprep.subr.mxu0 0.0
      %1547 = vmatpush1.msra.mxu0 0.0
      %1548 = vmatprep.subr.mxu0 0.0
      %1549 = vmatpush1.msra.mxu0 0.0
      %1550 = vmatprep.subr.mxu0 0.0
      %1551 = vmatpush1.msra.mxu0 0.0
      %1552 = vmatprep.subr.mxu0 0.0
      %1553 = vmatpush1.msra.mxu0 0.0
      %1554 = vmatprep.subr.mxu0 0.0
      %1555 = vmatpush1.msra.mxu0 0.0
      %1556 = vmatprep.subr.mxu0 0.0
      %1557 = vmatpush1.msra.mxu0 0.0
      %1558 = vmatprep.subr.mxu0 0.0
      %1559 = vmatpush1.msra.mxu0 0.0
      %1560 = vmatprep.subr.mxu0 0.0
      %1561 = vmatpush1.msra.mxu0 0.0
      %1562 = vmatprep.subr.mxu0 0.0
      %1563 = vmatpush1.msra.mxu0 0.0
      %1564 = vmatprep.subr.mxu0 0.0
      %1565 = vmatpush1.msra.mxu0 0.0
      %1566 = vmatprep.subr.mxu0 0.0
      %1567 = vmatpush1.msra.mxu0 0.0
      %1568 = vmatprep.subr.mxu0 0.0
      %1569 = vmatpush1.msra.mxu0 0.0
      %1570 = vmatprep.subr.mxu0 0.0
      %1571 = vmatpush1.msra.mxu0 0.0
      %1572 = vmatprep.subr.mxu0 0.0
      %1573 = vmatpush1.msra.mxu0 0.0
      %1574 = vmatprep.subr.mxu0 0.0
      %1575 = vmatpush1.msra.mxu0 0.0
      %1576 = vmatprep.subr.mxu0 0.0
      %1577 = vmatpush1.msra.mxu0 0.0
      %1578 = vmatprep.subr.mxu0 0.0
      %1579 = vmatpush1.msra.mxu0 0.0
      %1580 = vmatprep.subr.mxu0 0.0
      %1581 = vmatpush1.msra.mxu0 0.0
      %1582 = vmatprep.subr.mxu0 0.0
      %1583 = vmatpush1.msra.mxu0 0.0
      %1584 = vmatprep.subr.mxu0 0.0
      %1585 = vmatpush1.msra.mxu0 0.0
      %1586 = vmatprep.subr.mxu0 0.0
      %1587 = vmatpush1.msra.mxu0 0.0
      %1588 = vmatprep.subr.mxu0 0.0
      %1589 = vmatpush1.msra.mxu0 0.0
      %1590 = vmatprep.subr.mxu0 0.0
      %1591 = vmatpush1.msra.mxu0 0.0
      %1592 = vmatprep.subr.mxu0 0.0
      %1593 = vmatpush1.msra.mxu0 0.0
      %1594 = vmatprep.mubr.f32.mxu0 0.0
      %1595 = vmatmul.mubr.f32.gmra.mrb[0].mxu0 %v1139
      %v1596 = vpop.f32.mrb[0].mxu0
      %v1597 = vadd.f32 %v1121, %v1596
      %v1598 = vpop.f32.mrb[0].mxu0
      %v1599 = vadd.f32 %v1125, %v1598
      %1600 = vmatprep.mubr.f32.mxu0 0.0
      %1601 = vmatmul.mubr.f32.gmra.mrb[0].mxu0 %v1142
      %v1602 = vpop.f32.mrb[0].mxu0
      %v1603 = vadd.f32 %v1121, %v1602
      %v1604 = vpop.f32.mrb[0].mxu0
      %v1605 = vadd.f32 %v1125, %v1604
      %1606 = vmatprep.mubr.f32.mxu0 0.0
      %1607 = vmatmul.mubr.f32.gmra.mrb[0].mxu0 %v1145
      %v1608 = vpop.f32.mrb[0].mxu0
      %v1609 = vadd.f32 %v1121, %v1608
      %v1610 = vpop.f32.mrb[0].mxu0
      %v1611 = vadd.f32 %v1125, %v1610
      %1612 = vmatprep.mubr.f32.mxu0 0.0
      %1613 = vmatmul.mubr.f32.gmra.mrb[0].mxu0 %v1148
      %v1614 = vpop.f32.mrb[0].mxu0
      %v1615 = vadd.f32 %v1121, %v1614
      %v1616 = vpop.f32.mrb[0].mxu0
      %v1617 = vadd.f32 %v1125, %v1616
      %1618 = vmatprep.mubr.f32.mxu0 0.0
      %1619 = vmatmul.mubr.f32.gmra.mrb[0].mxu0 %v1151
      %v1620 = vpop.f32.mrb[0].mxu0
      %v1621 = vadd.f32 %v1121, %v1620
      %v1622 = vpop.f32.mrb[0].mxu0
      %v1623 = vadd.f32 %v1125, %v1622
      %1624 = vmatprep.mubr.f32.mxu0 0.0
      %1625 = vmatmul.mubr.f32.gmra.mrb[0].mxu0 %v1154
      %v1626 = vpop.f32.mrb[0].mxu0
      %v1627 = vadd.f32 %v1121, %v1626
      %v1628 = vpop.f32.mrb[0].mxu0
      %v1629 = vadd.f32 %v1125, %v1628
      %1630 = vmatprep.mubr.f32.mxu0 0.0
      %1631 = vmatmul.mubr.f32.gmra.mrb[0].mxu0 %v1157
      %v1632 = vpop.f32.mrb[0].mxu0
      %v1633 = vadd.f32 %v1121, %v1632
      %v1634 = vpop.f32.mrb[0].mxu0
      %v1635 = vadd.f32 %v1125, %v1634
      %1636 = vmatprep.mubr.f32.mxu0 0.0
      %1637 = vmatmul.mubr.f32.gmra.mrb[0].mxu0 %v1160
      %v1638 = vpop.f32.mrb[0].mxu0
      %v1639 = vadd.f32 %v1121, %v1638
      %v1640 = vpop.f32.mrb[0].mxu0
      %v1641 = vadd.f32 %v1125, %v1640
      %1642 = vmatprep.mubr.f32.mxu0 0.0
      %1643 = vmatmul.mubr.f32.gmra.mrb[0].mxu0 %v1163
      %v1644 = vpop.f32.mrb[0].mxu0
      %v1645 = vadd.f32 %v1121, %v1644
      %v1646 = vpop.f32.mrb[0].mxu0
      %v1647 = vadd.f32 %v1125, %v1646
      %1648 = vmatprep.mubr.f32.mxu0 0.0
      %1649 = vmatmul.mubr.f32.gmra.mrb[0].mxu0 %v1166
      %v1650 = vpop.f32.mrb[0].mxu0
      %v1651 = vadd.f32 %v1121, %v1650
      %v1652 = vpop.f32.mrb[0].mxu0
      %v1653 = vadd.f32 %v1125, %v1652
      %1654 = vmatprep.mubr.f32.mxu0 0.0
      %1655 = vmatmul.mubr.f32.gmra.mrb[0].mxu0 %v1169
      %v1656 = vpop.f32.mrb[0].mxu0
      %v1657 = vadd.f32 %v1121, %v1656
      %v1658 = vpop.f32.mrb[0].mxu0
      %v1659 = vadd.f32 %v1125, %v1658
      %1660 = vmatprep.mubr.f32.mxu0 0.0
      %1661 = vmatmul.mubr.f32.gmra.mrb[0].mxu0 %v1172
      %v1662 = vpop.f32.mrb[0].mxu0
      %v1663 = vadd.f32 %v1121, %v1662
      %v1664 = vpop.f32.mrb[0].mxu0
      %v1665 = vadd.f32 %v1125, %v1664
      %1666 = vmatprep.mubr.f32.mxu0 0.0
      %1667 = vmatmul.mubr.f32.gmra.mrb[0].mxu0 %v1175
      %v1668 = vpop.f32.mrb[0].mxu0
      %v1669 = vadd.f32 %v1121, %v1668
      %v1670 = vpop.f32.mrb[0].mxu0
      %v1671 = vadd.f32 %v1125, %v1670
      %1672 = vmatprep.mubr.f32.mxu0 0.0
      %1673 = vmatmul.mubr.f32.gmra.mrb[0].mxu0 %v1178
      %v1674 = vpop.f32.mrb[0].mxu0
      %v1675 = vadd.f32 %v1121, %v1674
      %v1676 = vpop.f32.mrb[0].mxu0
      %v1677 = vadd.f32 %v1125, %v1676
      %1678 = vmatprep.mubr.f32.mxu0 0.0
      %1679 = vmatmul.mubr.f32.gmra.mrb[0].mxu0 %v1181
      %v1680 = vpop.f32.mrb[0].mxu0
      %v1681 = vadd.f32 %v1121, %v1680
      %v1682 = vpop.f32.mrb[0].mxu0
      %v1683 = vadd.f32 %v1125, %v1682
      %1684 = vmatprep.mubr.f32.mxu0 0.0
      %1685 = vmatmul.mubr.f32.gmra.mrb[0].mxu0 %v1184
      %v1686 = vpop.f32.mrb[0].mxu0
      %v1687 = vadd.f32 %v1121, %v1686
      %v1688 = vpop.f32.mrb[0].mxu0
      %v1689 = vadd.f32 %v1125, %v1688
      %1690 = vdwg.mxu0
      %1691 = vmatprep.subr.mxu0 0.0
      %1692 = vmatpush1.msra.mxu0 %v1085
      %1693 = vmatprep.subr.mxu0 0.0
      %1694 = vmatpush1.msra.mxu0 %v1092
      %1695 = vmatprep.subr.mxu0 0.0
      %1696 = vmatpush1.msra.mxu0 %v1206
      %1697 = vmatprep.subr.mxu0 0.0
      %1698 = vmatpush1.msra.mxu0 0.0
      %1699 = vmatprep.subr.mxu0 0.0
      %1700 = vmatpush1.msra.mxu0 0.0
      %1701 = vmatprep.subr.mxu0 0.0
      %1702 = vmatpush1.msra.mxu0 0.0
      %1703 = vmatprep.subr.mxu0 0.0
      %1704 = vmatpush1.msra.mxu0 0.0
      %1705 = vmatprep.subr.mxu0 0.0
      %1706 = vmatpush1.msra.mxu0 0.0
      %1707 = vmatprep.subr.mxu0 0.0
      %1708 = vmatpush1.msra.mxu0 0.0
      %1709 = vmatprep.subr.mxu0 0.0
      %1710 = vmatpush1.msra.mxu0 0.0
      %1711 = vmatprep.subr.mxu0 0.0
      %1712 = vmatpush1.msra.mxu0 0.0
      %1713 = vmatprep.subr.mxu0 0.0
      %1714 = vmatpush1.msra.mxu0 0.0
      %1715 = vmatprep.subr.mxu0 0.0
      %1716 = vmatpush1.msra.mxu0 0.0
      %1717 = vmatprep.subr.mxu0 0.0
      %1718 = vmatpush1.msra.mxu0 0.0
      %1719 = vmatprep.subr.mxu0 0.0
      %1720 = vmatpush1.msra.mxu0 0.0
      %1721 = vmatprep.subr.mxu0 0.0
      %1722 = vmatpush1.msra.mxu0 0.0
      %1723 = vmatprep.subr.mxu0 0.0
      %1724 = vmatpush1.msra.mxu0 0.0
      %1725 = vmatprep.subr.mxu0 0.0
      %1726 = vmatpush1.msra.mxu0 0.0
      %1727 = vmatprep.subr.mxu0 0.0
      %1728 = vmatpush1.msra.mxu0 0.0
      %1729 = vmatprep.subr.mxu0 0.0
      %1730 = vmatpush1.msra.mxu0 0.0
      %1731 = vmatprep.subr.mxu0 0.0
      %1732 = vmatpush1.msra.mxu0 0.0
      %1733 = vmatprep.subr.mxu0 0.0
      %1734 = vmatpush1.msra.mxu0 0.0
      %1735 = vmatprep.subr.mxu0 0.0
      %1736 = vmatpush1.msra.mxu0 0.0
      %1737 = vmatprep.subr.mxu0 0.0
      %1738 = vmatpush1.msra.mxu0 0.0
      %1739 = vmatprep.subr.mxu0 0.0
      %1740 = vmatpush1.msra.mxu0 0.0
      %1741 = vmatprep.subr.mxu0 0.0
      %1742 = vmatpush1.msra.mxu0 0.0
      %1743 = vmatprep.subr.mxu0 0.0
      %1744 = vmatpush1.msra.mxu0 0.0
      %1745 = vmatprep.subr.mxu0 0.0
      %1746 = vmatpush1.msra.mxu0 0.0
      %1747 = vmatprep.subr.mxu0 0.0
      %1748 = vmatpush1.msra.mxu0 0.0
      %1749 = vmatprep.subr.mxu0 0.0
      %1750 = vmatpush1.msra.mxu0 0.0
      %1751 = vmatprep.subr.mxu0 0.0
      %1752 = vmatpush1.msra.mxu0 0.0
      %1753 = vmatprep.subr.mxu0 0.0
      %1754 = vmatpush1.msra.mxu0 0.0
      %1755 = vmatprep.mubr.f32.mxu0 0.0
      %1756 = vmatmul.mubr.f32.gmra.mrb[0].mxu0 %v1139
      %v1757 = vpop.f32.mrb[0].mxu0
      %v1758 = vadd.f32 %v1129, %v1757
      %v1759 = vpop.f32.mrb[0].mxu0
      %1760 = vmatprep.mubr.f32.mxu0 0.0
      %1761 = vmatmul.mubr.f32.gmra.mrb[0].mxu0 %v1142
      %v1762 = vpop.f32.mrb[0].mxu0
      %v1763 = vadd.f32 %v1129, %v1762
      %v1764 = vpop.f32.mrb[0].mxu0
      %1765 = vmatprep.mubr.f32.mxu0 0.0
      %1766 = vmatmul.mubr.f32.gmra.mrb[0].mxu0 %v1145
      %v1767 = vpop.f32.mrb[0].mxu0
      %v1768 = vadd.f32 %v1129, %v1767
      %v1769 = vpop.f32.mrb[0].mxu0
      %1770 = vmatprep.mubr.f32.mxu0 0.0
      %1771 = vmatmul.mubr.f32.gmra.mrb[0].mxu0 %v1148
      %v1772 = vpop.f32.mrb[0].mxu0
      %v1773 = vadd.f32 %v1129, %v1772
      %v1774 = vpop.f32.mrb[0].mxu0
      %1775 = vmatprep.mubr.f32.mxu0 0.0
      %1776 = vmatmul.mubr.f32.gmra.mrb[0].mxu0 %v1151
      %v1777 = vpop.f32.mrb[0].mxu0
      %v1778 = vadd.f32 %v1129, %v1777
      %v1779 = vpop.f32.mrb[0].mxu0
      %1780 = vmatprep.mubr.f32.mxu0 0.0
      %1781 = vmatmul.mubr.f32.gmra.mrb[0].mxu0 %v1154
      %v1782 = vpop.f32.mrb[0].mxu0
      %v1783 = vadd.f32 %v1129, %v1782
      %v1784 = vpop.f32.mrb[0].mxu0
      %1785 = vmatprep.mubr.f32.mxu0 0.0
      %1786 = vmatmul.mubr.f32.gmra.mrb[0].mxu0 %v1157
      %v1787 = vpop.f32.mrb[0].mxu0
      %v1788 = vadd.f32 %v1129, %v1787
      %v1789 = vpop.f32.mrb[0].mxu0
      %1790 = vmatprep.mubr.f32.mxu0 0.0
      %1791 = vmatmul.mubr.f32.gmra.mrb[0].mxu0 %v1160
      %v1792 = vpop.f32.mrb[0].mxu0
      %v1793 = vadd.f32 %v1129, %v1792
      %v1794 = vpop.f32.mrb[0].mxu0
      %1795 = vmatprep.mubr.f32.mxu0 0.0
      %1796 = vmatmul.mubr.f32.gmra.mrb[0].mxu0 %v1163
      %v1797 = vpop.f32.mrb[0].mxu0
      %v1798 = vadd.f32 %v1129, %v1797
      %v1799 = vpop.f32.mrb[0].mxu0
      %1800 = vmatprep.mubr.f32.mxu0 0.0
      %1801 = vmatmul.mubr.f32.gmra.mrb[0].mxu0 %v1166
      %v1802 = vpop.f32.mrb[0].mxu0
      %v1803 = vadd.f32 %v1129, %v1802
      %v1804 = vpop.f32.mrb[0].mxu0
      %1805 = vmatprep.mubr.f32.mxu0 0.0
      %1806 = vmatmul.mubr.f32.gmra.mrb[0].mxu0 %v1169
      %v1807 = vpop.f32.mrb[0].mxu0
      %v1808 = vadd.f32 %v1129, %v1807
      %v1809 = vpop.f32.mrb[0].mxu0
      %1810 = vmatprep.mubr.f32.mxu0 0.0
      %1811 = vmatmul.mubr.f32.gmra.mrb[0].mxu0 %v1172
      %v1812 = vpop.f32.mrb[0].mxu0
      %v1813 = vadd.f32 %v1129, %v1812
      %v1814 = vpop.f32.mrb[0].mxu0
      %1815 = vmatprep.mubr.f32.mxu0 0.0
      %1816 = vmatmul.mubr.f32.gmra.mrb[0].mxu0 %v1175
      %v1817 = vpop.f32.mrb[0].mxu0
      %v1818 = vadd.f32 %v1129, %v1817
      %v1819 = vpop.f32.mrb[0].mxu0
      %1820 = vmatprep.mubr.f32.mxu0 0.0
      %1821 = vmatmul.mubr.f32.gmra.mrb[0].mxu0 %v1178
      %v1822 = vpop.f32.mrb[0].mxu0
      %v1823 = vadd.f32 %v1129, %v1822
      %v1824 = vpop.f32.mrb[0].mxu0
      %1825 = vmatprep.mubr.f32.mxu0 0.0
      %1826 = vmatmul.mubr.f32.gmra.mrb[0].mxu0 %v1181
      %v1827 = vpop.f32.mrb[0].mxu0
      %v1828 = vadd.f32 %v1129, %v1827
      %v1829 = vpop.f32.mrb[0].mxu0
      %1830 = vmatprep.mubr.f32.mxu0 0.0
      %1831 = vmatmul.mubr.f32.gmra.mrb[0].mxu0 %v1184
      %v1832 = vpop.f32.mrb[0].mxu0
      %v1833 = vadd.f32 %v1129, %v1832
      %v1834 = vpop.f32.mrb[0].mxu0
      %1835 = vdwg.mxu0
      %1836 = vst [vmem:[%s231] sm:$0xff] %v1275
      %1837 = vst [vmem:[%s231 + $0x8] sm:$0xff] %v1277
      %1838 = vst [vmem:[%s231 + $0x10] sm:$0xff] %v1436
      %1839 = vst [vmem:[%s231 + $0x18] sm:$0xff] %v1438
      %1840 = vst [vmem:[%s231 + $0x20] sm:$0xff] %v1597
      %1841 = vst [vmem:[%s231 + $0x28] sm:$0xff] %v1599
      %1842 = vst.msk [vmem:[%s231 + $0x30] sm:$0xff] %vm450, %v1758
      %1843 = vst [vmem:[%s231 + $0x38] sm:$0xff] %v1281
      %1844 = vst [vmem:[%s231 + $0x40] sm:$0xff] %v1283
      %1845 = vst [vmem:[%s231 + $0x48] sm:$0xff] %v1442
      %1846 = vst [vmem:[%s231 + $0x50] sm:$0xff] %v1444
      %1847 = vst [vmem:[%s231 + $0x58] sm:$0xff] %v1603
      %1848 = vst [vmem:[%s231 + $0x60] sm:$0xff] %v1605
      %1849 = vst.msk [vmem:[%s231 + $0x68] sm:$0xff] %vm450, %v1763
      %1850 = vst [vmem:[%s231 + $0x70] sm:$0xff] %v1287
      %1851 = vst [vmem:[%s231 + $0x78] sm:$0xff] %v1289
      %1852 = vst [vmem:[%s231 + $0x80] sm:$0xff] %v1448
      %1853 = vst [vmem:[%s231 + $0x88] sm:$0xff] %v1450
      %1854 = vst [vmem:[%s231 + $0x90] sm:$0xff] %v1609
      %1855 = vst [vmem:[%s231 + $0x98] sm:$0xff] %v1611
      %1856 = vst.msk [vmem:[%s231 + $0xa0] sm:$0xff] %vm450, %v1768
      %1857 = vst [vmem:[%s231 + $0xa8] sm:$0xff] %v1293
      %1858 = vst [vmem:[%s231 + $0xb0] sm:$0xff] %v1295
      %1859 = vst [vmem:[%s231 + $0xb8] sm:$0xff] %v1454
      %1860 = vst [vmem:[%s231 + $0xc0] sm:$0xff] %v1456
      %1861 = vst [vmem:[%s231 + $0xc8] sm:$0xff] %v1615
      %1862 = vst [vmem:[%s231 + $0xd0] sm:$0xff] %v1617
      %1863 = vst.msk [vmem:[%s231 + $0xd8] sm:$0xff] %vm450, %v1773
      %1864 = vst [vmem:[%s231 + $0xe0] sm:$0xff] %v1299
      %1865 = vst [vmem:[%s231 + $0xe8] sm:$0xff] %v1301
      %1866 = vst [vmem:[%s231 + $0xf0] sm:$0xff] %v1460
      %1867 = vst [vmem:[%s231 + $0xf8] sm:$0xff] %v1462
      %1868 = vst [vmem:[%s231 + $0x100] sm:$0xff] %v1621
      %1869 = vst [vmem:[%s231 + $0x108] sm:$0xff] %v1623
      %1870 = vst.msk [vmem:[%s231 + $0x110] sm:$0xff] %vm450, %v1778
      %1871 = vst [vmem:[%s231 + $0x118] sm:$0xff] %v1305
      %1872 = vst [vmem:[%s231 + $0x120] sm:$0xff] %v1307
      %1873 = vst [vmem:[%s231 + $0x128] sm:$0xff] %v1466
      %1874 = vst [vmem:[%s231 + $0x130] sm:$0xff] %v1468
      %1875 = vst [vmem:[%s231 + $0x138] sm:$0xff] %v1627
      %1876 = vst [vmem:[%s231 + $0x140] sm:$0xff] %v1629
      %1877 = vst.msk [vmem:[%s231 + $0x148] sm:$0xff] %vm450, %v1783
      %1878 = vst [vmem:[%s231 + $0x150] sm:$0xff] %v1311
      %1879 = vst [vmem:[%s231 + $0x158] sm:$0xff] %v1313
      %1880 = vst [vmem:[%s231 + $0x160] sm:$0xff] %v1472
      %1881 = vst [vmem:[%s231 + $0x168] sm:$0xff] %v1474
      %1882 = vst [vmem:[%s231 + $0x170] sm:$0xff] %v1633
      %1883 = vst [vmem:[%s231 + $0x178] sm:$0xff] %v1635
      %1884 = vst.msk [vmem:[%s231 + $0x180] sm:$0xff] %vm450, %v1788
      %1885 = vst [vmem:[%s231 + $0x188] sm:$0xff] %v1317
      %1886 = vst [vmem:[%s231 + $0x190] sm:$0xff] %v1319
      %1887 = vst [vmem:[%s231 + $0x198] sm:$0xff] %v1478
      %1888 = vst [vmem:[%s231 + $0x1a0] sm:$0xff] %v1480
      %1889 = vst [vmem:[%s231 + $0x1a8] sm:$0xff] %v1639
      %1890 = vst [vmem:[%s231 + $0x1b0] sm:$0xff] %v1641
      %1891 = vst.msk [vmem:[%s231 + $0x1b8] sm:$0xff] %vm450, %v1793
      %1892 = vst [vmem:[%s231 + $0x1c0] sm:$0xff] %v1323
      %1893 = vst [vmem:[%s231 + $0x1c8] sm:$0xff] %v1325
      %1894 = vst [vmem:[%s231 + $0x1d0] sm:$0xff] %v1484
      %1895 = vst [vmem:[%s231 + $0x1d8] sm:$0xff] %v1486
      %1896 = vst [vmem:[%s231 + $0x1e0] sm:$0xff] %v1645
      %1897 = vst [vmem:[%s231 + $0x1e8] sm:$0xff] %v1647
      %1898 = vst.msk [vmem:[%s231 + $0x1f0] sm:$0xff] %vm450, %v1798
      %1899 = vst [vmem:[%s231 + $0x1f8] sm:$0xff] %v1329
      %1900 = vst [vmem:[%s231 + $0x200] sm:$0xff] %v1331
      %1901 = vst [vmem:[%s231 + $0x208] sm:$0xff] %v1490
      %1902 = vst [vmem:[%s231 + $0x210] sm:$0xff] %v1492
      %1903 = vst [vmem:[%s231 + $0x218] sm:$0xff] %v1651
      %1904 = vst [vmem:[%s231 + $0x220] sm:$0xff] %v1653
      %1905 = vst.msk [vmem:[%s231 + $0x228] sm:$0xff] %vm450, %v1803
      %1906 = vst [vmem:[%s231 + $0x230] sm:$0xff] %v1335
      %1907 = vst [vmem:[%s231 + $0x238] sm:$0xff] %v1337
      %1908 = vst [vmem:[%s231 + $0x240] sm:$0xff] %v1496
      %1909 = vst [vmem:[%s231 + $0x248] sm:$0xff] %v1498
      %1910 = vst [vmem:[%s231 + $0x250] sm:$0xff] %v1657
      %1911 = vst [vmem:[%s231 + $0x258] sm:$0xff] %v1659
      %1912 = vst.msk [vmem:[%s231 + $0x260] sm:$0xff] %vm450, %v1808
      %1913 = vst [vmem:[%s231 + $0x268] sm:$0xff] %v1341
      %1914 = vst [vmem:[%s231 + $0x270] sm:$0xff] %v1343
      %1915 = vst [vmem:[%s231 + $0x278] sm:$0xff] %v1502
      %1916 = vst [vmem:[%s231 + $0x280] sm:$0xff] %v1504
      %1917 = vst [vmem:[%s231 + $0x288] sm:$0xff] %v1663
      %1918 = vst [vmem:[%s231 + $0x290] sm:$0xff] %v1665
      %1919 = vst.msk [vmem:[%s231 + $0x298] sm:$0xff] %vm450, %v1813
      %1920 = vst [vmem:[%s231 + $0x2a0] sm:$0xff] %v1347
      %1921 = vst [vmem:[%s231 + $0x2a8] sm:$0xff] %v1349
      %1922 = vst [vmem:[%s231 + $0x2b0] sm:$0xff] %v1508
      %1923 = vst [vmem:[%s231 + $0x2b8] sm:$0xff] %v1510
      %1924 = vst [vmem:[%s231 + $0x2c0] sm:$0xff] %v1669
      %1925 = vst [vmem:[%s231 + $0x2c8] sm:$0xff] %v1671
      %1926 = vst.msk [vmem:[%s231 + $0x2d0] sm:$0xff] %vm450, %v1818
      %1927 = vst [vmem:[%s231 + $0x2d8] sm:$0xff] %v1353
      %1928 = vst [vmem:[%s231 + $0x2e0] sm:$0xff] %v1355
      %1929 = vst [vmem:[%s231 + $0x2e8] sm:$0xff] %v1514
      %1930 = vst [vmem:[%s231 + $0x2f0] sm:$0xff] %v1516
      %1931 = vst [vmem:[%s231 + $0x2f8] sm:$0xff] %v1675
      %1932 = vst [vmem:[%s231 + $0x300] sm:$0xff] %v1677
      %1933 = vst.msk [vmem:[%s231 + $0x308] sm:$0xff] %vm450, %v1823
      %1934 = vst [vmem:[%s231 + $0x310] sm:$0xff] %v1359
      %1935 = vst [vmem:[%s231 + $0x318] sm:$0xff] %v1361
      %1936 = vst [vmem:[%s231 + $0x320] sm:$0xff] %v1520
      %1937 = vst [vmem:[%s231 + $0x328] sm:$0xff] %v1522
      %1938 = vst [vmem:[%s231 + $0x330] sm:$0xff] %v1681
      %1939 = vst [vmem:[%s231 + $0x338] sm:$0xff] %v1683
      %1940 = vst.msk [vmem:[%s231 + $0x340] sm:$0xff] %vm450, %v1828
      %1941 = vst [vmem:[%s231 + $0x348] sm:$0xff] %v1365
      %1942 = vst [vmem:[%s231 + $0x350] sm:$0xff] %v1367
      %1943 = vst [vmem:[%s231 + $0x358] sm:$0xff] %v1526
      %1944 = vst [vmem:[%s231 + $0x360] sm:$0xff] %v1528
      %1945 = vst [vmem:[%s231 + $0x368] sm:$0xff] %v1687
      %1946 = vst [vmem:[%s231 + $0x370] sm:$0xff] %v1689
      %1947 = vst.msk [vmem:[%s231 + $0x378] sm:$0xff] %vm450, %v1833
      %s1948 = smul.u32 16, %s16
      %p1949 = scmp.lt.s32.totalorder %s1948, 31
      %s1950 = scalar_select %p1949, %s1948, 31
      %s1951 = smul.addr %s1950, 7
      %s1952 = smul.addr %s1951, 8
      %s1953 = scalar_lea.vmem %s5, %s1952
      // Predicated region
      $region41: #{tpu_custom_call.1} parent=39 // pred_check
        %p1954 = pneg %p144
      $region42: #{tpu_custom_call.1} parent=39 // pred_check_branch
        %1956 = sbr.rel (%p1954) target = $region44
      $region43: #{tpu_custom_call.1} parent=39 // pred_region
        %s1957 = smul.u32 16, %s16
      $region44: #{tpu_custom_call.1} parent=39 // pred_fallthru
        _
    $region40: #{tpu_custom_call.1} parent=5 // pred_fallthru
      _
    %p1958 = scmp.le.s32.totalorder 2, %s11
    // Predicated region
    $region45: #{tpu_custom_call.1} parent=5 // pred_check
      %p1959 = pneg %p1958
    $region46: #{tpu_custom_call.1} parent=5 // pred_check_branch
      %1961 = sbr.rel (%p1959) target = $region48
    $region47: #{tpu_custom_call.1} parent=5 // pred_region
      %s1962 = ssub.s32 %s11, 2
      // Predicated region
      $region49: #{tpu_custom_call.1} parent=47 // pred_check
        %p1963 = pneg %p150
      $region50: #{tpu_custom_call.1} parent=47 // pred_check_branch
        %1965 = sbr.rel (%p1963) target = $region52
      $region51: #{tpu_custom_call.1} parent=47 // pred_region
        %s1966 = smul.u32 16, %s17
        %p1967 = scmp.lt.s32.totalorder %s1966, 31
        %s1968 = scalar_select %p1967, %s1966, 31
        %s1969 = smul.addr %s1968, 7
        %s1970 = smul.addr %s1969, 8
        %s1971 = scalar_lea.vmem %s5, %s1970
      $region52: #{tpu_custom_call.1} parent=47 // pred_fallthru
        _
    $region48: #{tpu_custom_call.1} parent=5 // pred_fallthru
      _
  $region6: #{tpu_custom_call.1} parent=0 // loop_footer
    %s15 = sadd.s32 1, %s11
  $region7: #{tpu_custom_call.1} parent=0 // loop_footer_branch
    %10 = sbr.rel target = $region3
  $region8: #{tpu_custom_call.1} parent=0 // loop_exit
    _

</llo_original>
